<compile_context>
chip_gen: v7x
topology: tpu7x:2x2x1
jax: 0.10.0
libtpu: 0.0.40
codegen_flags: <defaults>
</compile_context>

<pallas_src>
import jax
import jax.numpy as jnp
from jax import lax
from jax.experimental import pallas as pl
from jax.experimental.pallas import tpu as pltpu

EPS = 1e-5  # nn.InstanceNorm2d default eps


def _round_up(v, m):
    return (v + m - 1) // m * m


def _pick_row_tile(H, W, target_rows=1024):
    """Largest divisor TH of H with TH*W <= ~target_rows, preferring TH*W % 8 == 0."""
    target = max(1, target_rows // max(W, 1))
    divs = [d for d in range(1, H + 1) if H % d == 0 and d <= target]
    if not divs:
        return 1
    pref = [d for d in divs if (d * W) % 8 == 0]
    return max(pref) if pref else max(divs)


def _hint(v, m):
    # pl.multiple_of only for traced values; static python ints pass through.
    return v if isinstance(v, int) else pl.multiple_of(v, m)


def _make_kernel(H, W, Cp, TH, compute_dtype):
    Wp = W + 2
    nh = H // TH
    inv_hw = 1.0 / float(H * W)

    def loop(body, init):
        if nh == 1:
            return body(0, init)
        if nh <= 8:
            return lax.fori_loop(0, nh, body, init, unroll=True)
        return lax.fori_loop(0, nh, body, init)

    def reflect_borders(pad_ref):
        # left / right columns of the interior rows (reflect, pad = 1)
        pad_ref[pl.ds(1, H), pl.ds(0, 1), :] = pad_ref[pl.ds(1, H), pl.ds(2, 1), :]
        pad_ref[pl.ds(1, H), pl.ds(W + 1, 1), :] = pad_ref[pl.ds(1, H), pl.ds(W - 1, 1), :]
        # top / bottom rows over the full padded width (corners included)
        pad_ref[pl.ds(0, 1), :, :] = pad_ref[pl.ds(2, 1), :, :]
        pad_ref[pl.ds(H + 1, 1), :, :] = pad_ref[pl.ds(H - 1, 1), :, :]

    def conv_pass(pad_ref, w_ref, y_ref):
        """3x3 conv of the padded scratch via one im2col MXU matmul per row
        tile (K = 9*Cp).  Writes the un-normalized conv output (compute dtype)
        to y_ref; per-channel (mean, rsqrt(var+eps)) come from the f32 MXU
        accumulator so the InstanceNorm statistics stay in f32."""

        def body(i, carry):
            s, ss = carry
            r0 = _hint(i * TH, TH)
            xp = pad_ref[pl.ds(r0, TH + 2), :, :]                 # (TH+2, Wp, Cp)
            # kw-shifted slices concatenated on channels -> (TH+2, W, 3*Cp)
            xw = jnp.concatenate(
                [xp[:, 0:W, :], xp[:, 1:W + 1, :], xp[:, 2:W + 2, :]], axis=-1)
            # kh-shifted slices concatenated on channels -> full im2col patch
            patch = jnp.concatenate(
                [xw[0:TH], xw[1:TH + 1], xw[2:TH + 2]], axis=-1)  # (TH, W, 9*Cp)
            acc = jnp.dot(patch.reshape(TH * W, 9 * Cp), w_ref[...],
                          preferred_element_type=jnp.float32)     # (TH*W, Cp) f32
            y_ref[pl.ds(r0, TH), :, :] = acc.reshape(TH, W, Cp).astype(y_ref.dtype)
            # one-pass InstanceNorm statistics (biased variance), f32
            s = s + jnp.sum(acc, axis=0, keepdims=True)
            ss = ss + jnp.sum(acc * acc, axis=0, keepdims=True)
            return s, ss

        init = (jnp.zeros((1, Cp), jnp.float32), jnp.zeros((1, Cp), jnp.float32))
        s, ss = loop(body, init)
        mean = s * inv_hw
        var = jnp.maximum(ss * inv_hw - mean * mean, 0.0)
        scale = lax.rsqrt(var + EPS)
        return mean.reshape(1, 1, Cp), scale.reshape(1, 1, Cp)

    def kernel(x_ref, w1_ref, w2_ref, o_ref, pad_ref, y_ref):
        cd = pad_ref.dtype

        # ---- ReflectionPad2d(1) of x, in-kernel, into the VMEM scratch ----
        pad_ref[pl.ds(1, H), pl.ds(1, W), :] = x_ref[...].astype(cd)
        reflect_borders(pad_ref)

        # ---- conv1 (no bias: cancelled by InstanceNorm) ----
        mean1, scale1 = conv_pass(pad_ref, w1_ref, y_ref)

        # ---- normalize + ReLU, second ReflectionPad2d(1) reusing the scratch
        def norm_relu_body(i, carry):
            r0 = _hint(i * TH, TH)
            t = (y_ref[pl.ds(r0, TH), :, :].astype(jnp.float32) - mean1) * scale1
            t = jnp.maximum(t, 0.0)
            pad_ref[pl.ds(r0 + 1, TH), pl.ds(1, W), :] = t.astype(cd)
            return carry

        loop(norm_relu_body, 0)
        reflect_borders(pad_ref)

        # ---- conv2 ----
        mean2, scale2 = conv_pass(pad_ref, w2_ref, y_ref)

        # ---- normalize + residual add (f32 math), store ----
        def out_body(i, carry):
            r0 = _hint(i * TH, TH)
            t = (y_ref[pl.ds(r0, TH), :, :].astype(jnp.float32) - mean2) * scale2
            xres = x_ref[pl.ds(r0, TH), :, :].astype(jnp.float32)
            o_ref[pl.ds(r0, TH), :, :] = (t + xres).astype(o_ref.dtype)
            return carry

        loop(out_body, 0)

    return kernel


def resnet_block_pallas(x_nchw, w1, b1, w2, b2, *, compute_dtype=jnp.bfloat16):
    """CycleGAN ResNetBlock forward.

    x_nchw: (N, C, H, W) float32; w*: (C, C, 3, 3); b*: (C,).
    The conv biases are accepted for API parity but unused: InstanceNorm
    (without affine) subtracts the per-channel mean, which cancels a
    per-channel bias exactly.

    Note: channels are zero-padded up to a multiple of 128 for lane density;
    for very small C (like the C=4 smoke test) this wastes lanes — production
    CycleGAN blocks (C=256) are unaffected.  On v5e (MXU-bound, no bf16 VPU)
    compute_dtype=jnp.float32 may be preferable.
    """
    del b1, b2
    N, C, H, W = x_nchw.shape
    if H < 2 or W < 2:
        raise ValueError("ReflectionPad2d(1) requires H, W >= 2")

    Cp = _round_up(C, 128)          # lane-dense stores + full MXU N dimension
    TH = _pick_row_tile(H, W)

    # NCHW -> NHWC (channels on lanes); cast to compute dtype; pad channels.
    x = jnp.transpose(x_nchw, (0, 2, 3, 1)).astype(compute_dtype)
    if Cp != C:
        x = jnp.pad(x, ((0, 0), (0, 0), (0, 0), (0, Cp - C)))

    def pack_w(w):
        wt = jnp.transpose(w, (2, 3, 1, 0))                 # (kh, kw, Cin, Cout)
        if Cp != C:
            wt = jnp.pad(wt, ((0, 0), (0, 0), (0, Cp - C), (0, Cp - C)))
        # rows ordered kh-major, then kw, then Cin -> matches the in-kernel
        # (kw concat, then kh concat) channel ordering of the im2col patch.
        return wt.reshape(9 * Cp, Cp).astype(compute_dtype)

    w1k, w2k = pack_w(w1), pack_w(w2)

    # VMEM footprint estimate -> scoped limit, clamped to this chip's VMEM.
    itm = jnp.dtype(compute_dtype).itemsize
    out_itm = jnp.dtype(x_nchw.dtype).itemsize
    est = (2 * H * W * Cp * itm                 # x blocks, double-buffered
           + 2 * H * W * Cp * out_itm           # out blocks, double-buffered
           + 2 * 2 * 9 * Cp * Cp * itm          # both weight sets, double-buffered
           + (H + 2) * (W + 2) * Cp * itm       # padded-image scratch
           + H * W * Cp * itm                   # conv-output scratch
           + (TH + 2) * W * 3 * Cp * itm        # kw-concat transient
           + 2 * TH * W * 9 * Cp * itm          # im2col patch (+ reshape copy)
           + 2 * TH * W * Cp * 4)               # f32 MXU accumulator / temps
    try:
        phys_vmem = int(pltpu.get_tpu_info().vmem_capacity_bytes)
    except Exception:
        phys_vmem = 64 << 20                    # conservative (v7x per-TC)
    cap = max(phys_vmem - (8 << 20), 16 << 20)
    vmem_limit = int(min(max(est + (4 << 20), 32 << 20), cap))

    kernel = _make_kernel(H, W, Cp, TH, compute_dtype)

    out_nhwc = pl.pallas_call(
        kernel,
        out_shape=jax.ShapeDtypeStruct((N, H, W, Cp), x_nchw.dtype),
        grid_spec=pltpu.PrefetchScalarGridSpec(
            num_scalar_prefetch=0,
            grid=(N,),
            in_specs=[
                pl.BlockSpec((None, H, W, Cp), lambda n: (n, 0, 0, 0)),
                # Weight index_maps are constant, so they are not re-DMA'd per
                # grid step (the default second pipeline buffer is the only
                # redundancy left).
                pl.BlockSpec((9 * Cp, Cp), lambda n: (0, 0)),
                pl.BlockSpec((9 * Cp, Cp), lambda n: (0, 0)),
            ],
            out_specs=pl.BlockSpec((None, H, W, Cp), lambda n: (n, 0, 0, 0)),
            scratch_shapes=[
                pltpu.VMEM((H + 2, W + 2, Cp), compute_dtype),  # padded image
                pltpu.VMEM((H, W, Cp), compute_dtype),          # conv output
            ],
        ),
        compiler_params=pltpu.CompilerParams(
            dimension_semantics=("parallel",),   # batch images across v7x's 2 TCs
            vmem_limit_bytes=vmem_limit,
        ),
    )(x, w1k, w2k)

    out = out_nhwc[..., :C] if Cp != C else out_nhwc
    return jnp.transpose(out, (0, 3, 1, 2))                 # back to NCHW


def resnet_block_ref(x_nchw, w1, b1, w2, b2):
    """Pure-JAX reference (mirrors the PyTorch module exactly, incl. biases)."""
    def conv(x, w, b):
        xp = jnp.pad(x, ((0, 0), (0, 0), (1, 1), (1, 1)), mode="reflect")
        y = jax.lax.conv_general_dilated(
            xp, w, (1, 1), "VALID",
            dimension_numbers=("NCHW", "OIHW", "NCHW"))
        return y + b[None, :, None, None]

    def inorm(y):
        mean = jnp.mean(y, axis=(2, 3), keepdims=True)
        var = jnp.mean((y - mean) ** 2, axis=(2, 3), keepdims=True)
        return (y - mean) * jax.lax.rsqrt(var + EPS)

    y = jnp.maximum(inorm(conv(x_nchw, w1, b1)), 0.0)
    y = inorm(conv(y, w2, b2))
    return y + x_nchw


if __name__ == "__main__":
    N, C, H, W = 2, 4, 16, 16
    key = jax.random.PRNGKey(0)
    kx, kw1, kb1, kw2, kb2 = jax.random.split(key, 5)

    x = jax.random.normal(kx, (N, C, H, W), dtype=jnp.float32)
    w1 = 0.1 * jax.random.normal(kw1, (C, C, 3, 3), dtype=jnp.float32)
    b1 = 0.1 * jax.random.normal(kb1, (C,), dtype=jnp.float32)
    w2 = 0.1 * jax.random.normal(kw2, (C, C, 3, 3), dtype=jnp.float32)
    b2 = 0.1 * jax.random.normal(kb2, (C,), dtype=jnp.float32)

    ref = jax.block_until_ready(resnet_block_ref(x, w1, b1, w2, b2))

    # f32 compute path: tight check of the kernel's algorithm.
    out_f32 = jax.block_until_ready(
        resnet_block_pallas(x, w1, b1, w2, b2, compute_dtype=jnp.float32))
    assert out_f32.shape == (N, C, H, W)
    assert jnp.allclose(out_f32, ref, atol=2e-3, rtol=2e-3), (
        float(jnp.max(jnp.abs(out_f32 - ref))))

    # Default bf16 path (bf16 input/weights/staging, f32 MXU accumulation).
    out_bf16 = jax.block_until_ready(resnet_block_pallas(x, w1, b1, w2, b2))
    assert out_bf16.shape == (N, C, H, W)
    assert jnp.allclose(out_bf16, ref, atol=8e-2, rtol=8e-2), (
        float(jnp.max(jnp.abs(out_bf16 - ref))))

    print("KERNEL_OK")
</pallas_src>

<mosaic_0001>
module attributes {stable_mosaic.version = 11 : i64} {
  func.func @kernel(%arg0: i32, %arg1: memref<1x16x16x128xf32, #tpu.memory_space<vmem>>, %arg2: memref<1152x128xf32, #tpu.memory_space<vmem>>, %arg3: memref<1152x128xf32, #tpu.memory_space<vmem>>, %arg4: memref<1x16x16x128xf32, #tpu.memory_space<vmem>>, %arg5: memref<18x18x128xf32, #tpu.memory_space<vmem>>, %arg6: memref<16x16x128xf32, #tpu.memory_space<vmem>>) attributes {dimension_semantics = [#tpu.dimension_semantics<parallel>], iteration_bounds = array<i64: 2>, scalar_prefetch = 0 : i64, scratch_operands = 2 : i64, tpu.core_type = #tpu.core_type<tc>, window_params = [{transform_indices = @transform_0, window_bounds = array<i64: 1, 16, 16, 128>}, {pipeline_mode = #tpu.pipeline_mode<synchronous>, transform_indices = @transform_1, window_bounds = array<i64: 1152, 128>}, {pipeline_mode = #tpu.pipeline_mode<synchronous>, transform_indices = @transform_2, window_bounds = array<i64: 1152, 128>}, {transform_indices = @transform_3, window_bounds = array<i64: 1, 16, 16, 128>}]} {
    %c0 = arith.constant 0 : index
    %c0_0 = arith.constant 0 : index
    %c0_1 = arith.constant 0 : index
    %c0_2 = arith.constant 0 : index
    %0 = vector.load %arg1[%c0, %c0_0, %c0_1, %c0_2] : memref<1x16x16x128xf32, #tpu.memory_space<vmem>>, vector<1x16x16x128xf32>
    %1 = vector.shape_cast %0 : vector<1x16x16x128xf32> to vector<16x16x128xf32>
    %c1 = arith.constant 1 : index
    %c1_3 = arith.constant 1 : index
    %c0_4 = arith.constant 0 : index
    %2 = vector.load %arg5[%c1, %c1_3, %c0_4] : memref<18x18x128xf32, #tpu.memory_space<vmem>>, vector<16x16x128xf32>
    tpu.vector_store %arg5[%c1, %c1_3, %c0_4], %1 {strides = array<i32>} : memref<18x18x128xf32, #tpu.memory_space<vmem>>, vector<16x16x128xf32>,
    %c1_5 = arith.constant 1 : index
    %c2 = arith.constant 2 : index
    %c0_6 = arith.constant 0 : index
    %3 = vector.load %arg5[%c1_5, %c2, %c0_6] : memref<18x18x128xf32, #tpu.memory_space<vmem>>, vector<16x1x128xf32>
    %c1_7 = arith.constant 1 : index
    %c0_8 = arith.constant 0 : index
    %c0_9 = arith.constant 0 : index
    %4 = vector.load %arg5[%c1_7, %c0_8, %c0_9] : memref<18x18x128xf32, #tpu.memory_space<vmem>>, vector<16x1x128xf32>
    tpu.vector_store %arg5[%c1_7, %c0_8, %c0_9], %3 {strides = array<i32>} : memref<18x18x128xf32, #tpu.memory_space<vmem>>, vector<16x1x128xf32>,
    %c1_10 = arith.constant 1 : index
    %c15 = arith.constant 15 : index
    %c0_11 = arith.constant 0 : index
    %5 = vector.load %arg5[%c1_10, %c15, %c0_11] : memref<18x18x128xf32, #tpu.memory_space<vmem>>, vector<16x1x128xf32>
    %c1_12 = arith.constant 1 : index
    %c17 = arith.constant 17 : index
    %c0_13 = arith.constant 0 : index
    %6 = vector.load %arg5[%c1_12, %c17, %c0_13] : memref<18x18x128xf32, #tpu.memory_space<vmem>>, vector<16x1x128xf32>
    tpu.vector_store %arg5[%c1_12, %c17, %c0_13], %5 {strides = array<i32>} : memref<18x18x128xf32, #tpu.memory_space<vmem>>, vector<16x1x128xf32>,
    %c2_14 = arith.constant 2 : index
    %c0_15 = arith.constant 0 : index
    %c0_16 = arith.constant 0 : index
    %7 = vector.load %arg5[%c2_14, %c0_15, %c0_16] : memref<18x18x128xf32, #tpu.memory_space<vmem>>, vector<1x18x128xf32>
    %c0_17 = arith.constant 0 : index
    %c0_18 = arith.constant 0 : index
    %c0_19 = arith.constant 0 : index
    %8 = vector.load %arg5[%c0_17, %c0_18, %c0_19] : memref<18x18x128xf32, #tpu.memory_space<vmem>>, vector<1x18x128xf32>
    tpu.vector_store %arg5[%c0_17, %c0_18, %c0_19], %7 {strides = array<i32>} : memref<18x18x128xf32, #tpu.memory_space<vmem>>, vector<1x18x128xf32>,
    %c15_20 = arith.constant 15 : index
    %c0_21 = arith.constant 0 : index
    %c0_22 = arith.constant 0 : index
    %9 = vector.load %arg5[%c15_20, %c0_21, %c0_22] : memref<18x18x128xf32, #tpu.memory_space<vmem>>, vector<1x18x128xf32>
    %c17_23 = arith.constant 17 : index
    %c0_24 = arith.constant 0 : index
    %c0_25 = arith.constant 0 : index
    %10 = vector.load %arg5[%c17_23, %c0_24, %c0_25] : memref<18x18x128xf32, #tpu.memory_space<vmem>>, vector<1x18x128xf32>
    tpu.vector_store %arg5[%c17_23, %c0_24, %c0_25], %9 {strides = array<i32>} : memref<18x18x128xf32, #tpu.memory_space<vmem>>, vector<1x18x128xf32>,
    %cst = arith.constant 0.000000e+00 : f32
    %11 = vector.broadcast %cst : f32 to vector<1x128xf32>
    %cst_26 = arith.constant 0.000000e+00 : f32
    %12 = vector.broadcast %cst_26 : f32 to vector<1x128xf32>
    %c0_27 = arith.constant 0 : index
    %c0_28 = arith.constant 0 : index
    %c0_29 = arith.constant 0 : index
    %13 = vector.load %arg5[%c0_27, %c0_28, %c0_29] : memref<18x18x128xf32, #tpu.memory_space<vmem>>, vector<18x18x128xf32>
    %14 = vector.extract_strided_slice %13 {offsets = [0, 0, 0], sizes = [18, 16, 128], strides = [1, 1, 1]} : vector<18x18x128xf32> to vector<18x16x128xf32>
    %15 = vector.extract_strided_slice %13 {offsets = [0, 1, 0], sizes = [18, 16, 128], strides = [1, 1, 1]} : vector<18x18x128xf32> to vector<18x16x128xf32>
    %16 = vector.extract_strided_slice %13 {offsets = [0, 2, 0], sizes = [18, 16, 128], strides = [1, 1, 1]} : vector<18x18x128xf32> to vector<18x16x128xf32>
    %17 = tpu.concatenate %14, %15, %16 in 2 : vector<18x16x128xf32>, vector<18x16x128xf32>, vector<18x16x128xf32> -> vector<18x16x384xf32>
    %18 = vector.extract_strided_slice %17 {offsets = [0, 0, 0], sizes = [16, 16, 384], strides = [1, 1, 1]} : vector<18x16x384xf32> to vector<16x16x384xf32>
    %19 = vector.extract_strided_slice %17 {offsets = [1, 0, 0], sizes = [16, 16, 384], strides = [1, 1, 1]} : vector<18x16x384xf32> to vector<16x16x384xf32>
    %20 = vector.extract_strided_slice %17 {offsets = [2, 0, 0], sizes = [16, 16, 384], strides = [1, 1, 1]} : vector<18x16x384xf32> to vector<16x16x384xf32>
    %21 = tpu.concatenate %18, %19, %20 in 2 : vector<16x16x384xf32>, vector<16x16x384xf32>, vector<16x16x384xf32> -> vector<16x16x1152xf32>
    %22 = vector.shape_cast %21 : vector<16x16x1152xf32> to vector<256x1152xf32>
    %c0_30 = arith.constant 0 : index
    %c0_31 = arith.constant 0 : index
    %23 = vector.load %arg2[%c0_30, %c0_31] : memref<1152x128xf32, #tpu.memory_space<vmem>>, vector<1152x128xf32>
    %cst_32 = arith.constant dense<0.000000e+00> : vector<256x128xf32>
    %24 = tpu.matmul %22, %23, %cst_32 {dimension_numbers = #tpu.dot_dimension_numbers<[1], [0], [0], [1], [0, 0, 1, 1], [], []>} : vector<256x1152xf32>, vector<1152x128xf32>, vector<256x128xf32> -> vector<256x128xf32>
    %25 = vector.shape_cast %24 : vector<256x128xf32> to vector<16x16x128xf32>
    %c0_33 = arith.constant 0 : index
    %c0_34 = arith.constant 0 : index
    %c0_35 = arith.constant 0 : index
    %26 = vector.load %arg6[%c0_33, %c0_34, %c0_35] : memref<16x16x128xf32, #tpu.memory_space<vmem>>, vector<16x16x128xf32>
    tpu.vector_store %arg6[%c0_33, %c0_34, %c0_35], %25 {strides = array<i32>} : memref<16x16x128xf32, #tpu.memory_space<vmem>>, vector<16x16x128xf32>,
    %cst_36 = arith.constant dense<0.000000e+00> : vector<128xf32>
    %27 = vector.multi_reduction <add>, %24, %cst_36 [0] : vector<256x128xf32> to vector<128xf32>
    %28 = vector.shape_cast %27 : vector<128xf32> to vector<1x128xf32>
    %29 = arith.addf %11, %28 : vector<1x128xf32>
    %30 = arith.mulf %24, %24 : vector<256x128xf32>
    %cst_37 = arith.constant dense<0.000000e+00> : vector<128xf32>
    %31 = vector.multi_reduction <add>, %30, %cst_37 [0] : vector<256x128xf32> to vector<128xf32>
    %32 = vector.shape_cast %31 : vector<128xf32> to vector<1x128xf32>
    %33 = arith.addf %12, %32 : vector<1x128xf32>
    %cst_38 = arith.constant 3.906250e-03 : f32
    %34 = vector.broadcast %cst_38 : f32 to vector<1x128xf32>
    %35 = arith.mulf %29, %34 : vector<1x128xf32>
    %cst_39 = arith.constant 3.906250e-03 : f32
    %36 = vector.broadcast %cst_39 : f32 to vector<1x128xf32>
    %37 = arith.mulf %33, %36 : vector<1x128xf32>
    %38 = arith.mulf %35, %35 : vector<1x128xf32>
    %39 = arith.subf %37, %38 : vector<1x128xf32>
    %cst_40 = arith.constant 0.000000e+00 : f32
    %40 = vector.broadcast %cst_40 : f32 to vector<1x128xf32>
    %41 = arith.maximumf %39, %40 : vector<1x128xf32>
    %cst_41 = arith.constant 9.99999974E-6 : f32
    %42 = vector.broadcast %cst_41 : f32 to vector<1x128xf32>
    %43 = arith.addf %41, %42 : vector<1x128xf32>
    %44 = math.rsqrt %43 : vector<1x128xf32>
    %45 = vector.shape_cast %35 : vector<1x128xf32> to vector<1x1x128xf32>
    %46 = vector.shape_cast %44 : vector<1x128xf32> to vector<1x1x128xf32>
    %c0_42 = arith.constant 0 : index
    %c0_43 = arith.constant 0 : index
    %c0_44 = arith.constant 0 : index
    %47 = vector.load %arg6[%c0_42, %c0_43, %c0_44] : memref<16x16x128xf32, #tpu.memory_space<vmem>>, vector<16x16x128xf32>
    %48 = vector.broadcast %45 : vector<1x1x128xf32> to vector<16x16x128xf32>
    %49 = arith.subf %47, %48 : vector<16x16x128xf32>
    %50 = vector.broadcast %46 : vector<1x1x128xf32> to vector<16x16x128xf32>
    %51 = arith.mulf %49, %50 : vector<16x16x128xf32>
    %cst_45 = arith.constant 0.000000e+00 : f32
    %52 = vector.broadcast %cst_45 : f32 to vector<16x16x128xf32>
    %53 = arith.maximumf %51, %52 : vector<16x16x128xf32>
    %c1_46 = arith.constant 1 : index
    %c1_47 = arith.constant 1 : index
    %c0_48 = arith.constant 0 : index
    %54 = vector.load %arg5[%c1_46, %c1_47, %c0_48] : memref<18x18x128xf32, #tpu.memory_space<vmem>>, vector<16x16x128xf32>
    tpu.vector_store %arg5[%c1_46, %c1_47, %c0_48], %53 {strides = array<i32>} : memref<18x18x128xf32, #tpu.memory_space<vmem>>, vector<16x16x128xf32>,
    %c1_49 = arith.constant 1 : index
    %c2_50 = arith.constant 2 : index
    %c0_51 = arith.constant 0 : index
    %55 = vector.load %arg5[%c1_49, %c2_50, %c0_51] : memref<18x18x128xf32, #tpu.memory_space<vmem>>, vector<16x1x128xf32>
    %c1_52 = arith.constant 1 : index
    %c0_53 = arith.constant 0 : index
    %c0_54 = arith.constant 0 : index
    %56 = vector.load %arg5[%c1_52, %c0_53, %c0_54] : memref<18x18x128xf32, #tpu.memory_space<vmem>>, vector<16x1x128xf32>
    tpu.vector_store %arg5[%c1_52, %c0_53, %c0_54], %55 {strides = array<i32>} : memref<18x18x128xf32, #tpu.memory_space<vmem>>, vector<16x1x128xf32>,
    %c1_55 = arith.constant 1 : index
    %c15_56 = arith.constant 15 : index
    %c0_57 = arith.constant 0 : index
    %57 = vector.load %arg5[%c1_55, %c15_56, %c0_57] : memref<18x18x128xf32, #tpu.memory_space<vmem>>, vector<16x1x128xf32>
    %c1_58 = arith.constant 1 : index
    %c17_59 = arith.constant 17 : index
    %c0_60 = arith.constant 0 : index
    %58 = vector.load %arg5[%c1_58, %c17_59, %c0_60] : memref<18x18x128xf32, #tpu.memory_space<vmem>>, vector<16x1x128xf32>
    tpu.vector_store %arg5[%c1_58, %c17_59, %c0_60], %57 {strides = array<i32>} : memref<18x18x128xf32, #tpu.memory_space<vmem>>, vector<16x1x128xf32>,
    %c2_61 = arith.constant 2 : index
    %c0_62 = arith.constant 0 : index
    %c0_63 = arith.constant 0 : index
    %59 = vector.load %arg5[%c2_61, %c0_62, %c0_63] : memref<18x18x128xf32, #tpu.memory_space<vmem>>, vector<1x18x128xf32>
    %c0_64 = arith.constant 0 : index
    %c0_65 = arith.constant 0 : index
    %c0_66 = arith.constant 0 : index
    %60 = vector.load %arg5[%c0_64, %c0_65, %c0_66] : memref<18x18x128xf32, #tpu.memory_space<vmem>>, vector<1x18x128xf32>
    tpu.vector_store %arg5[%c0_64, %c0_65, %c0_66], %59 {strides = array<i32>} : memref<18x18x128xf32, #tpu.memory_space<vmem>>, vector<1x18x128xf32>,
    %c15_67 = arith.constant 15 : index
    %c0_68 = arith.constant 0 : index
    %c0_69 = arith.constant 0 : index
    %61 = vector.load %arg5[%c15_67, %c0_68, %c0_69] : memref<18x18x128xf32, #tpu.memory_space<vmem>>, vector<1x18x128xf32>
    %c17_70 = arith.constant 17 : index
    %c0_71 = arith.constant 0 : index
    %c0_72 = arith.constant 0 : index
    %62 = vector.load %arg5[%c17_70, %c0_71, %c0_72] : memref<18x18x128xf32, #tpu.memory_space<vmem>>, vector<1x18x128xf32>
    tpu.vector_store %arg5[%c17_70, %c0_71, %c0_72], %61 {strides = array<i32>} : memref<18x18x128xf32, #tpu.memory_space<vmem>>, vector<1x18x128xf32>,
    %cst_73 = arith.constant 0.000000e+00 : f32
    %63 = vector.broadcast %cst_73 : f32 to vector<1x128xf32>
    %cst_74 = arith.constant 0.000000e+00 : f32
    %64 = vector.broadcast %cst_74 : f32 to vector<1x128xf32>
    %c0_75 = arith.constant 0 : index
    %c0_76 = arith.constant 0 : index
    %c0_77 = arith.constant 0 : index
    %65 = vector.load %arg5[%c0_75, %c0_76, %c0_77] : memref<18x18x128xf32, #tpu.memory_space<vmem>>, vector<18x18x128xf32>
    %66 = vector.extract_strided_slice %65 {offsets = [0, 0, 0], sizes = [18, 16, 128], strides = [1, 1, 1]} : vector<18x18x128xf32> to vector<18x16x128xf32>
    %67 = vector.extract_strided_slice %65 {offsets = [0, 1, 0], sizes = [18, 16, 128], strides = [1, 1, 1]} : vector<18x18x128xf32> to vector<18x16x128xf32>
    %68 = vector.extract_strided_slice %65 {offsets = [0, 2, 0], sizes = [18, 16, 128], strides = [1, 1, 1]} : vector<18x18x128xf32> to vector<18x16x128xf32>
    %69 = tpu.concatenate %66, %67, %68 in 2 : vector<18x16x128xf32>, vector<18x16x128xf32>, vector<18x16x128xf32> -> vector<18x16x384xf32>
    %70 = vector.extract_strided_slice %69 {offsets = [0, 0, 0], sizes = [16, 16, 384], strides = [1, 1, 1]} : vector<18x16x384xf32> to vector<16x16x384xf32>
    %71 = vector.extract_strided_slice %69 {offsets = [1, 0, 0], sizes = [16, 16, 384], strides = [1, 1, 1]} : vector<18x16x384xf32> to vector<16x16x384xf32>
    %72 = vector.extract_strided_slice %69 {offsets = [2, 0, 0], sizes = [16, 16, 384], strides = [1, 1, 1]} : vector<18x16x384xf32> to vector<16x16x384xf32>
    %73 = tpu.concatenate %70, %71, %72 in 2 : vector<16x16x384xf32>, vector<16x16x384xf32>, vector<16x16x384xf32> -> vector<16x16x1152xf32>
    %74 = vector.shape_cast %73 : vector<16x16x1152xf32> to vector<256x1152xf32>
    %c0_78 = arith.constant 0 : index
    %c0_79 = arith.constant 0 : index
    %75 = vector.load %arg3[%c0_78, %c0_79] : memref<1152x128xf32, #tpu.memory_space<vmem>>, vector<1152x128xf32>
    %cst_80 = arith.constant dense<0.000000e+00> : vector<256x128xf32>
    %76 = tpu.matmul %74, %75, %cst_80 {dimension_numbers = #tpu.dot_dimension_numbers<[1], [0], [0], [1], [0, 0, 1, 1], [], []>} : vector<256x1152xf32>, vector<1152x128xf32>, vector<256x128xf32> -> vector<256x128xf32>
    %77 = vector.shape_cast %76 : vector<256x128xf32> to vector<16x16x128xf32>
    %c0_81 = arith.constant 0 : index
    %c0_82 = arith.constant 0 : index
    %c0_83 = arith.constant 0 : index
    %78 = vector.load %arg6[%c0_81, %c0_82, %c0_83] : memref<16x16x128xf32, #tpu.memory_space<vmem>>, vector<16x16x128xf32>
    tpu.vector_store %arg6[%c0_81, %c0_82, %c0_83], %77 {strides = array<i32>} : memref<16x16x128xf32, #tpu.memory_space<vmem>>, vector<16x16x128xf32>,
    %cst_84 = arith.constant dense<0.000000e+00> : vector<128xf32>
    %79 = vector.multi_reduction <add>, %76, %cst_84 [0] : vector<256x128xf32> to vector<128xf32>
    %80 = vector.shape_cast %79 : vector<128xf32> to vector<1x128xf32>
    %81 = arith.addf %63, %80 : vector<1x128xf32>
    %82 = arith.mulf %76, %76 : vector<256x128xf32>
    %cst_85 = arith.constant dense<0.000000e+00> : vector<128xf32>
    %83 = vector.multi_reduction <add>, %82, %cst_85 [0] : vector<256x128xf32> to vector<128xf32>
    %84 = vector.shape_cast %83 : vector<128xf32> to vector<1x128xf32>
    %85 = arith.addf %64, %84 : vector<1x128xf32>
    %cst_86 = arith.constant 3.906250e-03 : f32
    %86 = vector.broadcast %cst_86 : f32 to vector<1x128xf32>
    %87 = arith.mulf %81, %86 : vector<1x128xf32>
    %cst_87 = arith.constant 3.906250e-03 : f32
    %88 = vector.broadcast %cst_87 : f32 to vector<1x128xf32>
    %89 = arith.mulf %85, %88 : vector<1x128xf32>
    %90 = arith.mulf %87, %87 : vector<1x128xf32>
    %91 = arith.subf %89, %90 : vector<1x128xf32>
    %cst_88 = arith.constant 0.000000e+00 : f32
    %92 = vector.broadcast %cst_88 : f32 to vector<1x128xf32>
    %93 = arith.maximumf %91, %92 : vector<1x128xf32>
    %cst_89 = arith.constant 9.99999974E-6 : f32
    %94 = vector.broadcast %cst_89 : f32 to vector<1x128xf32>
    %95 = arith.addf %93, %94 : vector<1x128xf32>
    %96 = math.rsqrt %95 : vector<1x128xf32>
    %97 = vector.shape_cast %87 : vector<1x128xf32> to vector<1x1x128xf32>
    %98 = vector.shape_cast %96 : vector<1x128xf32> to vector<1x1x128xf32>
    %c0_90 = arith.constant 0 : index
    %c0_91 = arith.constant 0 : index
    %c0_92 = arith.constant 0 : index
    %99 = vector.load %arg6[%c0_90, %c0_91, %c0_92] : memref<16x16x128xf32, #tpu.memory_space<vmem>>, vector<16x16x128xf32>
    %100 = vector.broadcast %97 : vector<1x1x128xf32> to vector<16x16x128xf32>
    %101 = arith.subf %99, %100 : vector<16x16x128xf32>
    %102 = vector.broadcast %98 : vector<1x1x128xf32> to vector<16x16x128xf32>
    %103 = arith.mulf %101, %102 : vector<16x16x128xf32>
    %c0_93 = arith.constant 0 : index
    %c0_94 = arith.constant 0 : index
    %c0_95 = arith.constant 0 : index
    %c0_96 = arith.constant 0 : index
    %104 = vector.load %arg1[%c0_93, %c0_94, %c0_95, %c0_96] : memref<1x16x16x128xf32, #tpu.memory_space<vmem>>, vector<1x16x16x128xf32>
    %105 = vector.shape_cast %104 : vector<1x16x16x128xf32> to vector<16x16x128xf32>
    %106 = arith.addf %103, %105 : vector<16x16x128xf32>
    %c0_97 = arith.constant 0 : index
    %c0_98 = arith.constant 0 : index
    %c0_99 = arith.constant 0 : index
    %c0_100 = arith.constant 0 : index
    %107 = vector.load %arg4[%c0_97, %c0_98, %c0_99, %c0_100] : memref<1x16x16x128xf32, #tpu.memory_space<vmem>>, vector<1x16x16x128xf32>
    %108 = vector.shape_cast %107 : vector<1x16x16x128xf32> to vector<16x16x128xf32>
    %109 = vector.shape_cast %106 : vector<16x16x128xf32> to vector<1x16x16x128xf32>
    tpu.vector_store %arg4[%c0_97, %c0_98, %c0_99, %c0_100], %109 {strides = array<i32>} : memref<1x16x16x128xf32, #tpu.memory_space<vmem>>, vector<1x16x16x128xf32>,
    return
  }
  func.func @transform_0(%arg0: i32) -> (i32, i32, i32, i32) {
    %c0_i32 = arith.constant 0 : i32
    %c0_i32_0 = arith.constant 0 : i32
    %c0_i32_1 = arith.constant 0 : i32
    %c0_i32_2 = arith.constant 0 : i32
    return %arg0, %c0_i32, %c0_i32_0, %c0_i32_1 : i32, i32, i32, i32
  }
  func.func @transform_1(%arg0: i32) -> (i32, i32) {
    %c0_i32 = arith.constant 0 : i32
    %c0_i32_0 = arith.constant 0 : i32
    %c0_i32_1 = arith.constant 0 : i32
    return %c0_i32, %c0_i32_0 : i32, i32
  }
  func.func @transform_2(%arg0: i32) -> (i32, i32) {
    %c0_i32 = arith.constant 0 : i32
    %c0_i32_0 = arith.constant 0 : i32
    %c0_i32_1 = arith.constant 0 : i32
    return %c0_i32, %c0_i32_0 : i32, i32
  }
  func.func @transform_3(%arg0: i32) -> (i32, i32, i32, i32) {
    %c0_i32 = arith.constant 0 : i32
    %c0_i32_0 = arith.constant 0 : i32
    %c0_i32_1 = arith.constant 0 : i32
    %c0_i32_2 = arith.constant 0 : i32
    return %arg0, %c0_i32, %c0_i32_0, %c0_i32_1 : i32, i32, i32, i32
  }
}

</mosaic_0001>

<llo_original>
// kernel: tpu_custom_call.1
$region0: #{tpu_custom_call.1}
  #allocation0 [shape = 'u32[]', space=smem, size = 0x4, offset = 0x4, fixed_abs, tag = 'smem constant byte address 0x4 - core index']
  #allocation1 [shape = 'u32[144,128]{1,0:T(1,128)}', space=vmem, size = 0x12000, scoped, tag = 'internal scratch']
  #allocation2 [shape = 'f32[18,18,128]{2,1,0:T(8,128)}', space=vmem, size = 0x36000, scoped, tag = 'scratch operand']
  #allocation3 [shape = 'f32[16,16,128]{2,1,0:T(8,128)}', space=vmem, size = 0x20000, scoped, tag = 'scratch operand']
  %s0 = inlined_call_operand.hbm [shape: f32[2,16,16,128], index: 0, kind: input, shape index: {}]
  %s1 = inlined_call_operand.hbm [shape: f32[1152,128], index: 1, kind: input, shape index: {}]
  %s2 = inlined_call_operand.hbm [shape: f32[1152,128], index: 2, kind: input, shape index: {}]
  %s3 = inlined_call_operand.hbm [shape: f32[2,16,16,128], index: 3, kind: output, shape index: {}]
  %s4 = sld [smem:[#allocation0]]
  $region57: #{tpu_custom_call.1} parent=0
    _
  %s6 = ssub.s32 1, %s4
  %s7 = scalar_select 0, %s6, %s4
  $region1: #{tpu_custom_call.1} parent=0
    #allocation4 [shape = 'u8[262144]{0}', space=vmem, size = 0x40000, scoped, tag = 'input window, operand 0']
    #allocation5 [shape = 's32[2]{0}', space=sflag, size = 0x8, scoped, tag = 'scoped memory for tpu_custom_call.1']
    #allocation6 [shape = 's32[2]{0}', space=sflag, size = 0x8, scoped, tag = 'scoped memory for tpu_custom_call.1']
    #allocation7 [shape = 'u8[589824]{0}', space=vmem, size = 0x90000, scoped, tag = 'input window, operand 1, single buffered']
    #allocation8 [shape = 's32[1]{0}', space=sflag, size = 0x4, scoped, tag = 'scoped memory for tpu_custom_call.1']
    #allocation9 [shape = 'u8[589824]{0}', space=vmem, size = 0x90000, scoped, tag = 'input window, operand 2, single buffered']
    #allocation10 [shape = 'u8[262144]{0}', space=vmem, size = 0x40000, scoped, tag = 'output window, operand 0']
    %8 = vsyncpa [#allocation5], 0
    %s9 = scalar_lea.sflag [#allocation5], 1
    %10 = vsyncpa %s9, 0
    %11 = vsyncpa [#allocation8], 0
    %12 = vsyncpa [#allocation6], 0
    %s13 = scalar_lea.sflag [#allocation6], 1
    %14 = vsyncpa %s13, 0
    loop: start=0, step=1, limit=4
    $region2: #{tpu_custom_call.1} parent=1 // loop_pre_header
      _
    $region3: #{tpu_custom_call.1} parent=1 // loop_header
      %s16 = sphi 0, %s20
      %p17 = scmp.ge.s32.totalorder %s16, 4
      %s26 = sphi 0, %s28
      %s29 = sphi 0, %s26
      %s30 = sphi 0, %s29
      %s46 = sphi 0, %s30
      %s50 = sphi 0, %s50
      %s52 = sphi 0, %s50
      %s53 = sphi 0, %s52
      %s67 = sphi 0, %s53
      %s71 = sphi 0, %s71
      %s73 = sphi 0, %s71
      %s74 = sphi 0, %s73
      %s88 = sphi 0, %s74
      %s94 = sphi 0, %s96
      %s97 = sphi 0, %s94
      %s98 = sphi 0, %s97
      %s114 = sphi 0, %s98
    $region4: #{tpu_custom_call.1} parent=1 // loop_header_branch
      %19 = sbr.rel (%p17) target = $region8
    $region5: #{tpu_custom_call.1} parent=1 // loop_body
      %s21 = ssub.s32 %s16, 1
      %s22 = ssub.s32 %s16, 2
      %s23 = sadd.s32 %s16, 1
      %s24 = ssub.s32 %s16, %s23
      %p25 = scmp.eq.s32.totalorder %s24, 0
      %s27 = sadd.s32 %s26, 1
      %s28 = scalar_select %p25, %s26, %s27
      %p31 = pneg %p25
      %p32 = scmp.eq.s32.totalorder %s16, 1
      %p33 = por %p31, %p32
      %p34 = scmp.ne.s32.totalorder %s26, %s29
      %p35 = scmp.eq.s32.totalorder %s16, 0
      %p36 = por %p34, %p35
      %p37 = scmp.ne.s32.totalorder %s26, %s29
      %p38 = scmp.eq.s32.totalorder %s21, 1
      %p39 = por %p37, %p38
      %p40 = scmp.ne.s32.totalorder %s29, %s30
      %p41 = scmp.eq.s32.totalorder %s21, 0
      %p42 = por %p40, %p41
      %p43 = scmp.ne.s32.totalorder %s29, %s30
      %p44 = scmp.eq.s32.totalorder %s22, 1
      %p45 = por %p43, %p44
      %p47 = scmp.ne.s32.totalorder %s30, %s46
      %p48 = scmp.eq.s32.totalorder %s22, 0
      %p49 = por %p47, %p48
      %s51 = sadd.s32 %s50, 1
      %p54 = scmp.eq.s32.totalorder %s16, 1
      %p55 = scmp.ne.s32.totalorder %s50, %s52
      %p56 = scmp.eq.s32.totalorder %s16, 0
      %p57 = por %p55, %p56
      %p58 = scmp.ne.s32.totalorder %s50, %s52
      %p59 = scmp.eq.s32.totalorder %s21, 1
      %p60 = por %p58, %p59
      %p61 = scmp.ne.s32.totalorder %s52, %s53
      %p62 = scmp.eq.s32.totalorder %s21, 0
      %p63 = por %p61, %p62
      %p64 = scmp.ne.s32.totalorder %s52, %s53
      %p65 = scmp.eq.s32.totalorder %s22, 1
      %p66 = por %p64, %p65
      %p68 = scmp.ne.s32.totalorder %s53, %s67
      %p69 = scmp.eq.s32.totalorder %s22, 0
      %p70 = por %p68, %p69
      %s72 = sadd.s32 %s71, 1
      %p75 = scmp.eq.s32.totalorder %s16, 1
      %p76 = scmp.ne.s32.totalorder %s71, %s73
      %p77 = scmp.eq.s32.totalorder %s16, 0
      %p78 = por %p76, %p77
      %p79 = scmp.ne.s32.totalorder %s71, %s73
      %p80 = scmp.eq.s32.totalorder %s21, 1
      %p81 = por %p79, %p80
      %p82 = scmp.ne.s32.totalorder %s73, %s74
      %p83 = scmp.eq.s32.totalorder %s21, 0
      %p84 = por %p82, %p83
      %p85 = scmp.ne.s32.totalorder %s73, %s74
      %p86 = scmp.eq.s32.totalorder %s22, 1
      %p87 = por %p85, %p86
      %p89 = scmp.ne.s32.totalorder %s74, %s88
      %p90 = scmp.eq.s32.totalorder %s22, 0
      %p91 = por %p89, %p90
      %s92 = ssub.s32 %s16, %s23
      %p93 = scmp.eq.s32.totalorder %s92, 0
      %s95 = sadd.s32 %s94, 1
      %s96 = scalar_select %p93, %s94, %s95
      %p99 = pneg %p93
      %p100 = scmp.eq.s32.totalorder %s16, 1
      %p101 = por %p99, %p100
      %p102 = scmp.ne.s32.totalorder %s94, %s97
      %p103 = scmp.eq.s32.totalorder %s16, 0
      %p104 = por %p102, %p103
      %p105 = scmp.ne.s32.totalorder %s94, %s97
      %p106 = scmp.eq.s32.totalorder %s21, 1
      %p107 = por %p105, %p106
      %p108 = scmp.ne.s32.totalorder %s97, %s98
      %p109 = scmp.eq.s32.totalorder %s21, 0
      %p110 = por %p108, %p109
      %p111 = scmp.ne.s32.totalorder %s97, %s98
      %p112 = scmp.eq.s32.totalorder %s22, 1
      %p113 = por %p111, %p112
      %p115 = scmp.ne.s32.totalorder %s98, %s114
      %p116 = scmp.eq.s32.totalorder %s22, 0
      %p117 = por %p115, %p116
      %p118 = scmp.le.s32.totalorder 1, %s16
      %p119 = scmp.lt.s32.totalorder %s16, 3
      %p120 = pnand %p118, %p119
      %p121 = pneg %p120
      // Predicated region
      $region9: #{tpu_custom_call.1} parent=5 // pred_check
        _
      $region10: #{tpu_custom_call.1} parent=5 // pred_check_branch
        %123 = sbr.rel (%p120) target = $region12
      $region11: #{tpu_custom_call.1} parent=5 // pred_region
        %s124 = ssub.s32 %s16, 1
        // Predicated region
        $region13: #{tpu_custom_call.1} parent=11 // pred_check
          %p125 = pneg %p63
        $region14: #{tpu_custom_call.1} parent=11 // pred_check_branch
          %127 = sbr.rel (%p125) target = $region16
        $region15: #{tpu_custom_call.1} parent=11 // pred_region
          %s129 = ssub.s32 18432, 18432
          %130 = vsyncadd [#allocation8], %s129
          %s131 = sshll.u32 [#allocation7], 4
          %s132 = int_to_ptr.vmem [resolvable:$true] %s131
          %137 = dma.hbm_to_vmem [thread:$0]  %s1, 18432, %s132, [#allocation8], 128, 128, 8
        $region16: #{tpu_custom_call.1} parent=11 // pred_fallthru
          _
        // Predicated region
        $region17: #{tpu_custom_call.1} parent=11 // pred_check
          %p138 = pneg %p84
        $region18: #{tpu_custom_call.1} parent=11 // pred_check_branch
          %140 = sbr.rel (%p138) target = $region20
        $region19: #{tpu_custom_call.1} parent=11 // pred_region
          %s142 = ssub.s32 18432, 18432
          %143 = vsyncadd [#allocation8], %s142
          %s144 = sshll.u32 [#allocation9], 4
          %s145 = int_to_ptr.vmem [resolvable:$true] %s144
          %150 = dma.hbm_to_vmem [thread:$0]  %s2, 18432, %s145, [#allocation8], 128, 128, 8
        $region20: #{tpu_custom_call.1} parent=11 // pred_fallthru
          _
      $region12: #{tpu_custom_call.1} parent=5 // pred_fallthru
        _
      %p151 = scmp.lt.s32.totalorder %s16, 2
      // Predicated region
      $region21: #{tpu_custom_call.1} parent=5 // pred_check
        %p152 = pneg %p151
      $region22: #{tpu_custom_call.1} parent=5 // pred_check_branch
        %154 = sbr.rel (%p152) target = $region24
      $region23: #{tpu_custom_call.1} parent=5 // pred_region
        // Predicated region
        $region25: #{tpu_custom_call.1} parent=23 // pred_check
          %p155 = pneg %p36
        $region26: #{tpu_custom_call.1} parent=23 // pred_check_branch
          %157 = sbr.rel (%p155) target = $region28
        $region27: #{tpu_custom_call.1} parent=23 // pred_region
          %s158 = sand.u32 %s26, 1
          %s159 = scalar_lea.sflag [#allocation5], %s158
          %s160 = sand.u32 %s26, 1
          %s161 = smul.addr %s160, 256
          %s162 = scalar_lea.vmem [#allocation4], %s161
          %s164 = ssub.s32 4096, 4096
          %165 = vsyncadd %s159, %s164
          %s166 = smul.addr %s16, 32
          %s167 = smul.addr %s166, 128
          %s168 = scalar_lea.hbm %s0, %s167
          %s169 = sshll.u32 %s162, 4
          %s170 = int_to_ptr.vmem [resolvable:$true] %s169
          %175 = dma.hbm_to_vmem [thread:$0]  %s168, 4096, %s170, %s159, 128, 128, 8
        $region28: #{tpu_custom_call.1} parent=23 // pred_fallthru
          _
      $region24: #{tpu_custom_call.1} parent=5 // pred_fallthru
        _
      %p176 = scmp.le.s32.totalorder 1, %s16
      %p177 = scmp.lt.s32.totalorder %s16, 3
      %p178 = pnand %p176, %p177
      %p179 = pneg %p178
      // Predicated region
      $region29: #{tpu_custom_call.1} parent=5 // pred_check
        _
      $region30: #{tpu_custom_call.1} parent=5 // pred_check_branch
        %181 = sbr.rel (%p178) target = $region32
      $region31: #{tpu_custom_call.1} parent=5 // pred_region
        %s182 = ssub.s32 %s16, 1
        %s183 = sand.u32 %s29, 1
        %s184 = scalar_lea.sflag [#allocation5], %s183
        %s185 = sand.u32 %s29, 1
        %s186 = smul.addr %s185, 256
        %s187 = scalar_lea.vmem [#allocation4], %s186
        // Predicated region
        $region33: #{tpu_custom_call.1} parent=31 // pred_check
          %p188 = pneg %p42
        $region34: #{tpu_custom_call.1} parent=31 // pred_check_branch
          %190 = sbr.rel (%p188) target = $region36
        $region35: #{tpu_custom_call.1} parent=31 // pred_region
          %191 = dma.done %s184, 4096
        $region36: #{tpu_custom_call.1} parent=31 // pred_fallthru
          _
        // Predicated region
        $region37: #{tpu_custom_call.1} parent=31 // pred_check
          %p192 = pneg %p63
        $region38: #{tpu_custom_call.1} parent=31 // pred_check_branch
          %194 = sbr.rel (%p192) target = $region40
        $region39: #{tpu_custom_call.1} parent=31 // pred_region
          %195 = dma.done [#allocation8], 18432
        $region40: #{tpu_custom_call.1} parent=31 // pred_fallthru
          _
        // Predicated region
        $region41: #{tpu_custom_call.1} parent=31 // pred_check
          %p196 = pneg %p84
        $region42: #{tpu_custom_call.1} parent=31 // pred_check_branch
          %198 = sbr.rel (%p196) target = $region44
        $region43: #{tpu_custom_call.1} parent=31 // pred_region
          %199 = dma.done [#allocation8], 18432
        $region44: #{tpu_custom_call.1} parent=31 // pred_fallthru
          _
        %s200 = sand.u32 %s29, 1
        %s201 = scalar_lea.sflag [#allocation5], %s200
        %s202 = sand.u32 %s29, 1
        %s203 = smul.addr %s202, 256
        %s204 = scalar_lea.vmem [#allocation4], %s203
        %p205 = pneg %p42
        %p206 = pneg %p39
        %p207 = pneg %p63
        %p208 = pneg %p60
        %p209 = pneg %p84
        %p210 = pneg %p81
        %p211 = pneg %p110
        %p212 = pneg %p107
        %s213 = sand.u32 %s97, 1
        %s214 = scalar_lea.sflag [#allocation6], %s213
        %s215 = sand.u32 %s97, 1
        %s216 = smul.addr %s215, 256
        %s217 = scalar_lea.vmem [#allocation10], %s216
        %v218 = vld [vmem:[%s187] sm:$0xff]
        %v219 = vld [vmem:[%s187 + $0x8] sm:$0xff]
        %v220 = vld [vmem:[%s187 + $0x10] sm:$0xff]
        %v221 = vld [vmem:[%s187 + $0x18] sm:$0xff]
        %v222 = vld [vmem:[%s187 + $0x20] sm:$0xff]
        %v223 = vld [vmem:[%s187 + $0x28] sm:$0xff]
        %v224 = vld [vmem:[%s187 + $0x30] sm:$0xff]
        %v225 = vld [vmem:[%s187 + $0x38] sm:$0xff]
        %v226 = vld [vmem:[%s187 + $0x40] sm:$0xff]
        %v227 = vld [vmem:[%s187 + $0x48] sm:$0xff]
        %v228 = vld [vmem:[%s187 + $0x50] sm:$0xff]
        %v229 = vld [vmem:[%s187 + $0x58] sm:$0xff]
        %v230 = vld [vmem:[%s187 + $0x60] sm:$0xff]
        %v231 = vld [vmem:[%s187 + $0x68] sm:$0xff]
        %v232 = vld [vmem:[%s187 + $0x70] sm:$0xff]
        %v233 = vld [vmem:[%s187 + $0x78] sm:$0xff]
        %v234 = vld [vmem:[%s187 + $0x80] sm:$0xff]
        %v235 = vld [vmem:[%s187 + $0x88] sm:$0xff]
        %v236 = vld [vmem:[%s187 + $0x90] sm:$0xff]
        %v237 = vld [vmem:[%s187 + $0x98] sm:$0xff]
        %v238 = vld [vmem:[%s187 + $0xa0] sm:$0xff]
        %v239 = vld [vmem:[%s187 + $0xa8] sm:$0xff]
        %v240 = vld [vmem:[%s187 + $0xb0] sm:$0xff]
        %v241 = vld [vmem:[%s187 + $0xb8] sm:$0xff]
        %v242 = vld [vmem:[%s187 + $0xc0] sm:$0xff]
        %v243 = vld [vmem:[%s187 + $0xc8] sm:$0xff]
        %v244 = vld [vmem:[%s187 + $0xd0] sm:$0xff]
        %v245 = vld [vmem:[%s187 + $0xd8] sm:$0xff]
        %v246 = vld [vmem:[%s187 + $0xe0] sm:$0xff]
        %v247 = vld [vmem:[%s187 + $0xe8] sm:$0xff]
        %v248 = vld [vmem:[%s187 + $0xf0] sm:$0xff]
        %v249 = vld [vmem:[%s187 + $0xf8] sm:$0xff]
        %s250 = scalar_lea.vmem [#allocation2], 24
        %251 = vst [vmem:[%s250 + $0x1] sm:$0xff] %v218
        %252 = vst [vmem:[%s250 + $0x9] sm:$0xff] %v219
        %253 = vst [vmem:[%s250 + $0x19] sm:$0xff] %v220
        %254 = vst [vmem:[%s250 + $0x21] sm:$0xff] %v221
        %255 = vst [vmem:[%s250 + $0x31] sm:$0xff] %v222
        %256 = vst [vmem:[%s250 + $0x39] sm:$0xff] %v223
        %257 = vst [vmem:[%s250 + $0x49] sm:$0xff] %v224
        %258 = vst [vmem:[%s250 + $0x51] sm:$0xff] %v225
        %259 = vst [vmem:[%s250 + $0x61] sm:$0xff] %v226
        %260 = vst [vmem:[%s250 + $0x69] sm:$0xff] %v227
        %261 = vst [vmem:[%s250 + $0x79] sm:$0xff] %v228
        %262 = vst [vmem:[%s250 + $0x81] sm:$0xff] %v229
        %263 = vst [vmem:[%s250 + $0x91] sm:$0xff] %v230
        %264 = vst [vmem:[%s250 + $0x99] sm:$0xff] %v231
        %265 = vst [vmem:[%s250 + $0xa9] sm:$0xff] %v232
        %266 = vst [vmem:[%s250 + $0xb1] sm:$0xff] %v233
        %267 = vst [vmem:[%s250 + $0xc1] sm:$0xff] %v234
        %268 = vst [vmem:[%s250 + $0xc9] sm:$0xff] %v235
        %269 = vst [vmem:[%s250 + $0xd9] sm:$0xff] %v236
        %270 = vst [vmem:[%s250 + $0xe1] sm:$0xff] %v237
        %271 = vst [vmem:[%s250 + $0xf1] sm:$0xff] %v238
        %272 = vst [vmem:[%s250 + $0xf9] sm:$0xff] %v239
        %273 = vst [vmem:[%s250 + $0x109] sm:$0xff] %v240
        %274 = vst [vmem:[%s250 + $0x111] sm:$0xff] %v241
        %275 = vst [vmem:[%s250 + $0x121] sm:$0xff] %v242
        %276 = vst [vmem:[%s250 + $0x129] sm:$0xff] %v243
        %277 = vst [vmem:[%s250 + $0x139] sm:$0xff] %v244
        %278 = vst [vmem:[%s250 + $0x141] sm:$0xff] %v245
        %279 = vst [vmem:[%s250 + $0x151] sm:$0xff] %v246
        %280 = vst [vmem:[%s250 + $0x159] sm:$0xff] %v247
        %281 = vst [vmem:[%s250 + $0x169] sm:$0xff] %v248
        %282 = vst [vmem:[%s250 + $0x171] sm:$0xff] %v249
        %v283 = vld [vmem:[%s250 + $0x2] sm:$0x1]
        %v284 = vld [vmem:[%s250 + $0x1a] sm:$0x1]
        %v285 = vld [vmem:[%s250 + $0x32] sm:$0x1]
        %v286 = vld [vmem:[%s250 + $0x4a] sm:$0x1]
        %v287 = vld [vmem:[%s250 + $0x62] sm:$0x1]
        %v288 = vld [vmem:[%s250 + $0x7a] sm:$0x1]
        %v289 = vld [vmem:[%s250 + $0x92] sm:$0x1]
        %v290 = vld [vmem:[%s250 + $0xaa] sm:$0x1]
        %v291 = vld [vmem:[%s250 + $0xc2] sm:$0x1]
        %v292 = vld [vmem:[%s250 + $0xda] sm:$0x1]
        %v293 = vld [vmem:[%s250 + $0xf2] sm:$0x1]
        %v294 = vld [vmem:[%s250 + $0x10a] sm:$0x1]
        %v295 = vld [vmem:[%s250 + $0x122] sm:$0x1]
        %v296 = vld [vmem:[%s250 + $0x13a] sm:$0x1]
        %v297 = vld [vmem:[%s250 + $0x152] sm:$0x1]
        %v298 = vld [vmem:[%s250 + $0x16a] sm:$0x1]
        %299 = vst [vmem:[%s250] sm:$0x1] %v283
        %300 = vst [vmem:[%s250 + $0x18] sm:$0x1] %v284
        %301 = vst [vmem:[%s250 + $0x30] sm:$0x1] %v285
        %302 = vst [vmem:[%s250 + $0x48] sm:$0x1] %v286
        %303 = vst [vmem:[%s250 + $0x60] sm:$0x1] %v287
        %304 = vst [vmem:[%s250 + $0x78] sm:$0x1] %v288
        %305 = vst [vmem:[%s250 + $0x90] sm:$0x1] %v289
        %306 = vst [vmem:[%s250 + $0xa8] sm:$0x1] %v290
        %307 = vst [vmem:[%s250 + $0xc0] sm:$0x1] %v291
        %308 = vst [vmem:[%s250 + $0xd8] sm:$0x1] %v292
        %309 = vst [vmem:[%s250 + $0xf0] sm:$0x1] %v293
        %310 = vst [vmem:[%s250 + $0x108] sm:$0x1] %v294
        %311 = vst [vmem:[%s250 + $0x120] sm:$0x1] %v295
        %312 = vst [vmem:[%s250 + $0x138] sm:$0x1] %v296
        %313 = vst [vmem:[%s250 + $0x150] sm:$0x1] %v297
        %314 = vst [vmem:[%s250 + $0x168] sm:$0x1] %v298
        %v315 = vld [vmem:[%s250 + $0xf] sm:$0x1]
        %v316 = vld [vmem:[%s250 + $0x27] sm:$0x1]
        %v317 = vld [vmem:[%s250 + $0x3f] sm:$0x1]
        %v318 = vld [vmem:[%s250 + $0x57] sm:$0x1]
        %v319 = vld [vmem:[%s250 + $0x6f] sm:$0x1]
        %v320 = vld [vmem:[%s250 + $0x87] sm:$0x1]
        %v321 = vld [vmem:[%s250 + $0x9f] sm:$0x1]
        %v322 = vld [vmem:[%s250 + $0xb7] sm:$0x1]
        %v323 = vld [vmem:[%s250 + $0xcf] sm:$0x1]
        %v324 = vld [vmem:[%s250 + $0xe7] sm:$0x1]
        %v325 = vld [vmem:[%s250 + $0xff] sm:$0x1]
        %v326 = vld [vmem:[%s250 + $0x117] sm:$0x1]
        %v327 = vld [vmem:[%s250 + $0x12f] sm:$0x1]
        %v328 = vld [vmem:[%s250 + $0x147] sm:$0x1]
        %v329 = vld [vmem:[%s250 + $0x15f] sm:$0x1]
        %v330 = vld [vmem:[%s250 + $0x177] sm:$0x1]
        %331 = vst [vmem:[%s250 + $0x11] sm:$0x1] %v315
        %332 = vst [vmem:[%s250 + $0x29] sm:$0x1] %v316
        %333 = vst [vmem:[%s250 + $0x41] sm:$0x1] %v317
        %334 = vst [vmem:[%s250 + $0x59] sm:$0x1] %v318
        %335 = vst [vmem:[%s250 + $0x71] sm:$0x1] %v319
        %336 = vst [vmem:[%s250 + $0x89] sm:$0x1] %v320
        %337 = vst [vmem:[%s250 + $0xa1] sm:$0x1] %v321
        %338 = vst [vmem:[%s250 + $0xb9] sm:$0x1] %v322
        %339 = vst [vmem:[%s250 + $0xd1] sm:$0x1] %v323
        %340 = vst [vmem:[%s250 + $0xe9] sm:$0x1] %v324
        %341 = vst [vmem:[%s250 + $0x101] sm:$0x1] %v325
        %342 = vst [vmem:[%s250 + $0x119] sm:$0x1] %v326
        %343 = vst [vmem:[%s250 + $0x131] sm:$0x1] %v327
        %344 = vst [vmem:[%s250 + $0x149] sm:$0x1] %v328
        %345 = vst [vmem:[%s250 + $0x161] sm:$0x1] %v329
        %346 = vst [vmem:[%s250 + $0x179] sm:$0x1] %v330
        %s347 = scalar_lea.vmem [#allocation2], 48
        %v348 = vld [vmem:[%s347] sm:$0xff]
        %v349 = vld [vmem:[%s347 + $0x8] sm:$0xff]
        %v350 = vld [vmem:[%s347 + $0x10] sm:$0x3]
        %351 = vst [vmem:[#allocation2] sm:$0xff] %v348
        %352 = vst [vmem:[#allocation2 + $0x8] sm:$0xff] %v349
        %353 = vst [vmem:[#allocation2 + $0x10] sm:$0x3] %v350
        %s354 = scalar_lea.vmem [#allocation2], 360
        %v355 = vld [vmem:[%s354] sm:$0xff]
        %v356 = vld [vmem:[%s354 + $0x8] sm:$0xff]
        %v357 = vld [vmem:[%s354 + $0x10] sm:$0x3]
        %s358 = scalar_lea.vmem [#allocation2], 408
        %359 = vst [vmem:[%s358] sm:$0xff] %v355
        %360 = vst [vmem:[%s358 + $0x8] sm:$0xff] %v356
        %361 = vst [vmem:[%s358 + $0x10] sm:$0x3] %v357
        %v362 = vld [vmem:[#allocation2] sm:$0xff]
        %v363 = vld [vmem:[#allocation2 + $0x8] sm:$0xff]
        %v364 = vld [vmem:[#allocation2 + $0x10] sm:$0x3]
        %v365 = vld [vmem:[#allocation2 + $0x18] sm:$0xff]
        %v366 = vld [vmem:[#allocation2 + $0x20] sm:$0xff]
        %v367 = vld [vmem:[#allocation2 + $0x28] sm:$0x3]
        %v368 = vld [vmem:[#allocation2 + $0x30] sm:$0xff]
        %v369 = vld [vmem:[#allocation2 + $0x38] sm:$0xff]
        %v370 = vld [vmem:[#allocation2 + $0x40] sm:$0x3]
        %v371 = vld [vmem:[#allocation2 + $0x48] sm:$0xff]
        %v372 = vld [vmem:[#allocation2 + $0x50] sm:$0xff]
        %v373 = vld [vmem:[#allocation2 + $0x58] sm:$0x3]
        %v374 = vld [vmem:[#allocation2 + $0x60] sm:$0xff]
        %v375 = vld [vmem:[#allocation2 + $0x68] sm:$0xff]
        %v376 = vld [vmem:[#allocation2 + $0x70] sm:$0x3]
        %v377 = vld [vmem:[#allocation2 + $0x78] sm:$0xff]
        %v378 = vld [vmem:[#allocation2 + $0x80] sm:$0xff]
        %v379 = vld [vmem:[#allocation2 + $0x88] sm:$0x3]
        %v380 = vld [vmem:[#allocation2 + $0x90] sm:$0xff]
        %v381 = vld [vmem:[#allocation2 + $0x98] sm:$0xff]
        %v382 = vld [vmem:[#allocation2 + $0xa0] sm:$0x3]
        %v383 = vld [vmem:[#allocation2 + $0xa8] sm:$0xff]
        %v384 = vld [vmem:[#allocation2 + $0xb0] sm:$0xff]
        %v385 = vld [vmem:[#allocation2 + $0xb8] sm:$0x3]
        %v386 = vld [vmem:[#allocation2 + $0xc0] sm:$0xff]
        %v387 = vld [vmem:[#allocation2 + $0xc8] sm:$0xff]
        %v388 = vld [vmem:[#allocation2 + $0xd0] sm:$0x3]
        %v389 = vld [vmem:[#allocation2 + $0xd8] sm:$0xff]
        %v390 = vld [vmem:[#allocation2 + $0xe0] sm:$0xff]
        %v391 = vld [vmem:[#allocation2 + $0xe8] sm:$0x3]
        %v392 = vld [vmem:[#allocation2 + $0xf0] sm:$0xff]
        %v393 = vld [vmem:[#allocation2 + $0xf8] sm:$0xff]
        %v394 = vld [vmem:[#allocation2 + $0x100] sm:$0x3]
        %v395 = vld [vmem:[#allocation2 + $0x108] sm:$0xff]
        %v396 = vld [vmem:[#allocation2 + $0x110] sm:$0xff]
        %v397 = vld [vmem:[#allocation2 + $0x118] sm:$0x3]
        %v398 = vld [vmem:[#allocation2 + $0x120] sm:$0xff]
        %v399 = vld [vmem:[#allocation2 + $0x128] sm:$0xff]
        %v400 = vld [vmem:[#allocation2 + $0x130] sm:$0x3]
        %v401 = vld [vmem:[#allocation2 + $0x138] sm:$0xff]
        %v402 = vld [vmem:[#allocation2 + $0x140] sm:$0xff]
        %v403 = vld [vmem:[#allocation2 + $0x148] sm:$0x3]
        %v404 = vld [vmem:[#allocation2 + $0x150] sm:$0xff]
        %v405 = vld [vmem:[#allocation2 + $0x158] sm:$0xff]
        %v406 = vld [vmem:[#allocation2 + $0x160] sm:$0x3]
        %v407 = vld [vmem:[#allocation2 + $0x168] sm:$0xff]
        %v408 = vld [vmem:[#allocation2 + $0x170] sm:$0xff]
        %v409 = vld [vmem:[#allocation2 + $0x178] sm:$0x3]
        %v410 = vld [vmem:[#allocation2 + $0x180] sm:$0xff]
        %v411 = vld [vmem:[#allocation2 + $0x188] sm:$0xff]
        %v412 = vld [vmem:[#allocation2 + $0x190] sm:$0x3]
        %v413 = vld [vmem:[#allocation2 + $0x198] sm:$0xff]
        %v414 = vld [vmem:[#allocation2 + $0x1a0] sm:$0xff]
        %v415 = vld [vmem:[#allocation2 + $0x1a8] sm:$0x3]
        %vm470 = vcmask 1046528
        %v471 = vrot.slane %v362, 1
        %v472 = vrot.slane %v363, 1
        %v473 = vsel %vm470, %v471, %v472
        %v474 = vrot.slane %v364, 1
        %v475 = vsel %vm470, %v472, %v474
        %v476 = vrot.slane %v365, 1
        %v477 = vrot.slane %v366, 1
        %v478 = vsel %vm470, %v476, %v477
        %v479 = vrot.slane %v367, 1
        %v480 = vsel %vm470, %v477, %v479
        %v481 = vrot.slane %v368, 1
        %v482 = vrot.slane %v369, 1
        %v483 = vsel %vm470, %v481, %v482
        %v484 = vrot.slane %v370, 1
        %v485 = vsel %vm470, %v482, %v484
        %v486 = vrot.slane %v371, 1
        %v487 = vrot.slane %v372, 1
        %v488 = vsel %vm470, %v486, %v487
        %v489 = vrot.slane %v373, 1
        %v490 = vsel %vm470, %v487, %v489
        %v491 = vrot.slane %v374, 1
        %v492 = vrot.slane %v375, 1
        %v493 = vsel %vm470, %v491, %v492
        %v494 = vrot.slane %v376, 1
        %v495 = vsel %vm470, %v492, %v494
        %v496 = vrot.slane %v377, 1
        %v497 = vrot.slane %v378, 1
        %v498 = vsel %vm470, %v496, %v497
        %v499 = vrot.slane %v379, 1
        %v500 = vsel %vm470, %v497, %v499
        %v501 = vrot.slane %v380, 1
        %v502 = vrot.slane %v381, 1
        %v503 = vsel %vm470, %v501, %v502
        %v504 = vrot.slane %v382, 1
        %v505 = vsel %vm470, %v502, %v504
        %v506 = vrot.slane %v383, 1
        %v507 = vrot.slane %v384, 1
        %v508 = vsel %vm470, %v506, %v507
        %v509 = vrot.slane %v385, 1
        %v510 = vsel %vm470, %v507, %v509
        %v511 = vrot.slane %v386, 1
        %v512 = vrot.slane %v387, 1
        %v513 = vsel %vm470, %v511, %v512
        %v514 = vrot.slane %v388, 1
        %v515 = vsel %vm470, %v512, %v514
        %v516 = vrot.slane %v389, 1
        %v517 = vrot.slane %v390, 1
        %v518 = vsel %vm470, %v516, %v517
        %v519 = vrot.slane %v391, 1
        %v520 = vsel %vm470, %v517, %v519
        %v521 = vrot.slane %v392, 1
        %v522 = vrot.slane %v393, 1
        %v523 = vsel %vm470, %v521, %v522
        %v524 = vrot.slane %v394, 1
        %v525 = vsel %vm470, %v522, %v524
        %v526 = vrot.slane %v395, 1
        %v527 = vrot.slane %v396, 1
        %v528 = vsel %vm470, %v526, %v527
        %v529 = vrot.slane %v397, 1
        %v530 = vsel %vm470, %v527, %v529
        %v531 = vrot.slane %v398, 1
        %v532 = vrot.slane %v399, 1
        %v533 = vsel %vm470, %v531, %v532
        %v534 = vrot.slane %v400, 1
        %v535 = vsel %vm470, %v532, %v534
        %v536 = vrot.slane %v401, 1
        %v537 = vrot.slane %v402, 1
        %v538 = vsel %vm470, %v536, %v537
        %v539 = vrot.slane %v403, 1
        %v540 = vsel %vm470, %v537, %v539
        %v541 = vrot.slane %v404, 1
        %v542 = vrot.slane %v405, 1
        %v543 = vsel %vm470, %v541, %v542
        %v544 = vrot.slane %v406, 1
        %v545 = vsel %vm470, %v542, %v544
        %v546 = vrot.slane %v407, 1
        %v547 = vrot.slane %v408, 1
        %v548 = vsel %vm470, %v546, %v547
        %v549 = vrot.slane %v409, 1
        %v550 = vsel %vm470, %v547, %v549
        %v551 = vrot.slane %v410, 1
        %v552 = vrot.slane %v411, 1
        %v553 = vsel %vm470, %v551, %v552
        %v554 = vrot.slane %v412, 1
        %v555 = vsel %vm470, %v552, %v554
        %v556 = vrot.slane %v413, 1
        %v557 = vrot.slane %v414, 1
        %v558 = vsel %vm470, %v556, %v557
        %v559 = vrot.slane %v415, 1
        %v560 = vsel %vm470, %v557, %v559
        %vm597 = vcmask 1045504
        %v598 = vrot.slane %v362, 2
        %v599 = vrot.slane %v363, 2
        %v600 = vsel %vm597, %v598, %v599
        %v601 = vrot.slane %v364, 2
        %v602 = vsel %vm597, %v599, %v601
        %v603 = vrot.slane %v365, 2
        %v604 = vrot.slane %v366, 2
        %v605 = vsel %vm597, %v603, %v604
        %v606 = vrot.slane %v367, 2
        %v607 = vsel %vm597, %v604, %v606
        %v608 = vrot.slane %v368, 2
        %v609 = vrot.slane %v369, 2
        %v610 = vsel %vm597, %v608, %v609
        %v611 = vrot.slane %v370, 2
        %v612 = vsel %vm597, %v609, %v611
        %v613 = vrot.slane %v371, 2
        %v614 = vrot.slane %v372, 2
        %v615 = vsel %vm597, %v613, %v614
        %v616 = vrot.slane %v373, 2
        %v617 = vsel %vm597, %v614, %v616
        %v618 = vrot.slane %v374, 2
        %v619 = vrot.slane %v375, 2
        %v620 = vsel %vm597, %v618, %v619
        %v621 = vrot.slane %v376, 2
        %v622 = vsel %vm597, %v619, %v621
        %v623 = vrot.slane %v377, 2
        %v624 = vrot.slane %v378, 2
        %v625 = vsel %vm597, %v623, %v624
        %v626 = vrot.slane %v379, 2
        %v627 = vsel %vm597, %v624, %v626
        %v628 = vrot.slane %v380, 2
        %v629 = vrot.slane %v381, 2
        %v630 = vsel %vm597, %v628, %v629
        %v631 = vrot.slane %v382, 2
        %v632 = vsel %vm597, %v629, %v631
        %v633 = vrot.slane %v383, 2
        %v634 = vrot.slane %v384, 2
        %v635 = vsel %vm597, %v633, %v634
        %v636 = vrot.slane %v385, 2
        %v637 = vsel %vm597, %v634, %v636
        %v638 = vrot.slane %v386, 2
        %v639 = vrot.slane %v387, 2
        %v640 = vsel %vm597, %v638, %v639
        %v641 = vrot.slane %v388, 2
        %v642 = vsel %vm597, %v639, %v641
        %v643 = vrot.slane %v389, 2
        %v644 = vrot.slane %v390, 2
        %v645 = vsel %vm597, %v643, %v644
        %v646 = vrot.slane %v391, 2
        %v647 = vsel %vm597, %v644, %v646
        %v648 = vrot.slane %v392, 2
        %v649 = vrot.slane %v393, 2
        %v650 = vsel %vm597, %v648, %v649
        %v651 = vrot.slane %v394, 2
        %v652 = vsel %vm597, %v649, %v651
        %v653 = vrot.slane %v395, 2
        %v654 = vrot.slane %v396, 2
        %v655 = vsel %vm597, %v653, %v654
        %v656 = vrot.slane %v397, 2
        %v657 = vsel %vm597, %v654, %v656
        %v658 = vrot.slane %v398, 2
        %v659 = vrot.slane %v399, 2
        %v660 = vsel %vm597, %v658, %v659
        %v661 = vrot.slane %v400, 2
        %v662 = vsel %vm597, %v659, %v661
        %v663 = vrot.slane %v401, 2
        %v664 = vrot.slane %v402, 2
        %v665 = vsel %vm597, %v663, %v664
        %v666 = vrot.slane %v403, 2
        %v667 = vsel %vm597, %v664, %v666
        %v668 = vrot.slane %v404, 2
        %v669 = vrot.slane %v405, 2
        %v670 = vsel %vm597, %v668, %v669
        %v671 = vrot.slane %v406, 2
        %v672 = vsel %vm597, %v669, %v671
        %v673 = vrot.slane %v407, 2
        %v674 = vrot.slane %v408, 2
        %v675 = vsel %vm597, %v673, %v674
        %v676 = vrot.slane %v409, 2
        %v677 = vsel %vm597, %v674, %v676
        %v678 = vrot.slane %v410, 2
        %v679 = vrot.slane %v411, 2
        %v680 = vsel %vm597, %v678, %v679
        %v681 = vrot.slane %v412, 2
        %v682 = vsel %vm597, %v679, %v681
        %v683 = vrot.slane %v413, 2
        %v684 = vrot.slane %v414, 2
        %v685 = vsel %vm597, %v683, %v684
        %v686 = vrot.slane %v415, 2
        %v687 = vsel %vm597, %v684, %v686
        %v724 = vld [vmem:[#allocation7] sm:$0xff]
        %v725 = vld [vmem:[#allocation7 + $0x8] sm:$0xff]
        %v726 = vld [vmem:[#allocation7 + $0x10] sm:$0xff]
        %v727 = vld [vmem:[#allocation7 + $0x18] sm:$0xff]
        %v728 = vld [vmem:[#allocation7 + $0x20] sm:$0xff]
        %v729 = vld [vmem:[#allocation7 + $0x28] sm:$0xff]
        %v730 = vld [vmem:[#allocation7 + $0x30] sm:$0xff]
        %v731 = vld [vmem:[#allocation7 + $0x38] sm:$0xff]
        %v732 = vld [vmem:[#allocation7 + $0x40] sm:$0xff]
        %v733 = vld [vmem:[#allocation7 + $0x48] sm:$0xff]
        %v734 = vld [vmem:[#allocation7 + $0x50] sm:$0xff]
        %v735 = vld [vmem:[#allocation7 + $0x58] sm:$0xff]
        %v736 = vld [vmem:[#allocation7 + $0x60] sm:$0xff]
        %v737 = vld [vmem:[#allocation7 + $0x68] sm:$0xff]
        %v738 = vld [vmem:[#allocation7 + $0x70] sm:$0xff]
        %v739 = vld [vmem:[#allocation7 + $0x78] sm:$0xff]
        %v740 = vld [vmem:[#allocation7 + $0x80] sm:$0xff]
        %v741 = vld [vmem:[#allocation7 + $0x88] sm:$0xff]
        %v742 = vld [vmem:[#allocation7 + $0x90] sm:$0xff]
        %v743 = vld [vmem:[#allocation7 + $0x98] sm:$0xff]
        %v744 = vld [vmem:[#allocation7 + $0xa0] sm:$0xff]
        %v745 = vld [vmem:[#allocation7 + $0xa8] sm:$0xff]
        %v746 = vld [vmem:[#allocation7 + $0xb0] sm:$0xff]
        %v747 = vld [vmem:[#allocation7 + $0xb8] sm:$0xff]
        %v748 = vld [vmem:[#allocation7 + $0xc0] sm:$0xff]
        %v749 = vld [vmem:[#allocation7 + $0xc8] sm:$0xff]
        %v750 = vld [vmem:[#allocation7 + $0xd0] sm:$0xff]
        %v751 = vld [vmem:[#allocation7 + $0xd8] sm:$0xff]
        %v752 = vld [vmem:[#allocation7 + $0xe0] sm:$0xff]
        %v753 = vld [vmem:[#allocation7 + $0xe8] sm:$0xff]
        %v754 = vld [vmem:[#allocation7 + $0xf0] sm:$0xff]
        %v755 = vld [vmem:[#allocation7 + $0xf8] sm:$0xff]
        %v756 = vld [vmem:[#allocation7 + $0x100] sm:$0xff]
        %v757 = vld [vmem:[#allocation7 + $0x108] sm:$0xff]
        %v758 = vld [vmem:[#allocation7 + $0x110] sm:$0xff]
        %v759 = vld [vmem:[#allocation7 + $0x118] sm:$0xff]
        %v760 = vld [vmem:[#allocation7 + $0x120] sm:$0xff]
        %v761 = vld [vmem:[#allocation7 + $0x128] sm:$0xff]
        %v762 = vld [vmem:[#allocation7 + $0x130] sm:$0xff]
        %v763 = vld [vmem:[#allocation7 + $0x138] sm:$0xff]
        %v764 = vld [vmem:[#allocation7 + $0x140] sm:$0xff]
        %v765 = vld [vmem:[#allocation7 + $0x148] sm:$0xff]
        %v766 = vld [vmem:[#allocation7 + $0x150] sm:$0xff]
        %v767 = vld [vmem:[#allocation7 + $0x158] sm:$0xff]
        %v768 = vld [vmem:[#allocation7 + $0x160] sm:$0xff]
        %v769 = vld [vmem:[#allocation7 + $0x168] sm:$0xff]
        %v770 = vld [vmem:[#allocation7 + $0x170] sm:$0xff]
        %v771 = vld [vmem:[#allocation7 + $0x178] sm:$0xff]
        %v772 = vld [vmem:[#allocation7 + $0x180] sm:$0xff]
        %v773 = vld [vmem:[#allocation7 + $0x188] sm:$0xff]
        %v774 = vld [vmem:[#allocation7 + $0x190] sm:$0xff]
        %v775 = vld [vmem:[#allocation7 + $0x198] sm:$0xff]
        %v776 = vld [vmem:[#allocation7 + $0x1a0] sm:$0xff]
        %v777 = vld [vmem:[#allocation7 + $0x1a8] sm:$0xff]
        %v778 = vld [vmem:[#allocation7 + $0x1b0] sm:$0xff]
        %v779 = vld [vmem:[#allocation7 + $0x1b8] sm:$0xff]
        %v780 = vld [vmem:[#allocation7 + $0x1c0] sm:$0xff]
        %v781 = vld [vmem:[#allocation7 + $0x1c8] sm:$0xff]
        %v782 = vld [vmem:[#allocation7 + $0x1d0] sm:$0xff]
        %v783 = vld [vmem:[#allocation7 + $0x1d8] sm:$0xff]
        %v784 = vld [vmem:[#allocation7 + $0x1e0] sm:$0xff]
        %v785 = vld [vmem:[#allocation7 + $0x1e8] sm:$0xff]
        %v786 = vld [vmem:[#allocation7 + $0x1f0] sm:$0xff]
        %v787 = vld [vmem:[#allocation7 + $0x1f8] sm:$0xff]
        %v788 = vld [vmem:[#allocation7 + $0x200] sm:$0xff]
        %v789 = vld [vmem:[#allocation7 + $0x208] sm:$0xff]
        %v790 = vld [vmem:[#allocation7 + $0x210] sm:$0xff]
        %v791 = vld [vmem:[#allocation7 + $0x218] sm:$0xff]
        %v792 = vld [vmem:[#allocation7 + $0x220] sm:$0xff]
        %v793 = vld [vmem:[#allocation7 + $0x228] sm:$0xff]
        %v794 = vld [vmem:[#allocation7 + $0x230] sm:$0xff]
        %v795 = vld [vmem:[#allocation7 + $0x238] sm:$0xff]
        %v796 = vld [vmem:[#allocation7 + $0x240] sm:$0xff]
        %v797 = vld [vmem:[#allocation7 + $0x248] sm:$0xff]
        %v798 = vld [vmem:[#allocation7 + $0x250] sm:$0xff]
        %v799 = vld [vmem:[#allocation7 + $0x258] sm:$0xff]
        %v800 = vld [vmem:[#allocation7 + $0x260] sm:$0xff]
        %v801 = vld [vmem:[#allocation7 + $0x268] sm:$0xff]
        %v802 = vld [vmem:[#allocation7 + $0x270] sm:$0xff]
        %v803 = vld [vmem:[#allocation7 + $0x278] sm:$0xff]
        %v804 = vld [vmem:[#allocation7 + $0x280] sm:$0xff]
        %v805 = vld [vmem:[#allocation7 + $0x288] sm:$0xff]
        %v806 = vld [vmem:[#allocation7 + $0x290] sm:$0xff]
        %v807 = vld [vmem:[#allocation7 + $0x298] sm:$0xff]
        %v808 = vld [vmem:[#allocation7 + $0x2a0] sm:$0xff]
        %v809 = vld [vmem:[#allocation7 + $0x2a8] sm:$0xff]
        %v810 = vld [vmem:[#allocation7 + $0x2b0] sm:$0xff]
        %v811 = vld [vmem:[#allocation7 + $0x2b8] sm:$0xff]
        %v812 = vld [vmem:[#allocation7 + $0x2c0] sm:$0xff]
        %v813 = vld [vmem:[#allocation7 + $0x2c8] sm:$0xff]
        %v814 = vld [vmem:[#allocation7 + $0x2d0] sm:$0xff]
        %v815 = vld [vmem:[#allocation7 + $0x2d8] sm:$0xff]
        %v816 = vld [vmem:[#allocation7 + $0x2e0] sm:$0xff]
        %v817 = vld [vmem:[#allocation7 + $0x2e8] sm:$0xff]
        %v818 = vld [vmem:[#allocation7 + $0x2f0] sm:$0xff]
        %v819 = vld [vmem:[#allocation7 + $0x2f8] sm:$0xff]
        %v820 = vld [vmem:[#allocation7 + $0x300] sm:$0xff]
        %v821 = vld [vmem:[#allocation7 + $0x308] sm:$0xff]
        %v822 = vld [vmem:[#allocation7 + $0x310] sm:$0xff]
        %v823 = vld [vmem:[#allocation7 + $0x318] sm:$0xff]
        %v824 = vld [vmem:[#allocation7 + $0x320] sm:$0xff]
        %v825 = vld [vmem:[#allocation7 + $0x328] sm:$0xff]
        %v826 = vld [vmem:[#allocation7 + $0x330] sm:$0xff]
        %v827 = vld [vmem:[#allocation7 + $0x338] sm:$0xff]
        %v828 = vld [vmem:[#allocation7 + $0x340] sm:$0xff]
        %v829 = vld [vmem:[#allocation7 + $0x348] sm:$0xff]
        %v830 = vld [vmem:[#allocation7 + $0x350] sm:$0xff]
        %v831 = vld [vmem:[#allocation7 + $0x358] sm:$0xff]
        %v832 = vld [vmem:[#allocation7 + $0x360] sm:$0xff]
        %v833 = vld [vmem:[#allocation7 + $0x368] sm:$0xff]
        %v834 = vld [vmem:[#allocation7 + $0x370] sm:$0xff]
        %v835 = vld [vmem:[#allocation7 + $0x378] sm:$0xff]
        %v836 = vld [vmem:[#allocation7 + $0x380] sm:$0xff]
        %v837 = vld [vmem:[#allocation7 + $0x388] sm:$0xff]
        %v838 = vld [vmem:[#allocation7 + $0x390] sm:$0xff]
        %v839 = vld [vmem:[#allocation7 + $0x398] sm:$0xff]
        %v840 = vld [vmem:[#allocation7 + $0x3a0] sm:$0xff]
        %v841 = vld [vmem:[#allocation7 + $0x3a8] sm:$0xff]
        %v842 = vld [vmem:[#allocation7 + $0x3b0] sm:$0xff]
        %v843 = vld [vmem:[#allocation7 + $0x3b8] sm:$0xff]
        %v844 = vld [vmem:[#allocation7 + $0x3c0] sm:$0xff]
        %v845 = vld [vmem:[#allocation7 + $0x3c8] sm:$0xff]
        %v846 = vld [vmem:[#allocation7 + $0x3d0] sm:$0xff]
        %v847 = vld [vmem:[#allocation7 + $0x3d8] sm:$0xff]
        %v848 = vld [vmem:[#allocation7 + $0x3e0] sm:$0xff]
        %v849 = vld [vmem:[#allocation7 + $0x3e8] sm:$0xff]
        %v850 = vld [vmem:[#allocation7 + $0x3f0] sm:$0xff]
        %v851 = vld [vmem:[#allocation7 + $0x3f8] sm:$0xff]
        %v852 = vld [vmem:[#allocation7 + $0x400] sm:$0xff]
        %v853 = vld [vmem:[#allocation7 + $0x408] sm:$0xff]
        %v854 = vld [vmem:[#allocation7 + $0x410] sm:$0xff]
        %v855 = vld [vmem:[#allocation7 + $0x418] sm:$0xff]
        %v856 = vld [vmem:[#allocation7 + $0x420] sm:$0xff]
        %v857 = vld [vmem:[#allocation7 + $0x428] sm:$0xff]
        %v858 = vld [vmem:[#allocation7 + $0x430] sm:$0xff]
        %v859 = vld [vmem:[#allocation7 + $0x438] sm:$0xff]
        %v860 = vld [vmem:[#allocation7 + $0x440] sm:$0xff]
        %v861 = vld [vmem:[#allocation7 + $0x448] sm:$0xff]
        %v862 = vld [vmem:[#allocation7 + $0x450] sm:$0xff]
        %v863 = vld [vmem:[#allocation7 + $0x458] sm:$0xff]
        %v864 = vld [vmem:[#allocation7 + $0x460] sm:$0xff]
        %v865 = vld [vmem:[#allocation7 + $0x468] sm:$0xff]
        %v866 = vld [vmem:[#allocation7 + $0x470] sm:$0xff]
        %v867 = vld [vmem:[#allocation7 + $0x478] sm:$0xff]
        %868 = vmatprep.subr.mxu0 0.0
        %869 = vmatpush1.msra.mxu0 %v724
        %870 = vmatprep.subr.mxu0 0.0
        %871 = vmatpush1.msra.mxu0 %v725
        %872 = vmatprep.subr.mxu0 0.0
        %873 = vmatpush1.msra.mxu0 %v726
        %874 = vmatprep.subr.mxu0 0.0
        %875 = vmatpush1.msra.mxu0 %v727
        %876 = vmatprep.subr.mxu0 0.0
        %877 = vmatpush1.msra.mxu0 %v728
        %878 = vmatprep.subr.mxu0 0.0
        %879 = vmatpush1.msra.mxu0 %v729
        %880 = vmatprep.subr.mxu0 0.0
        %881 = vmatpush1.msra.mxu0 %v730
        %882 = vmatprep.subr.mxu0 0.0
        %883 = vmatpush1.msra.mxu0 %v731
        %884 = vmatprep.subr.mxu0 0.0
        %885 = vmatpush1.msra.mxu0 %v732
        %886 = vmatprep.subr.mxu0 0.0
        %887 = vmatpush1.msra.mxu0 %v733
        %888 = vmatprep.subr.mxu0 0.0
        %889 = vmatpush1.msra.mxu0 %v734
        %890 = vmatprep.subr.mxu0 0.0
        %891 = vmatpush1.msra.mxu0 %v735
        %892 = vmatprep.subr.mxu0 0.0
        %893 = vmatpush1.msra.mxu0 %v736
        %894 = vmatprep.subr.mxu0 0.0
        %895 = vmatpush1.msra.mxu0 %v737
        %896 = vmatprep.subr.mxu0 0.0
        %897 = vmatpush1.msra.mxu0 %v738
        %898 = vmatprep.subr.mxu0 0.0
        %899 = vmatpush1.msra.mxu0 %v739
        %900 = vmatprep.subr.mxu0 0.0
        %901 = vmatpush1.msra.mxu0 %v740
        %902 = vmatprep.subr.mxu0 0.0
        %903 = vmatpush1.msra.mxu0 %v741
        %904 = vmatprep.subr.mxu0 0.0
        %905 = vmatpush1.msra.mxu0 %v742
        %906 = vmatprep.subr.mxu0 0.0
        %907 = vmatpush1.msra.mxu0 %v743
        %908 = vmatprep.subr.mxu0 0.0
        %909 = vmatpush1.msra.mxu0 %v744
        %910 = vmatprep.subr.mxu0 0.0
        %911 = vmatpush1.msra.mxu0 %v745
        %912 = vmatprep.subr.mxu0 0.0
        %913 = vmatpush1.msra.mxu0 %v746
        %914 = vmatprep.subr.mxu0 0.0
        %915 = vmatpush1.msra.mxu0 %v747
        %916 = vmatprep.subr.mxu0 0.0
        %917 = vmatpush1.msra.mxu0 %v748
        %918 = vmatprep.subr.mxu0 0.0
        %919 = vmatpush1.msra.mxu0 %v749
        %920 = vmatprep.subr.mxu0 0.0
        %921 = vmatpush1.msra.mxu0 %v750
        %922 = vmatprep.subr.mxu0 0.0
        %923 = vmatpush1.msra.mxu0 %v751
        %924 = vmatprep.subr.mxu0 0.0
        %925 = vmatpush1.msra.mxu0 %v752
        %926 = vmatprep.subr.mxu0 0.0
        %927 = vmatpush1.msra.mxu0 %v753
        %928 = vmatprep.subr.mxu0 0.0
        %929 = vmatpush1.msra.mxu0 %v754
        %930 = vmatprep.subr.mxu0 0.0
        %931 = vmatpush1.msra.mxu0 %v755
        %932 = vmatprep.mubr.f32.mxu0 %v473
        %933 = vmatmul.mubr.f32.gmra.mrb[0].mxu0 %v362
        %v934 = vpop.f32.mrb[0].mxu0
        %v935 = vadd.f32 0.0, %v934
        %v936 = vpop.f32.mrb[0].mxu0
        %937 = vmatprep.mubr.f32.mxu0 %v475
        %938 = vmatmul.mubr.f32.gmra.mrb[0].mxu0 %v363
        %v939 = vpop.f32.mrb[0].mxu0
        %v940 = vadd.f32 0.0, %v939
        %v941 = vpop.f32.mrb[0].mxu0
        %942 = vmatprep.mubr.f32.mxu0 %v478
        %943 = vmatmul.mubr.f32.gmra.mrb[0].mxu0 %v365
        %v944 = vpop.f32.mrb[0].mxu0
        %v945 = vadd.f32 0.0, %v944
        %v946 = vpop.f32.mrb[0].mxu0
        %947 = vmatprep.mubr.f32.mxu0 %v480
        %948 = vmatmul.mubr.f32.gmra.mrb[0].mxu0 %v366
        %v949 = vpop.f32.mrb[0].mxu0
        %v950 = vadd.f32 0.0, %v949
        %v951 = vpop.f32.mrb[0].mxu0
        %952 = vmatprep.mubr.f32.mxu0 %v483
        %953 = vmatmul.mubr.f32.gmra.mrb[0].mxu0 %v368
        %v954 = vpop.f32.mrb[0].mxu0
        %v955 = vadd.f32 0.0, %v954
        %v956 = vpop.f32.mrb[0].mxu0
        %957 = vmatprep.mubr.f32.mxu0 %v485
        %958 = vmatmul.mubr.f32.gmra.mrb[0].mxu0 %v369
        %v959 = vpop.f32.mrb[0].mxu0
        %v960 = vadd.f32 0.0, %v959
        %v961 = vpop.f32.mrb[0].mxu0
        %962 = vmatprep.mubr.f32.mxu0 %v488
        %963 = vmatmul.mubr.f32.gmra.mrb[0].mxu0 %v371
        %v964 = vpop.f32.mrb[0].mxu0
        %v965 = vadd.f32 0.0, %v964
        %v966 = vpop.f32.mrb[0].mxu0
        %967 = vmatprep.mubr.f32.mxu0 %v490
        %968 = vmatmul.mubr.f32.gmra.mrb[0].mxu0 %v372
        %v969 = vpop.f32.mrb[0].mxu0
        %v970 = vadd.f32 0.0, %v969
        %v971 = vpop.f32.mrb[0].mxu0
        %972 = vmatprep.mubr.f32.mxu0 %v493
        %973 = vmatmul.mubr.f32.gmra.mrb[0].mxu0 %v374
        %v974 = vpop.f32.mrb[0].mxu0
        %v975 = vadd.f32 0.0, %v974
        %v976 = vpop.f32.mrb[0].mxu0
        %977 = vmatprep.mubr.f32.mxu0 %v495
        %978 = vmatmul.mubr.f32.gmra.mrb[0].mxu0 %v375
        %v979 = vpop.f32.mrb[0].mxu0
        %v980 = vadd.f32 0.0, %v979
        %v981 = vpop.f32.mrb[0].mxu0
        %982 = vmatprep.mubr.f32.mxu0 %v498
        %983 = vmatmul.mubr.f32.gmra.mrb[0].mxu0 %v377
        %v984 = vpop.f32.mrb[0].mxu0
        %v985 = vadd.f32 0.0, %v984
        %v986 = vpop.f32.mrb[0].mxu0
        %987 = vmatprep.mubr.f32.mxu0 %v500
        %988 = vmatmul.mubr.f32.gmra.mrb[0].mxu0 %v378
        %v989 = vpop.f32.mrb[0].mxu0
        %v990 = vadd.f32 0.0, %v989
        %v991 = vpop.f32.mrb[0].mxu0
        %992 = vmatprep.mubr.f32.mxu0 %v503
        %993 = vmatmul.mubr.f32.gmra.mrb[0].mxu0 %v380
        %v994 = vpop.f32.mrb[0].mxu0
        %v995 = vadd.f32 0.0, %v994
        %v996 = vpop.f32.mrb[0].mxu0
        %997 = vmatprep.mubr.f32.mxu0 %v505
        %998 = vmatmul.mubr.f32.gmra.mrb[0].mxu0 %v381
        %v999 = vpop.f32.mrb[0].mxu0
        %v1000 = vadd.f32 0.0, %v999
        %v1001 = vpop.f32.mrb[0].mxu0
        %1002 = vmatprep.mubr.f32.mxu0 %v508
        %1003 = vmatmul.mubr.f32.gmra.mrb[0].mxu0 %v383
        %v1004 = vpop.f32.mrb[0].mxu0
        %v1005 = vadd.f32 0.0, %v1004
        %v1006 = vpop.f32.mrb[0].mxu0
        %1007 = vmatprep.mubr.f32.mxu0 %v510
        %1008 = vmatmul.mubr.f32.gmra.mrb[0].mxu0 %v384
        %v1009 = vpop.f32.mrb[0].mxu0
        %v1010 = vadd.f32 0.0, %v1009
        %v1011 = vpop.f32.mrb[0].mxu0
        %1012 = vmatprep.mubr.f32.mxu0 %v513
        %1013 = vmatmul.mubr.f32.gmra.mrb[0].mxu0 %v386
        %v1014 = vpop.f32.mrb[0].mxu0
        %v1015 = vadd.f32 0.0, %v1014
        %v1016 = vpop.f32.mrb[0].mxu0
        %1017 = vmatprep.mubr.f32.mxu0 %v515
        %1018 = vmatmul.mubr.f32.gmra.mrb[0].mxu0 %v387
        %v1019 = vpop.f32.mrb[0].mxu0
        %v1020 = vadd.f32 0.0, %v1019
        %v1021 = vpop.f32.mrb[0].mxu0
        %1022 = vmatprep.mubr.f32.mxu0 %v518
        %1023 = vmatmul.mubr.f32.gmra.mrb[0].mxu0 %v389
        %v1024 = vpop.f32.mrb[0].mxu0
        %v1025 = vadd.f32 0.0, %v1024
        %v1026 = vpop.f32.mrb[0].mxu0
        %1027 = vmatprep.mubr.f32.mxu0 %v520
        %1028 = vmatmul.mubr.f32.gmra.mrb[0].mxu0 %v390
        %v1029 = vpop.f32.mrb[0].mxu0
        %v1030 = vadd.f32 0.0, %v1029
        %v1031 = vpop.f32.mrb[0].mxu0
        %1032 = vmatprep.mubr.f32.mxu0 %v523
        %1033 = vmatmul.mubr.f32.gmra.mrb[0].mxu0 %v392
        %v1034 = vpop.f32.mrb[0].mxu0
        %v1035 = vadd.f32 0.0, %v1034
        %v1036 = vpop.f32.mrb[0].mxu0
        %1037 = vmatprep.mubr.f32.mxu0 %v525
        %1038 = vmatmul.mubr.f32.gmra.mrb[0].mxu0 %v393
        %v1039 = vpop.f32.mrb[0].mxu0
        %v1040 = vadd.f32 0.0, %v1039
        %v1041 = vpop.f32.mrb[0].mxu0
        %1042 = vmatprep.mubr.f32.mxu0 %v528
        %1043 = vmatmul.mubr.f32.gmra.mrb[0].mxu0 %v395
        %v1044 = vpop.f32.mrb[0].mxu0
        %v1045 = vadd.f32 0.0, %v1044
        %v1046 = vpop.f32.mrb[0].mxu0
        %1047 = vmatprep.mubr.f32.mxu0 %v530
        %1048 = vmatmul.mubr.f32.gmra.mrb[0].mxu0 %v396
        %v1049 = vpop.f32.mrb[0].mxu0
        %v1050 = vadd.f32 0.0, %v1049
        %v1051 = vpop.f32.mrb[0].mxu0
        %1052 = vmatprep.mubr.f32.mxu0 %v533
        %1053 = vmatmul.mubr.f32.gmra.mrb[0].mxu0 %v398
        %v1054 = vpop.f32.mrb[0].mxu0
        %v1055 = vadd.f32 0.0, %v1054
        %v1056 = vpop.f32.mrb[0].mxu0
        %1057 = vmatprep.mubr.f32.mxu0 %v535
        %1058 = vmatmul.mubr.f32.gmra.mrb[0].mxu0 %v399
        %v1059 = vpop.f32.mrb[0].mxu0
        %v1060 = vadd.f32 0.0, %v1059
        %v1061 = vpop.f32.mrb[0].mxu0
        %1062 = vmatprep.mubr.f32.mxu0 %v538
        %1063 = vmatmul.mubr.f32.gmra.mrb[0].mxu0 %v401
        %v1064 = vpop.f32.mrb[0].mxu0
        %v1065 = vadd.f32 0.0, %v1064
        %v1066 = vpop.f32.mrb[0].mxu0
        %1067 = vmatprep.mubr.f32.mxu0 %v540
        %1068 = vmatmul.mubr.f32.gmra.mrb[0].mxu0 %v402
        %v1069 = vpop.f32.mrb[0].mxu0
        %v1070 = vadd.f32 0.0, %v1069
        %v1071 = vpop.f32.mrb[0].mxu0
        %1072 = vmatprep.mubr.f32.mxu0 %v543
        %1073 = vmatmul.mubr.f32.gmra.mrb[0].mxu0 %v404
        %v1074 = vpop.f32.mrb[0].mxu0
        %v1075 = vadd.f32 0.0, %v1074
        %v1076 = vpop.f32.mrb[0].mxu0
        %1077 = vmatprep.mubr.f32.mxu0 %v545
        %1078 = vmatmul.mubr.f32.gmra.mrb[0].mxu0 %v405
        %v1079 = vpop.f32.mrb[0].mxu0
        %v1080 = vadd.f32 0.0, %v1079
        %v1081 = vpop.f32.mrb[0].mxu0
        %1082 = vmatprep.mubr.f32.mxu0 %v548
        %1083 = vmatmul.mubr.f32.gmra.mrb[0].mxu0 %v407
        %v1084 = vpop.f32.mrb[0].mxu0
        %v1085 = vadd.f32 0.0, %v1084
        %v1086 = vpop.f32.mrb[0].mxu0
        %1087 = vmatprep.mubr.f32.mxu0 %v550
        %1088 = vmatmul.mubr.f32.gmra.mrb[0].mxu0 %v408
        %v1089 = vpop.f32.mrb[0].mxu0
        %v1090 = vadd.f32 0.0, %v1089
        %v1091 = vpop.f32.mrb[0].mxu0
        %1092 = vdwg.mxu0
        %1093 = vmatprep.subr.mxu0 0.0
        %1094 = vmatpush1.msra.mxu0 %v756
        %1095 = vmatprep.subr.mxu0 0.0
        %1096 = vmatpush1.msra.mxu0 %v757
        %1097 = vmatprep.subr.mxu0 0.0
        %1098 = vmatpush1.msra.mxu0 %v758
        %1099 = vmatprep.subr.mxu0 0.0
        %1100 = vmatpush1.msra.mxu0 %v759
        %1101 = vmatprep.subr.mxu0 0.0
        %1102 = vmatpush1.msra.mxu0 %v760
        %1103 = vmatprep.subr.mxu0 0.0
        %1104 = vmatpush1.msra.mxu0 %v761
        %1105 = vmatprep.subr.mxu0 0.0
        %1106 = vmatpush1.msra.mxu0 %v762
        %1107 = vmatprep.subr.mxu0 0.0
        %1108 = vmatpush1.msra.mxu0 %v763
        %1109 = vmatprep.subr.mxu0 0.0
        %1110 = vmatpush1.msra.mxu0 %v764
        %1111 = vmatprep.subr.mxu0 0.0
        %1112 = vmatpush1.msra.mxu0 %v765
        %1113 = vmatprep.subr.mxu0 0.0
        %1114 = vmatpush1.msra.mxu0 %v766
        %1115 = vmatprep.subr.mxu0 0.0
        %1116 = vmatpush1.msra.mxu0 %v767
        %1117 = vmatprep.subr.mxu0 0.0
        %1118 = vmatpush1.msra.mxu0 %v768
        %1119 = vmatprep.subr.mxu0 0.0
        %1120 = vmatpush1.msra.mxu0 %v769
        %1121 = vmatprep.subr.mxu0 0.0
        %1122 = vmatpush1.msra.mxu0 %v770
        %1123 = vmatprep.subr.mxu0 0.0
        %1124 = vmatpush1.msra.mxu0 %v771
        %1125 = vmatprep.subr.mxu0 0.0
        %1126 = vmatpush1.msra.mxu0 %v772
        %1127 = vmatprep.subr.mxu0 0.0
        %1128 = vmatpush1.msra.mxu0 %v773
        %1129 = vmatprep.subr.mxu0 0.0
        %1130 = vmatpush1.msra.mxu0 %v774
        %1131 = vmatprep.subr.mxu0 0.0
        %1132 = vmatpush1.msra.mxu0 %v775
        %1133 = vmatprep.subr.mxu0 0.0
        %1134 = vmatpush1.msra.mxu0 %v776
        %1135 = vmatprep.subr.mxu0 0.0
        %1136 = vmatpush1.msra.mxu0 %v777
        %1137 = vmatprep.subr.mxu0 0.0
        %1138 = vmatpush1.msra.mxu0 %v778
        %1139 = vmatprep.subr.mxu0 0.0
        %1140 = vmatpush1.msra.mxu0 %v779
        %1141 = vmatprep.subr.mxu0 0.0
        %1142 = vmatpush1.msra.mxu0 %v780
        %1143 = vmatprep.subr.mxu0 0.0
        %1144 = vmatpush1.msra.mxu0 %v781
        %1145 = vmatprep.subr.mxu0 0.0
        %1146 = vmatpush1.msra.mxu0 %v782
        %1147 = vmatprep.subr.mxu0 0.0
        %1148 = vmatpush1.msra.mxu0 %v783
        %1149 = vmatprep.subr.mxu0 0.0
        %1150 = vmatpush1.msra.mxu0 %v784
        %1151 = vmatprep.subr.mxu0 0.0
        %1152 = vmatpush1.msra.mxu0 %v785
        %1153 = vmatprep.subr.mxu0 0.0
        %1154 = vmatpush1.msra.mxu0 %v786
        %1155 = vmatprep.subr.mxu0 0.0
        %1156 = vmatpush1.msra.mxu0 %v787
        %1157 = vmatprep.mubr.f32.mxu0 %v365
        %1158 = vmatmul.mubr.f32.gmra.mrb[0].mxu0 %v600
        %v1159 = vpop.f32.mrb[0].mxu0
        %v1160 = vadd.f32 %v935, %v1159
        %v1161 = vpop.f32.mrb[0].mxu0
        %1162 = vmatprep.mubr.f32.mxu0 %v366
        %1163 = vmatmul.mubr.f32.gmra.mrb[0].mxu0 %v602
        %v1164 = vpop.f32.mrb[0].mxu0
        %v1165 = vadd.f32 %v940, %v1164
        %v1166 = vpop.f32.mrb[0].mxu0
        %1167 = vmatprep.mubr.f32.mxu0 %v368
        %1168 = vmatmul.mubr.f32.gmra.mrb[0].mxu0 %v605
        %v1169 = vpop.f32.mrb[0].mxu0
        %v1170 = vadd.f32 %v945, %v1169
        %v1171 = vpop.f32.mrb[0].mxu0
        %1172 = vmatprep.mubr.f32.mxu0 %v369
        %1173 = vmatmul.mubr.f32.gmra.mrb[0].mxu0 %v607
        %v1174 = vpop.f32.mrb[0].mxu0
        %v1175 = vadd.f32 %v950, %v1174
        %v1176 = vpop.f32.mrb[0].mxu0
        %1177 = vmatprep.mubr.f32.mxu0 %v371
        %1178 = vmatmul.mubr.f32.gmra.mrb[0].mxu0 %v610
        %v1179 = vpop.f32.mrb[0].mxu0
        %v1180 = vadd.f32 %v955, %v1179
        %v1181 = vpop.f32.mrb[0].mxu0
        %1182 = vmatprep.mubr.f32.mxu0 %v372
        %1183 = vmatmul.mubr.f32.gmra.mrb[0].mxu0 %v612
        %v1184 = vpop.f32.mrb[0].mxu0
        %v1185 = vadd.f32 %v960, %v1184
        %v1186 = vpop.f32.mrb[0].mxu0
        %1187 = vmatprep.mubr.f32.mxu0 %v374
        %1188 = vmatmul.mubr.f32.gmra.mrb[0].mxu0 %v615
        %v1189 = vpop.f32.mrb[0].mxu0
        %v1190 = vadd.f32 %v965, %v1189
        %v1191 = vpop.f32.mrb[0].mxu0
        %1192 = vmatprep.mubr.f32.mxu0 %v375
        %1193 = vmatmul.mubr.f32.gmra.mrb[0].mxu0 %v617
        %v1194 = vpop.f32.mrb[0].mxu0
        %v1195 = vadd.f32 %v970, %v1194
        %v1196 = vpop.f32.mrb[0].mxu0
        %1197 = vmatprep.mubr.f32.mxu0 %v377
        %1198 = vmatmul.mubr.f32.gmra.mrb[0].mxu0 %v620
        %v1199 = vpop.f32.mrb[0].mxu0
        %v1200 = vadd.f32 %v975, %v1199
        %v1201 = vpop.f32.mrb[0].mxu0
        %1202 = vmatprep.mubr.f32.mxu0 %v378
        %1203 = vmatmul.mubr.f32.gmra.mrb[0].mxu0 %v622
        %v1204 = vpop.f32.mrb[0].mxu0
        %v1205 = vadd.f32 %v980, %v1204
        %v1206 = vpop.f32.mrb[0].mxu0
        %1207 = vmatprep.mubr.f32.mxu0 %v380
        %1208 = vmatmul.mubr.f32.gmra.mrb[0].mxu0 %v625
        %v1209 = vpop.f32.mrb[0].mxu0
        %v1210 = vadd.f32 %v985, %v1209
        %v1211 = vpop.f32.mrb[0].mxu0
        %1212 = vmatprep.mubr.f32.mxu0 %v381
        %1213 = vmatmul.mubr.f32.gmra.mrb[0].mxu0 %v627
        %v1214 = vpop.f32.mrb[0].mxu0
        %v1215 = vadd.f32 %v990, %v1214
        %v1216 = vpop.f32.mrb[0].mxu0
        %1217 = vmatprep.mubr.f32.mxu0 %v383
        %1218 = vmatmul.mubr.f32.gmra.mrb[0].mxu0 %v630
        %v1219 = vpop.f32.mrb[0].mxu0
        %v1220 = vadd.f32 %v995, %v1219
        %v1221 = vpop.f32.mrb[0].mxu0
        %1222 = vmatprep.mubr.f32.mxu0 %v384
        %1223 = vmatmul.mubr.f32.gmra.mrb[0].mxu0 %v632
        %v1224 = vpop.f32.mrb[0].mxu0
        %v1225 = vadd.f32 %v1000, %v1224
        %v1226 = vpop.f32.mrb[0].mxu0
        %1227 = vmatprep.mubr.f32.mxu0 %v386
        %1228 = vmatmul.mubr.f32.gmra.mrb[0].mxu0 %v635
        %v1229 = vpop.f32.mrb[0].mxu0
        %v1230 = vadd.f32 %v1005, %v1229
        %v1231 = vpop.f32.mrb[0].mxu0
        %1232 = vmatprep.mubr.f32.mxu0 %v387
        %1233 = vmatmul.mubr.f32.gmra.mrb[0].mxu0 %v637
        %v1234 = vpop.f32.mrb[0].mxu0
        %v1235 = vadd.f32 %v1010, %v1234
        %v1236 = vpop.f32.mrb[0].mxu0
        %1237 = vmatprep.mubr.f32.mxu0 %v389
        %1238 = vmatmul.mubr.f32.gmra.mrb[0].mxu0 %v640
        %v1239 = vpop.f32.mrb[0].mxu0
        %v1240 = vadd.f32 %v1015, %v1239
        %v1241 = vpop.f32.mrb[0].mxu0
        %1242 = vmatprep.mubr.f32.mxu0 %v390
        %1243 = vmatmul.mubr.f32.gmra.mrb[0].mxu0 %v642
        %v1244 = vpop.f32.mrb[0].mxu0
        %v1245 = vadd.f32 %v1020, %v1244
        %v1246 = vpop.f32.mrb[0].mxu0
        %1247 = vmatprep.mubr.f32.mxu0 %v392
        %1248 = vmatmul.mubr.f32.gmra.mrb[0].mxu0 %v645
        %v1249 = vpop.f32.mrb[0].mxu0
        %v1250 = vadd.f32 %v1025, %v1249
        %v1251 = vpop.f32.mrb[0].mxu0
        %1252 = vmatprep.mubr.f32.mxu0 %v393
        %1253 = vmatmul.mubr.f32.gmra.mrb[0].mxu0 %v647
        %v1254 = vpop.f32.mrb[0].mxu0
        %v1255 = vadd.f32 %v1030, %v1254
        %v1256 = vpop.f32.mrb[0].mxu0
        %1257 = vmatprep.mubr.f32.mxu0 %v395
        %1258 = vmatmul.mubr.f32.gmra.mrb[0].mxu0 %v650
        %v1259 = vpop.f32.mrb[0].mxu0
        %v1260 = vadd.f32 %v1035, %v1259
        %v1261 = vpop.f32.mrb[0].mxu0
        %1262 = vmatprep.mubr.f32.mxu0 %v396
        %1263 = vmatmul.mubr.f32.gmra.mrb[0].mxu0 %v652
        %v1264 = vpop.f32.mrb[0].mxu0
        %v1265 = vadd.f32 %v1040, %v1264
        %v1266 = vpop.f32.mrb[0].mxu0
        %1267 = vmatprep.mubr.f32.mxu0 %v398
        %1268 = vmatmul.mubr.f32.gmra.mrb[0].mxu0 %v655
        %v1269 = vpop.f32.mrb[0].mxu0
        %v1270 = vadd.f32 %v1045, %v1269
        %v1271 = vpop.f32.mrb[0].mxu0
        %1272 = vmatprep.mubr.f32.mxu0 %v399
        %1273 = vmatmul.mubr.f32.gmra.mrb[0].mxu0 %v657
        %v1274 = vpop.f32.mrb[0].mxu0
        %v1275 = vadd.f32 %v1050, %v1274
        %v1276 = vpop.f32.mrb[0].mxu0
        %1277 = vmatprep.mubr.f32.mxu0 %v401
        %1278 = vmatmul.mubr.f32.gmra.mrb[0].mxu0 %v660
        %v1279 = vpop.f32.mrb[0].mxu0
        %v1280 = vadd.f32 %v1055, %v1279
        %v1281 = vpop.f32.mrb[0].mxu0
        %1282 = vmatprep.mubr.f32.mxu0 %v402
        %1283 = vmatmul.mubr.f32.gmra.mrb[0].mxu0 %v662
        %v1284 = vpop.f32.mrb[0].mxu0
        %v1285 = vadd.f32 %v1060, %v1284
        %v1286 = vpop.f32.mrb[0].mxu0
        %1287 = vmatprep.mubr.f32.mxu0 %v404
        %1288 = vmatmul.mubr.f32.gmra.mrb[0].mxu0 %v665
        %v1289 = vpop.f32.mrb[0].mxu0
        %v1290 = vadd.f32 %v1065, %v1289
        %v1291 = vpop.f32.mrb[0].mxu0
        %1292 = vmatprep.mubr.f32.mxu0 %v405
        %1293 = vmatmul.mubr.f32.gmra.mrb[0].mxu0 %v667
        %v1294 = vpop.f32.mrb[0].mxu0
        %v1295 = vadd.f32 %v1070, %v1294
        %v1296 = vpop.f32.mrb[0].mxu0
        %1297 = vmatprep.mubr.f32.mxu0 %v407
        %1298 = vmatmul.mubr.f32.gmra.mrb[0].mxu0 %v670
        %v1299 = vpop.f32.mrb[0].mxu0
        %v1300 = vadd.f32 %v1075, %v1299
        %v1301 = vpop.f32.mrb[0].mxu0
        %1302 = vmatprep.mubr.f32.mxu0 %v408
        %1303 = vmatmul.mubr.f32.gmra.mrb[0].mxu0 %v672
        %v1304 = vpop.f32.mrb[0].mxu0
        %v1305 = vadd.f32 %v1080, %v1304
        %v1306 = vpop.f32.mrb[0].mxu0
        %1307 = vmatprep.mubr.f32.mxu0 %v410
        %1308 = vmatmul.mubr.f32.gmra.mrb[0].mxu0 %v675
        %v1309 = vpop.f32.mrb[0].mxu0
        %v1310 = vadd.f32 %v1085, %v1309
        %v1311 = vpop.f32.mrb[0].mxu0
        %1312 = vmatprep.mubr.f32.mxu0 %v411
        %1313 = vmatmul.mubr.f32.gmra.mrb[0].mxu0 %v677
        %v1314 = vpop.f32.mrb[0].mxu0
        %v1315 = vadd.f32 %v1090, %v1314
        %v1316 = vpop.f32.mrb[0].mxu0
        %1317 = vdwg.mxu0
        %1318 = vmatprep.subr.mxu0 0.0
        %1319 = vmatpush1.msra.mxu0 %v788
        %1320 = vmatprep.subr.mxu0 0.0
        %1321 = vmatpush1.msra.mxu0 %v789
        %1322 = vmatprep.subr.mxu0 0.0
        %1323 = vmatpush1.msra.mxu0 %v790
        %1324 = vmatprep.subr.mxu0 0.0
        %1325 = vmatpush1.msra.mxu0 %v791
        %1326 = vmatprep.subr.mxu0 0.0
        %1327 = vmatpush1.msra.mxu0 %v792
        %1328 = vmatprep.subr.mxu0 0.0
        %1329 = vmatpush1.msra.mxu0 %v793
        %1330 = vmatprep.subr.mxu0 0.0
        %1331 = vmatpush1.msra.mxu0 %v794
        %1332 = vmatprep.subr.mxu0 0.0
        %1333 = vmatpush1.msra.mxu0 %v795
        %1334 = vmatprep.subr.mxu0 0.0
        %1335 = vmatpush1.msra.mxu0 %v796
        %1336 = vmatprep.subr.mxu0 0.0
        %1337 = vmatpush1.msra.mxu0 %v797
        %1338 = vmatprep.subr.mxu0 0.0
        %1339 = vmatpush1.msra.mxu0 %v798
        %1340 = vmatprep.subr.mxu0 0.0
        %1341 = vmatpush1.msra.mxu0 %v799
        %1342 = vmatprep.subr.mxu0 0.0
        %1343 = vmatpush1.msra.mxu0 %v800
        %1344 = vmatprep.subr.mxu0 0.0
        %1345 = vmatpush1.msra.mxu0 %v801
        %1346 = vmatprep.subr.mxu0 0.0
        %1347 = vmatpush1.msra.mxu0 %v802
        %1348 = vmatprep.subr.mxu0 0.0
        %1349 = vmatpush1.msra.mxu0 %v803
        %1350 = vmatprep.subr.mxu0 0.0
        %1351 = vmatpush1.msra.mxu0 %v804
        %1352 = vmatprep.subr.mxu0 0.0
        %1353 = vmatpush1.msra.mxu0 %v805
        %1354 = vmatprep.subr.mxu0 0.0
        %1355 = vmatpush1.msra.mxu0 %v806
        %1356 = vmatprep.subr.mxu0 0.0
        %1357 = vmatpush1.msra.mxu0 %v807
        %1358 = vmatprep.subr.mxu0 0.0
        %1359 = vmatpush1.msra.mxu0 %v808
        %1360 = vmatprep.subr.mxu0 0.0
        %1361 = vmatpush1.msra.mxu0 %v809
        %1362 = vmatprep.subr.mxu0 0.0
        %1363 = vmatpush1.msra.mxu0 %v810
        %1364 = vmatprep.subr.mxu0 0.0
        %1365 = vmatpush1.msra.mxu0 %v811
        %1366 = vmatprep.subr.mxu0 0.0
        %1367 = vmatpush1.msra.mxu0 %v812
        %1368 = vmatprep.subr.mxu0 0.0
        %1369 = vmatpush1.msra.mxu0 %v813
        %1370 = vmatprep.subr.mxu0 0.0
        %1371 = vmatpush1.msra.mxu0 %v814
        %1372 = vmatprep.subr.mxu0 0.0
        %1373 = vmatpush1.msra.mxu0 %v815
        %1374 = vmatprep.subr.mxu0 0.0
        %1375 = vmatpush1.msra.mxu0 %v816
        %1376 = vmatprep.subr.mxu0 0.0
        %1377 = vmatpush1.msra.mxu0 %v817
        %1378 = vmatprep.subr.mxu0 0.0
        %1379 = vmatpush1.msra.mxu0 %v818
        %1380 = vmatprep.subr.mxu0 0.0
        %1381 = vmatpush1.msra.mxu0 %v819
        %1382 = vmatprep.mubr.f32.mxu0 %v605
        %1383 = vmatmul.mubr.f32.gmra.mrb[0].mxu0 %v478
        %v1384 = vpop.f32.mrb[0].mxu0
        %v1385 = vadd.f32 %v1160, %v1384
        %v1386 = vpop.f32.mrb[0].mxu0
        %1387 = vmatprep.mubr.f32.mxu0 %v607
        %1388 = vmatmul.mubr.f32.gmra.mrb[0].mxu0 %v480
        %v1389 = vpop.f32.mrb[0].mxu0
        %v1390 = vadd.f32 %v1165, %v1389
        %v1391 = vpop.f32.mrb[0].mxu0
        %1392 = vmatprep.mubr.f32.mxu0 %v610
        %1393 = vmatmul.mubr.f32.gmra.mrb[0].mxu0 %v483
        %v1394 = vpop.f32.mrb[0].mxu0
        %v1395 = vadd.f32 %v1170, %v1394
        %v1396 = vpop.f32.mrb[0].mxu0
        %1397 = vmatprep.mubr.f32.mxu0 %v612
        %1398 = vmatmul.mubr.f32.gmra.mrb[0].mxu0 %v485
        %v1399 = vpop.f32.mrb[0].mxu0
        %v1400 = vadd.f32 %v1175, %v1399
        %v1401 = vpop.f32.mrb[0].mxu0
        %1402 = vmatprep.mubr.f32.mxu0 %v615
        %1403 = vmatmul.mubr.f32.gmra.mrb[0].mxu0 %v488
        %v1404 = vpop.f32.mrb[0].mxu0
        %v1405 = vadd.f32 %v1180, %v1404
        %v1406 = vpop.f32.mrb[0].mxu0
        %1407 = vmatprep.mubr.f32.mxu0 %v617
        %1408 = vmatmul.mubr.f32.gmra.mrb[0].mxu0 %v490
        %v1409 = vpop.f32.mrb[0].mxu0
        %v1410 = vadd.f32 %v1185, %v1409
        %v1411 = vpop.f32.mrb[0].mxu0
        %1412 = vmatprep.mubr.f32.mxu0 %v620
        %1413 = vmatmul.mubr.f32.gmra.mrb[0].mxu0 %v493
        %v1414 = vpop.f32.mrb[0].mxu0
        %v1415 = vadd.f32 %v1190, %v1414
        %v1416 = vpop.f32.mrb[0].mxu0
        %1417 = vmatprep.mubr.f32.mxu0 %v622
        %1418 = vmatmul.mubr.f32.gmra.mrb[0].mxu0 %v495
        %v1419 = vpop.f32.mrb[0].mxu0
        %v1420 = vadd.f32 %v1195, %v1419
        %v1421 = vpop.f32.mrb[0].mxu0
        %1422 = vmatprep.mubr.f32.mxu0 %v625
        %1423 = vmatmul.mubr.f32.gmra.mrb[0].mxu0 %v498
        %v1424 = vpop.f32.mrb[0].mxu0
        %v1425 = vadd.f32 %v1200, %v1424
        %v1426 = vpop.f32.mrb[0].mxu0
        %1427 = vmatprep.mubr.f32.mxu0 %v627
        %1428 = vmatmul.mubr.f32.gmra.mrb[0].mxu0 %v500
        %v1429 = vpop.f32.mrb[0].mxu0
        %v1430 = vadd.f32 %v1205, %v1429
        %v1431 = vpop.f32.mrb[0].mxu0
        %1432 = vmatprep.mubr.f32.mxu0 %v630
        %1433 = vmatmul.mubr.f32.gmra.mrb[0].mxu0 %v503
        %v1434 = vpop.f32.mrb[0].mxu0
        %v1435 = vadd.f32 %v1210, %v1434
        %v1436 = vpop.f32.mrb[0].mxu0
        %1437 = vmatprep.mubr.f32.mxu0 %v632
        %1438 = vmatmul.mubr.f32.gmra.mrb[0].mxu0 %v505
        %v1439 = vpop.f32.mrb[0].mxu0
        %v1440 = vadd.f32 %v1215, %v1439
        %v1441 = vpop.f32.mrb[0].mxu0
        %1442 = vmatprep.mubr.f32.mxu0 %v635
        %1443 = vmatmul.mubr.f32.gmra.mrb[0].mxu0 %v508
        %v1444 = vpop.f32.mrb[0].mxu0
        %v1445 = vadd.f32 %v1220, %v1444
        %v1446 = vpop.f32.mrb[0].mxu0
        %1447 = vmatprep.mubr.f32.mxu0 %v637
        %1448 = vmatmul.mubr.f32.gmra.mrb[0].mxu0 %v510
        %v1449 = vpop.f32.mrb[0].mxu0
        %v1450 = vadd.f32 %v1225, %v1449
        %v1451 = vpop.f32.mrb[0].mxu0
        %1452 = vmatprep.mubr.f32.mxu0 %v640
        %1453 = vmatmul.mubr.f32.gmra.mrb[0].mxu0 %v513
        %v1454 = vpop.f32.mrb[0].mxu0
        %v1455 = vadd.f32 %v1230, %v1454
        %v1456 = vpop.f32.mrb[0].mxu0
        %1457 = vmatprep.mubr.f32.mxu0 %v642
        %1458 = vmatmul.mubr.f32.gmra.mrb[0].mxu0 %v515
        %v1459 = vpop.f32.mrb[0].mxu0
        %v1460 = vadd.f32 %v1235, %v1459
        %v1461 = vpop.f32.mrb[0].mxu0
        %1462 = vmatprep.mubr.f32.mxu0 %v645
        %1463 = vmatmul.mubr.f32.gmra.mrb[0].mxu0 %v518
        %v1464 = vpop.f32.mrb[0].mxu0
        %v1465 = vadd.f32 %v1240, %v1464
        %v1466 = vpop.f32.mrb[0].mxu0
        %1467 = vmatprep.mubr.f32.mxu0 %v647
        %1468 = vmatmul.mubr.f32.gmra.mrb[0].mxu0 %v520
        %v1469 = vpop.f32.mrb[0].mxu0
        %v1470 = vadd.f32 %v1245, %v1469
        %v1471 = vpop.f32.mrb[0].mxu0
        %1472 = vmatprep.mubr.f32.mxu0 %v650
        %1473 = vmatmul.mubr.f32.gmra.mrb[0].mxu0 %v523
        %v1474 = vpop.f32.mrb[0].mxu0
        %v1475 = vadd.f32 %v1250, %v1474
        %v1476 = vpop.f32.mrb[0].mxu0
        %1477 = vmatprep.mubr.f32.mxu0 %v652
        %1478 = vmatmul.mubr.f32.gmra.mrb[0].mxu0 %v525
        %v1479 = vpop.f32.mrb[0].mxu0
        %v1480 = vadd.f32 %v1255, %v1479
        %v1481 = vpop.f32.mrb[0].mxu0
        %1482 = vmatprep.mubr.f32.mxu0 %v655
        %1483 = vmatmul.mubr.f32.gmra.mrb[0].mxu0 %v528
        %v1484 = vpop.f32.mrb[0].mxu0
        %v1485 = vadd.f32 %v1260, %v1484
        %v1486 = vpop.f32.mrb[0].mxu0
        %1487 = vmatprep.mubr.f32.mxu0 %v657
        %1488 = vmatmul.mubr.f32.gmra.mrb[0].mxu0 %v530
        %v1489 = vpop.f32.mrb[0].mxu0
        %v1490 = vadd.f32 %v1265, %v1489
        %v1491 = vpop.f32.mrb[0].mxu0
        %1492 = vmatprep.mubr.f32.mxu0 %v660
        %1493 = vmatmul.mubr.f32.gmra.mrb[0].mxu0 %v533
        %v1494 = vpop.f32.mrb[0].mxu0
        %v1495 = vadd.f32 %v1270, %v1494
        %v1496 = vpop.f32.mrb[0].mxu0
        %1497 = vmatprep.mubr.f32.mxu0 %v662
        %1498 = vmatmul.mubr.f32.gmra.mrb[0].mxu0 %v535
        %v1499 = vpop.f32.mrb[0].mxu0
        %v1500 = vadd.f32 %v1275, %v1499
        %v1501 = vpop.f32.mrb[0].mxu0
        %1502 = vmatprep.mubr.f32.mxu0 %v665
        %1503 = vmatmul.mubr.f32.gmra.mrb[0].mxu0 %v538
        %v1504 = vpop.f32.mrb[0].mxu0
        %v1505 = vadd.f32 %v1280, %v1504
        %v1506 = vpop.f32.mrb[0].mxu0
        %1507 = vmatprep.mubr.f32.mxu0 %v667
        %1508 = vmatmul.mubr.f32.gmra.mrb[0].mxu0 %v540
        %v1509 = vpop.f32.mrb[0].mxu0
        %v1510 = vadd.f32 %v1285, %v1509
        %v1511 = vpop.f32.mrb[0].mxu0
        %1512 = vmatprep.mubr.f32.mxu0 %v670
        %1513 = vmatmul.mubr.f32.gmra.mrb[0].mxu0 %v543
        %v1514 = vpop.f32.mrb[0].mxu0
        %v1515 = vadd.f32 %v1290, %v1514
        %v1516 = vpop.f32.mrb[0].mxu0
        %1517 = vmatprep.mubr.f32.mxu0 %v672
        %1518 = vmatmul.mubr.f32.gmra.mrb[0].mxu0 %v545
        %v1519 = vpop.f32.mrb[0].mxu0
        %v1520 = vadd.f32 %v1295, %v1519
        %v1521 = vpop.f32.mrb[0].mxu0
        %1522 = vmatprep.mubr.f32.mxu0 %v675
        %1523 = vmatmul.mubr.f32.gmra.mrb[0].mxu0 %v548
        %v1524 = vpop.f32.mrb[0].mxu0
        %v1525 = vadd.f32 %v1300, %v1524
        %v1526 = vpop.f32.mrb[0].mxu0
        %1527 = vmatprep.mubr.f32.mxu0 %v677
        %1528 = vmatmul.mubr.f32.gmra.mrb[0].mxu0 %v550
        %v1529 = vpop.f32.mrb[0].mxu0
        %v1530 = vadd.f32 %v1305, %v1529
        %v1531 = vpop.f32.mrb[0].mxu0
        %1532 = vmatprep.mubr.f32.mxu0 %v680
        %1533 = vmatmul.mubr.f32.gmra.mrb[0].mxu0 %v553
        %v1534 = vpop.f32.mrb[0].mxu0
        %v1535 = vadd.f32 %v1310, %v1534
        %v1536 = vpop.f32.mrb[0].mxu0
        %1537 = vmatprep.mubr.f32.mxu0 %v682
        %1538 = vmatmul.mubr.f32.gmra.mrb[0].mxu0 %v555
        %v1539 = vpop.f32.mrb[0].mxu0
        %v1540 = vadd.f32 %v1315, %v1539
        %v1541 = vpop.f32.mrb[0].mxu0
        %1542 = vdwg.mxu0
        %1543 = vmatprep.subr.mxu0 0.0
        %1544 = vmatpush1.msra.mxu0 %v820
        %1545 = vmatprep.subr.mxu0 0.0
        %1546 = vmatpush1.msra.mxu0 %v821
        %1547 = vmatprep.subr.mxu0 0.0
        %1548 = vmatpush1.msra.mxu0 %v822
        %1549 = vmatprep.subr.mxu0 0.0
        %1550 = vmatpush1.msra.mxu0 %v823
        %1551 = vmatprep.subr.mxu0 0.0
        %1552 = vmatpush1.msra.mxu0 %v824
        %1553 = vmatprep.subr.mxu0 0.0
        %1554 = vmatpush1.msra.mxu0 %v825
        %1555 = vmatprep.subr.mxu0 0.0
        %1556 = vmatpush1.msra.mxu0 %v826
        %1557 = vmatprep.subr.mxu0 0.0
        %1558 = vmatpush1.msra.mxu0 %v827
        %1559 = vmatprep.subr.mxu0 0.0
        %1560 = vmatpush1.msra.mxu0 %v828
        %1561 = vmatprep.subr.mxu0 0.0
        %1562 = vmatpush1.msra.mxu0 %v829
        %1563 = vmatprep.subr.mxu0 0.0
        %1564 = vmatpush1.msra.mxu0 %v830
        %1565 = vmatprep.subr.mxu0 0.0
        %1566 = vmatpush1.msra.mxu0 %v831
        %1567 = vmatprep.subr.mxu0 0.0
        %1568 = vmatpush1.msra.mxu0 %v832
        %1569 = vmatprep.subr.mxu0 0.0
        %1570 = vmatpush1.msra.mxu0 %v833
        %1571 = vmatprep.subr.mxu0 0.0
        %1572 = vmatpush1.msra.mxu0 %v834
        %1573 = vmatprep.subr.mxu0 0.0
        %1574 = vmatpush1.msra.mxu0 %v835
        %1575 = vmatprep.subr.mxu0 0.0
        %1576 = vmatpush1.msra.mxu0 %v836
        %1577 = vmatprep.subr.mxu0 0.0
        %1578 = vmatpush1.msra.mxu0 %v837
        %1579 = vmatprep.subr.mxu0 0.0
        %1580 = vmatpush1.msra.mxu0 %v838
        %1581 = vmatprep.subr.mxu0 0.0
        %1582 = vmatpush1.msra.mxu0 %v839
        %1583 = vmatprep.subr.mxu0 0.0
        %1584 = vmatpush1.msra.mxu0 %v840
        %1585 = vmatprep.subr.mxu0 0.0
        %1586 = vmatpush1.msra.mxu0 %v841
        %1587 = vmatprep.subr.mxu0 0.0
        %1588 = vmatpush1.msra.mxu0 %v842
        %1589 = vmatprep.subr.mxu0 0.0
        %1590 = vmatpush1.msra.mxu0 %v843
        %1591 = vmatprep.subr.mxu0 0.0
        %1592 = vmatpush1.msra.mxu0 %v844
        %1593 = vmatprep.subr.mxu0 0.0
        %1594 = vmatpush1.msra.mxu0 %v845
        %1595 = vmatprep.subr.mxu0 0.0
        %1596 = vmatpush1.msra.mxu0 %v846
        %1597 = vmatprep.subr.mxu0 0.0
        %1598 = vmatpush1.msra.mxu0 %v847
        %1599 = vmatprep.subr.mxu0 0.0
        %1600 = vmatpush1.msra.mxu0 %v848
        %1601 = vmatprep.subr.mxu0 0.0
        %1602 = vmatpush1.msra.mxu0 %v849
        %1603 = vmatprep.subr.mxu0 0.0
        %1604 = vmatpush1.msra.mxu0 %v850
        %1605 = vmatprep.subr.mxu0 0.0
        %1606 = vmatpush1.msra.mxu0 %v851
        %1607 = vmatprep.mubr.f32.mxu0 %v483
        %1608 = vmatmul.mubr.f32.gmra.mrb[0].mxu0 %v368
        %v1609 = vpop.f32.mrb[0].mxu0
        %v1610 = vadd.f32 %v1385, %v1609
        %v1611 = vpop.f32.mrb[0].mxu0
        %1612 = vmatprep.mubr.f32.mxu0 %v485
        %1613 = vmatmul.mubr.f32.gmra.mrb[0].mxu0 %v369
        %v1614 = vpop.f32.mrb[0].mxu0
        %v1615 = vadd.f32 %v1390, %v1614
        %v1616 = vpop.f32.mrb[0].mxu0
        %1617 = vmatprep.mubr.f32.mxu0 %v488
        %1618 = vmatmul.mubr.f32.gmra.mrb[0].mxu0 %v371
        %v1619 = vpop.f32.mrb[0].mxu0
        %v1620 = vadd.f32 %v1395, %v1619
        %v1621 = vpop.f32.mrb[0].mxu0
        %1622 = vmatprep.mubr.f32.mxu0 %v490
        %1623 = vmatmul.mubr.f32.gmra.mrb[0].mxu0 %v372
        %v1624 = vpop.f32.mrb[0].mxu0
        %v1625 = vadd.f32 %v1400, %v1624
        %v1626 = vpop.f32.mrb[0].mxu0
        %1627 = vmatprep.mubr.f32.mxu0 %v493
        %1628 = vmatmul.mubr.f32.gmra.mrb[0].mxu0 %v374
        %v1629 = vpop.f32.mrb[0].mxu0
        %v1630 = vadd.f32 %v1405, %v1629
        %v1631 = vpop.f32.mrb[0].mxu0
        %1632 = vmatprep.mubr.f32.mxu0 %v495
        %1633 = vmatmul.mubr.f32.gmra.mrb[0].mxu0 %v375
        %v1634 = vpop.f32.mrb[0].mxu0
        %v1635 = vadd.f32 %v1410, %v1634
        %v1636 = vpop.f32.mrb[0].mxu0
        %1637 = vmatprep.mubr.f32.mxu0 %v498
        %1638 = vmatmul.mubr.f32.gmra.mrb[0].mxu0 %v377
        %v1639 = vpop.f32.mrb[0].mxu0
        %v1640 = vadd.f32 %v1415, %v1639
        %v1641 = vpop.f32.mrb[0].mxu0
        %1642 = vmatprep.mubr.f32.mxu0 %v500
        %1643 = vmatmul.mubr.f32.gmra.mrb[0].mxu0 %v378
        %v1644 = vpop.f32.mrb[0].mxu0
        %v1645 = vadd.f32 %v1420, %v1644
        %v1646 = vpop.f32.mrb[0].mxu0
        %1647 = vmatprep.mubr.f32.mxu0 %v503
        %1648 = vmatmul.mubr.f32.gmra.mrb[0].mxu0 %v380
        %v1649 = vpop.f32.mrb[0].mxu0
        %v1650 = vadd.f32 %v1425, %v1649
        %v1651 = vpop.f32.mrb[0].mxu0
        %1652 = vmatprep.mubr.f32.mxu0 %v505
        %1653 = vmatmul.mubr.f32.gmra.mrb[0].mxu0 %v381
        %v1654 = vpop.f32.mrb[0].mxu0
        %v1655 = vadd.f32 %v1430, %v1654
        %v1656 = vpop.f32.mrb[0].mxu0
        %1657 = vmatprep.mubr.f32.mxu0 %v508
        %1658 = vmatmul.mubr.f32.gmra.mrb[0].mxu0 %v383
        %v1659 = vpop.f32.mrb[0].mxu0
        %v1660 = vadd.f32 %v1435, %v1659
        %v1661 = vpop.f32.mrb[0].mxu0
        %1662 = vmatprep.mubr.f32.mxu0 %v510
        %1663 = vmatmul.mubr.f32.gmra.mrb[0].mxu0 %v384
        %v1664 = vpop.f32.mrb[0].mxu0
        %v1665 = vadd.f32 %v1440, %v1664
        %v1666 = vpop.f32.mrb[0].mxu0
        %1667 = vmatprep.mubr.f32.mxu0 %v513
        %1668 = vmatmul.mubr.f32.gmra.mrb[0].mxu0 %v386
        %v1669 = vpop.f32.mrb[0].mxu0
        %v1670 = vadd.f32 %v1445, %v1669
        %v1671 = vpop.f32.mrb[0].mxu0
        %1672 = vmatprep.mubr.f32.mxu0 %v515
        %1673 = vmatmul.mubr.f32.gmra.mrb[0].mxu0 %v387
        %v1674 = vpop.f32.mrb[0].mxu0
        %v1675 = vadd.f32 %v1450, %v1674
        %v1676 = vpop.f32.mrb[0].mxu0
        %1677 = vmatprep.mubr.f32.mxu0 %v518
        %1678 = vmatmul.mubr.f32.gmra.mrb[0].mxu0 %v389
        %v1679 = vpop.f32.mrb[0].mxu0
        %v1680 = vadd.f32 %v1455, %v1679
        %v1681 = vpop.f32.mrb[0].mxu0
        %1682 = vmatprep.mubr.f32.mxu0 %v520
        %1683 = vmatmul.mubr.f32.gmra.mrb[0].mxu0 %v390
        %v1684 = vpop.f32.mrb[0].mxu0
        %v1685 = vadd.f32 %v1460, %v1684
        %v1686 = vpop.f32.mrb[0].mxu0
        %1687 = vmatprep.mubr.f32.mxu0 %v523
        %1688 = vmatmul.mubr.f32.gmra.mrb[0].mxu0 %v392
        %v1689 = vpop.f32.mrb[0].mxu0
        %v1690 = vadd.f32 %v1465, %v1689
        %v1691 = vpop.f32.mrb[0].mxu0
        %1692 = vmatprep.mubr.f32.mxu0 %v525
        %1693 = vmatmul.mubr.f32.gmra.mrb[0].mxu0 %v393
        %v1694 = vpop.f32.mrb[0].mxu0
        %v1695 = vadd.f32 %v1470, %v1694
        %v1696 = vpop.f32.mrb[0].mxu0
        %1697 = vmatprep.mubr.f32.mxu0 %v528
        %1698 = vmatmul.mubr.f32.gmra.mrb[0].mxu0 %v395
        %v1699 = vpop.f32.mrb[0].mxu0
        %v1700 = vadd.f32 %v1475, %v1699
        %v1701 = vpop.f32.mrb[0].mxu0
        %1702 = vmatprep.mubr.f32.mxu0 %v530
        %1703 = vmatmul.mubr.f32.gmra.mrb[0].mxu0 %v396
        %v1704 = vpop.f32.mrb[0].mxu0
        %v1705 = vadd.f32 %v1480, %v1704
        %v1706 = vpop.f32.mrb[0].mxu0
        %1707 = vmatprep.mubr.f32.mxu0 %v533
        %1708 = vmatmul.mubr.f32.gmra.mrb[0].mxu0 %v398
        %v1709 = vpop.f32.mrb[0].mxu0
        %v1710 = vadd.f32 %v1485, %v1709
        %v1711 = vpop.f32.mrb[0].mxu0
        %1712 = vmatprep.mubr.f32.mxu0 %v535
        %1713 = vmatmul.mubr.f32.gmra.mrb[0].mxu0 %v399
        %v1714 = vpop.f32.mrb[0].mxu0
        %v1715 = vadd.f32 %v1490, %v1714
        %v1716 = vpop.f32.mrb[0].mxu0
        %1717 = vmatprep.mubr.f32.mxu0 %v538
        %1718 = vmatmul.mubr.f32.gmra.mrb[0].mxu0 %v401
        %v1719 = vpop.f32.mrb[0].mxu0
        %v1720 = vadd.f32 %v1495, %v1719
        %v1721 = vpop.f32.mrb[0].mxu0
        %1722 = vmatprep.mubr.f32.mxu0 %v540
        %1723 = vmatmul.mubr.f32.gmra.mrb[0].mxu0 %v402
        %v1724 = vpop.f32.mrb[0].mxu0
        %v1725 = vadd.f32 %v1500, %v1724
        %v1726 = vpop.f32.mrb[0].mxu0
        %1727 = vmatprep.mubr.f32.mxu0 %v543
        %1728 = vmatmul.mubr.f32.gmra.mrb[0].mxu0 %v404
        %v1729 = vpop.f32.mrb[0].mxu0
        %v1730 = vadd.f32 %v1505, %v1729
        %v1731 = vpop.f32.mrb[0].mxu0
        %1732 = vmatprep.mubr.f32.mxu0 %v545
        %1733 = vmatmul.mubr.f32.gmra.mrb[0].mxu0 %v405
        %v1734 = vpop.f32.mrb[0].mxu0
        %v1735 = vadd.f32 %v1510, %v1734
        %v1736 = vpop.f32.mrb[0].mxu0
        %1737 = vmatprep.mubr.f32.mxu0 %v548
        %1738 = vmatmul.mubr.f32.gmra.mrb[0].mxu0 %v407
        %v1739 = vpop.f32.mrb[0].mxu0
        %v1740 = vadd.f32 %v1515, %v1739
        %v1741 = vpop.f32.mrb[0].mxu0
        %1742 = vmatprep.mubr.f32.mxu0 %v550
        %1743 = vmatmul.mubr.f32.gmra.mrb[0].mxu0 %v408
        %v1744 = vpop.f32.mrb[0].mxu0
        %v1745 = vadd.f32 %v1520, %v1744
        %v1746 = vpop.f32.mrb[0].mxu0
        %1747 = vmatprep.mubr.f32.mxu0 %v553
        %1748 = vmatmul.mubr.f32.gmra.mrb[0].mxu0 %v410
        %v1749 = vpop.f32.mrb[0].mxu0
        %v1750 = vadd.f32 %v1525, %v1749
        %v1751 = vpop.f32.mrb[0].mxu0
        %1752 = vmatprep.mubr.f32.mxu0 %v555
        %1753 = vmatmul.mubr.f32.gmra.mrb[0].mxu0 %v411
        %v1754 = vpop.f32.mrb[0].mxu0
        %v1755 = vadd.f32 %v1530, %v1754
        %v1756 = vpop.f32.mrb[0].mxu0
        %1757 = vmatprep.mubr.f32.mxu0 %v558
        %1758 = vmatmul.mubr.f32.gmra.mrb[0].mxu0 %v413
        %v1759 = vpop.f32.mrb[0].mxu0
        %v1760 = vadd.f32 %v1535, %v1759
        %v1761 = vpop.f32.mrb[0].mxu0
        %1762 = vmatprep.mubr.f32.mxu0 %v560
        %1763 = vmatmul.mubr.f32.gmra.mrb[0].mxu0 %v414
        %v1764 = vpop.f32.mrb[0].mxu0
        %v1765 = vadd.f32 %v1540, %v1764
        %v1766 = vpop.f32.mrb[0].mxu0
        %1767 = vdwg.mxu0
        %1768 = vmatprep.subr.mxu0 0.0
        %1769 = vmatpush1.msra.mxu0 %v852
        %1770 = vmatprep.subr.mxu0 0.0
        %1771 = vmatpush1.msra.mxu0 %v853
        %1772 = vmatprep.subr.mxu0 0.0
        %1773 = vmatpush1.msra.mxu0 %v854
        %1774 = vmatprep.subr.mxu0 0.0
        %1775 = vmatpush1.msra.mxu0 %v855
        %1776 = vmatprep.subr.mxu0 0.0
        %1777 = vmatpush1.msra.mxu0 %v856
        %1778 = vmatprep.subr.mxu0 0.0
        %1779 = vmatpush1.msra.mxu0 %v857
        %1780 = vmatprep.subr.mxu0 0.0
        %1781 = vmatpush1.msra.mxu0 %v858
        %1782 = vmatprep.subr.mxu0 0.0
        %1783 = vmatpush1.msra.mxu0 %v859
        %1784 = vmatprep.subr.mxu0 0.0
        %1785 = vmatpush1.msra.mxu0 %v860
        %1786 = vmatprep.subr.mxu0 0.0
        %1787 = vmatpush1.msra.mxu0 %v861
        %1788 = vmatprep.subr.mxu0 0.0
        %1789 = vmatpush1.msra.mxu0 %v862
        %1790 = vmatprep.subr.mxu0 0.0
        %1791 = vmatpush1.msra.mxu0 %v863
        %1792 = vmatprep.subr.mxu0 0.0
        %1793 = vmatpush1.msra.mxu0 %v864
        %1794 = vmatprep.subr.mxu0 0.0
        %1795 = vmatpush1.msra.mxu0 %v865
        %1796 = vmatprep.subr.mxu0 0.0
        %1797 = vmatpush1.msra.mxu0 %v866
        %1798 = vmatprep.subr.mxu0 0.0
        %1799 = vmatpush1.msra.mxu0 %v867
        %1800 = vmatprep.subr.mxu0 0.0
        %1801 = vmatpush1.msra.mxu0 0.0
        %1802 = vmatprep.subr.mxu0 0.0
        %1803 = vmatpush1.msra.mxu0 0.0
        %1804 = vmatprep.subr.mxu0 0.0
        %1805 = vmatpush1.msra.mxu0 0.0
        %1806 = vmatprep.subr.mxu0 0.0
        %1807 = vmatpush1.msra.mxu0 0.0
        %1808 = vmatprep.subr.mxu0 0.0
        %1809 = vmatpush1.msra.mxu0 0.0
        %1810 = vmatprep.subr.mxu0 0.0
        %1811 = vmatpush1.msra.mxu0 0.0
        %1812 = vmatprep.subr.mxu0 0.0
        %1813 = vmatpush1.msra.mxu0 0.0
        %1814 = vmatprep.subr.mxu0 0.0
        %1815 = vmatpush1.msra.mxu0 0.0
        %1816 = vmatprep.subr.mxu0 0.0
        %1817 = vmatpush1.msra.mxu0 0.0
        %1818 = vmatprep.subr.mxu0 0.0
        %1819 = vmatpush1.msra.mxu0 0.0
        %1820 = vmatprep.subr.mxu0 0.0
        %1821 = vmatpush1.msra.mxu0 0.0
        %1822 = vmatprep.subr.mxu0 0.0
        %1823 = vmatpush1.msra.mxu0 0.0
        %1824 = vmatprep.subr.mxu0 0.0
        %1825 = vmatpush1.msra.mxu0 0.0
        %1826 = vmatprep.subr.mxu0 0.0
        %1827 = vmatpush1.msra.mxu0 0.0
        %1828 = vmatprep.subr.mxu0 0.0
        %1829 = vmatpush1.msra.mxu0 0.0
        %1830 = vmatprep.subr.mxu0 0.0
        %1831 = vmatpush1.msra.mxu0 0.0
        %1832 = vmatprep.mubr.f32.mxu0 0.0
        %1833 = vmatmul.mubr.f32.gmra.mrb[0].mxu0 %v610
        %v1834 = vpop.f32.mrb[0].mxu0
        %v1835 = vadd.f32 %v1610, %v1834
        %v1836 = vpop.f32.mrb[0].mxu0
        %1837 = vmatprep.mubr.f32.mxu0 0.0
        %1838 = vmatmul.mubr.f32.gmra.mrb[0].mxu0 %v612
        %v1839 = vpop.f32.mrb[0].mxu0
        %v1840 = vadd.f32 %v1615, %v1839
        %v1841 = vpop.f32.mrb[0].mxu0
        %1842 = vmatprep.mubr.f32.mxu0 0.0
        %1843 = vmatmul.mubr.f32.gmra.mrb[0].mxu0 %v615
        %v1844 = vpop.f32.mrb[0].mxu0
        %v1845 = vadd.f32 %v1620, %v1844
        %v1846 = vpop.f32.mrb[0].mxu0
        %1847 = vmatprep.mubr.f32.mxu0 0.0
        %1848 = vmatmul.mubr.f32.gmra.mrb[0].mxu0 %v617
        %v1849 = vpop.f32.mrb[0].mxu0
        %v1850 = vadd.f32 %v1625, %v1849
        %v1851 = vpop.f32.mrb[0].mxu0
        %1852 = vmatprep.mubr.f32.mxu0 0.0
        %1853 = vmatmul.mubr.f32.gmra.mrb[0].mxu0 %v620
        %v1854 = vpop.f32.mrb[0].mxu0
        %v1855 = vadd.f32 %v1630, %v1854
        %v1856 = vpop.f32.mrb[0].mxu0
        %1857 = vmatprep.mubr.f32.mxu0 0.0
        %1858 = vmatmul.mubr.f32.gmra.mrb[0].mxu0 %v622
        %v1859 = vpop.f32.mrb[0].mxu0
        %v1860 = vadd.f32 %v1635, %v1859
        %v1861 = vpop.f32.mrb[0].mxu0
        %1862 = vmatprep.mubr.f32.mxu0 0.0
        %1863 = vmatmul.mubr.f32.gmra.mrb[0].mxu0 %v625
        %v1864 = vpop.f32.mrb[0].mxu0
        %v1865 = vadd.f32 %v1640, %v1864
        %v1866 = vpop.f32.mrb[0].mxu0
        %1867 = vmatprep.mubr.f32.mxu0 0.0
        %1868 = vmatmul.mubr.f32.gmra.mrb[0].mxu0 %v627
        %v1869 = vpop.f32.mrb[0].mxu0
        %v1870 = vadd.f32 %v1645, %v1869
        %v1871 = vpop.f32.mrb[0].mxu0
        %1872 = vmatprep.mubr.f32.mxu0 0.0
        %1873 = vmatmul.mubr.f32.gmra.mrb[0].mxu0 %v630
        %v1874 = vpop.f32.mrb[0].mxu0
        %v1875 = vadd.f32 %v1650, %v1874
        %v1876 = vpop.f32.mrb[0].mxu0
        %1877 = vmatprep.mubr.f32.mxu0 0.0
        %1878 = vmatmul.mubr.f32.gmra.mrb[0].mxu0 %v632
        %v1879 = vpop.f32.mrb[0].mxu0
        %v1880 = vadd.f32 %v1655, %v1879
        %v1881 = vpop.f32.mrb[0].mxu0
        %1882 = vmatprep.mubr.f32.mxu0 0.0
        %1883 = vmatmul.mubr.f32.gmra.mrb[0].mxu0 %v635
        %v1884 = vpop.f32.mrb[0].mxu0
        %v1885 = vadd.f32 %v1660, %v1884
        %v1886 = vpop.f32.mrb[0].mxu0
        %1887 = vmatprep.mubr.f32.mxu0 0.0
        %1888 = vmatmul.mubr.f32.gmra.mrb[0].mxu0 %v637
        %v1889 = vpop.f32.mrb[0].mxu0
        %v1890 = vadd.f32 %v1665, %v1889
        %v1891 = vpop.f32.mrb[0].mxu0
        %1892 = vmatprep.mubr.f32.mxu0 0.0
        %1893 = vmatmul.mubr.f32.gmra.mrb[0].mxu0 %v640
        %v1894 = vpop.f32.mrb[0].mxu0
        %v1895 = vadd.f32 %v1670, %v1894
        %v1896 = vpop.f32.mrb[0].mxu0
        %1897 = vmatprep.mubr.f32.mxu0 0.0
        %1898 = vmatmul.mubr.f32.gmra.mrb[0].mxu0 %v642
        %v1899 = vpop.f32.mrb[0].mxu0
        %v1900 = vadd.f32 %v1675, %v1899
        %v1901 = vpop.f32.mrb[0].mxu0
        %1902 = vmatprep.mubr.f32.mxu0 0.0
        %1903 = vmatmul.mubr.f32.gmra.mrb[0].mxu0 %v645
        %v1904 = vpop.f32.mrb[0].mxu0
        %v1905 = vadd.f32 %v1680, %v1904
        %v1906 = vpop.f32.mrb[0].mxu0
        %1907 = vmatprep.mubr.f32.mxu0 0.0
        %1908 = vmatmul.mubr.f32.gmra.mrb[0].mxu0 %v647
        %v1909 = vpop.f32.mrb[0].mxu0
        %v1910 = vadd.f32 %v1685, %v1909
        %v1911 = vpop.f32.mrb[0].mxu0
        %1912 = vmatprep.mubr.f32.mxu0 0.0
        %1913 = vmatmul.mubr.f32.gmra.mrb[0].mxu0 %v650
        %v1914 = vpop.f32.mrb[0].mxu0
        %v1915 = vadd.f32 %v1690, %v1914
        %v1916 = vpop.f32.mrb[0].mxu0
        %1917 = vmatprep.mubr.f32.mxu0 0.0
        %1918 = vmatmul.mubr.f32.gmra.mrb[0].mxu0 %v652
        %v1919 = vpop.f32.mrb[0].mxu0
        %v1920 = vadd.f32 %v1695, %v1919
        %v1921 = vpop.f32.mrb[0].mxu0
        %1922 = vmatprep.mubr.f32.mxu0 0.0
        %1923 = vmatmul.mubr.f32.gmra.mrb[0].mxu0 %v655
        %v1924 = vpop.f32.mrb[0].mxu0
        %v1925 = vadd.f32 %v1700, %v1924
        %v1926 = vpop.f32.mrb[0].mxu0
        %1927 = vmatprep.mubr.f32.mxu0 0.0
        %1928 = vmatmul.mubr.f32.gmra.mrb[0].mxu0 %v657
        %v1929 = vpop.f32.mrb[0].mxu0
        %v1930 = vadd.f32 %v1705, %v1929
        %v1931 = vpop.f32.mrb[0].mxu0
        %1932 = vmatprep.mubr.f32.mxu0 0.0
        %1933 = vmatmul.mubr.f32.gmra.mrb[0].mxu0 %v660
        %v1934 = vpop.f32.mrb[0].mxu0
        %v1935 = vadd.f32 %v1710, %v1934
        %v1936 = vpop.f32.mrb[0].mxu0
        %1937 = vmatprep.mubr.f32.mxu0 0.0
        %1938 = vmatmul.mubr.f32.gmra.mrb[0].mxu0 %v662
        %v1939 = vpop.f32.mrb[0].mxu0
        %v1940 = vadd.f32 %v1715, %v1939
        %v1941 = vpop.f32.mrb[0].mxu0
        %1942 = vmatprep.mubr.f32.mxu0 0.0
        %1943 = vmatmul.mubr.f32.gmra.mrb[0].mxu0 %v665
        %v1944 = vpop.f32.mrb[0].mxu0
        %v1945 = vadd.f32 %v1720, %v1944
        %v1946 = vpop.f32.mrb[0].mxu0
        %1947 = vmatprep.mubr.f32.mxu0 0.0
        %1948 = vmatmul.mubr.f32.gmra.mrb[0].mxu0 %v667
        %v1949 = vpop.f32.mrb[0].mxu0
        %v1950 = vadd.f32 %v1725, %v1949
        %v1951 = vpop.f32.mrb[0].mxu0
        %1952 = vmatprep.mubr.f32.mxu0 0.0
        %1953 = vmatmul.mubr.f32.gmra.mrb[0].mxu0 %v670
        %v1954 = vpop.f32.mrb[0].mxu0
        %v1955 = vadd.f32 %v1730, %v1954
        %v1956 = vpop.f32.mrb[0].mxu0
        %1957 = vmatprep.mubr.f32.mxu0 0.0
        %1958 = vmatmul.mubr.f32.gmra.mrb[0].mxu0 %v672
        %v1959 = vpop.f32.mrb[0].mxu0
        %v1960 = vadd.f32 %v1735, %v1959
        %v1961 = vpop.f32.mrb[0].mxu0
        %1962 = vmatprep.mubr.f32.mxu0 0.0
        %1963 = vmatmul.mubr.f32.gmra.mrb[0].mxu0 %v675
        %v1964 = vpop.f32.mrb[0].mxu0
        %v1965 = vadd.f32 %v1740, %v1964
        %v1966 = vpop.f32.mrb[0].mxu0
        %1967 = vmatprep.mubr.f32.mxu0 0.0
        %1968 = vmatmul.mubr.f32.gmra.mrb[0].mxu0 %v677
        %v1969 = vpop.f32.mrb[0].mxu0
        %v1970 = vadd.f32 %v1745, %v1969
        %v1971 = vpop.f32.mrb[0].mxu0
        %1972 = vmatprep.mubr.f32.mxu0 0.0
        %1973 = vmatmul.mubr.f32.gmra.mrb[0].mxu0 %v680
        %v1974 = vpop.f32.mrb[0].mxu0
        %v1975 = vadd.f32 %v1750, %v1974
        %v1976 = vpop.f32.mrb[0].mxu0
        %1977 = vmatprep.mubr.f32.mxu0 0.0
        %1978 = vmatmul.mubr.f32.gmra.mrb[0].mxu0 %v682
        %v1979 = vpop.f32.mrb[0].mxu0
        %v1980 = vadd.f32 %v1755, %v1979
        %v1981 = vpop.f32.mrb[0].mxu0
        %1982 = vmatprep.mubr.f32.mxu0 0.0
        %1983 = vmatmul.mubr.f32.gmra.mrb[0].mxu0 %v685
        %v1984 = vpop.f32.mrb[0].mxu0
        %v1985 = vadd.f32 %v1760, %v1984
        %v1986 = vpop.f32.mrb[0].mxu0
        %1987 = vmatprep.mubr.f32.mxu0 0.0
        %1988 = vmatmul.mubr.f32.gmra.mrb[0].mxu0 %v687
        %v1989 = vpop.f32.mrb[0].mxu0
        %v1990 = vadd.f32 %v1765, %v1989
        %v1991 = vpop.f32.mrb[0].mxu0
        %1992 = vdwg.mxu0
        %1993 = vst [vmem:[#allocation3] sm:$0xff] %v1835
        %1994 = vst [vmem:[#allocation3 + $0x8] sm:$0xff] %v1840
        %1995 = vst [vmem:[#allocation3 + $0x10] sm:$0xff] %v1845
        %1996 = vst [vmem:[#allocation3 + $0x18] sm:$0xff] %v1850
        %1997 = vst [vmem:[#allocation3 + $0x20] sm:$0xff] %v1855
        %1998 = vst [vmem:[#allocation3 + $0x28] sm:$0xff] %v1860
        %1999 = vst [vmem:[#allocation3 + $0x30] sm:$0xff] %v1865
        %2000 = vst [vmem:[#allocation3 + $0x38] sm:$0xff] %v1870
        %2001 = vst [vmem:[#allocation3 + $0x40] sm:$0xff] %v1875
        %2002 = vst [vmem:[#allocation3 + $0x48] sm:$0xff] %v1880
        %2003 = vst [vmem:[#allocation3 + $0x50] sm:$0xff] %v1885
        %2004 = vst [vmem:[#allocation3 + $0x58] sm:$0xff] %v1890
        %2005 = vst [vmem:[#allocation3 + $0x60] sm:$0xff] %v1895
        %2006 = vst [vmem:[#allocation3 + $0x68] sm:$0xff] %v1900
        %2007 = vst [vmem:[#allocation3 + $0x70] sm:$0xff] %v1905
        %2008 = vst [vmem:[#allocation3 + $0x78] sm:$0xff] %v1910
        %2009 = vst [vmem:[#allocation3 + $0x80] sm:$0xff] %v1915
        %2010 = vst [vmem:[#allocation3 + $0x88] sm:$0xff] %v1920
        %2011 = vst [vmem:[#allocation3 + $0x90] sm:$0xff] %v1925
        %2012 = vst [vmem:[#allocation3 + $0x98] sm:$0xff] %v1930
        %2013 = vst [vmem:[#allocation3 + $0xa0] sm:$0xff] %v1935
        %2014 = vst [vmem:[#allocation3 + $0xa8] sm:$0xff] %v1940
        %2015 = vst [vmem:[#allocation3 + $0xb0] sm:$0xff] %v1945
        %2016 = vst [vmem:[#allocation3 + $0xb8] sm:$0xff] %v1950
        %2017 = vst [vmem:[#allocation3 + $0xc0] sm:$0xff] %v1955
        %2018 = vst [vmem:[#allocation3 + $0xc8] sm:$0xff] %v1960
        %2019 = vst [vmem:[#allocation3 + $0xd0] sm:$0xff] %v1965
        %2020 = vst [vmem:[#allocation3 + $0xd8] sm:$0xff] %v1970
        %2021 = vst [vmem:[#allocation3 + $0xe0] sm:$0xff] %v1975
        %2022 = vst [vmem:[#allocation3 + $0xe8] sm:$0xff] %v1980
        %2023 = vst [vmem:[#allocation3 + $0xf0] sm:$0xff] %v1985
        %2024 = vst [vmem:[#allocation3 + $0xf8] sm:$0xff] %v1990
        %v2025 = vadd.f32 %v1835, %v1840
        %v2026 = vadd.f32 %v2025, %v1845
        %v2027 = vadd.f32 %v2026, %v1850
        %v2028 = vadd.f32 %v2027, %v1855
        %v2029 = vadd.f32 %v2028, %v1860
        %v2030 = vadd.f32 %v2029, %v1865
        %v2031 = vadd.f32 %v2030, %v1870
        %v2032 = vadd.f32 %v2031, %v1875
        %v2033 = vadd.f32 %v2032, %v1880
        %v2034 = vadd.f32 %v2033, %v1885
        %v2035 = vadd.f32 %v2034, %v1890
        %v2036 = vadd.f32 %v2035, %v1895
        %v2037 = vadd.f32 %v2036, %v1900
        %v2038 = vadd.f32 %v2037, %v1905
        %v2039 = vadd.f32 %v2038, %v1910
        %v2040 = vadd.f32 %v2039, %v1915
        %v2041 = vadd.f32 %v2040, %v1920
        %v2042 = vadd.f32 %v2041, %v1925
        %v2043 = vadd.f32 %v2042, %v1930
        %v2044 = vadd.f32 %v2043, %v1935
        %v2045 = vadd.f32 %v2044, %v1940
        %v2046 = vadd.f32 %v2045, %v1945
        %v2047 = vadd.f32 %v2046, %v1950
        %v2048 = vadd.f32 %v2047, %v1955
        %v2049 = vadd.f32 %v2048, %v1960
        %v2050 = vadd.f32 %v2049, %v1965
        %v2051 = vadd.f32 %v2050, %v1970
        %v2052 = vadd.f32 %v2051, %v1975
        %v2053 = vadd.f32 %v2052, %v1980
        %v2054 = vadd.f32 %v2053, %v1985
        %v2055 = vadd.f32 %v2054, %v1990
        %v2056 = vrot.slane %v2055, 4
        %v2057 = vadd.f32 %v2055, %v2056
        %v2058 = vrot.slane %v2057, 2
        %v2059 = vadd.f32 %v2057, %v2058
        %v2060 = vrot.slane %v2059, 1
        %v2061 = vadd.f32 %v2059, %v2060
        %v2062 = vadd.f32 %v2061, 0.0
        %v2063 = vmul.f32 %v1835, %v1835
        %v2064 = vmul.f32 %v1840, %v1840
        %v2065 = vmul.f32 %v1845, %v1845
        %v2066 = vmul.f32 %v1850, %v1850
        %v2067 = vmul.f32 %v1855, %v1855
        %v2068 = vmul.f32 %v1860, %v1860
        %v2069 = vmul.f32 %v1865, %v1865
        %v2070 = vmul.f32 %v1870, %v1870
        %v2071 = vmul.f32 %v1875, %v1875
        %v2072 = vmul.f32 %v1880, %v1880
        %v2073 = vmul.f32 %v1885, %v1885
        %v2074 = vmul.f32 %v1890, %v1890
        %v2075 = vmul.f32 %v1895, %v1895
        %v2076 = vmul.f32 %v1900, %v1900
        %v2077 = vmul.f32 %v1905, %v1905
        %v2078 = vmul.f32 %v1910, %v1910
        %v2079 = vmul.f32 %v1915, %v1915
        %v2080 = vmul.f32 %v1920, %v1920
        %v2081 = vmul.f32 %v1925, %v1925
        %v2082 = vmul.f32 %v1930, %v1930
        %v2083 = vmul.f32 %v1935, %v1935
        %v2084 = vmul.f32 %v1940, %v1940
        %v2085 = vmul.f32 %v1945, %v1945
        %v2086 = vmul.f32 %v1950, %v1950
        %v2087 = vmul.f32 %v1955, %v1955
        %v2088 = vmul.f32 %v1960, %v1960
        %v2089 = vmul.f32 %v1965, %v1965
        %v2090 = vmul.f32 %v1970, %v1970
        %v2091 = vmul.f32 %v1975, %v1975
        %v2092 = vmul.f32 %v1980, %v1980
        %v2093 = vmul.f32 %v1985, %v1985
        %v2094 = vmul.f32 %v1990, %v1990
        %v2095 = vadd.f32 %v2063, %v2064
        %v2096 = vadd.f32 %v2095, %v2065
        %v2097 = vadd.f32 %v2096, %v2066
        %v2098 = vadd.f32 %v2097, %v2067
        %v2099 = vadd.f32 %v2098, %v2068
        %v2100 = vadd.f32 %v2099, %v2069
        %v2101 = vadd.f32 %v2100, %v2070
        %v2102 = vadd.f32 %v2101, %v2071
        %v2103 = vadd.f32 %v2102, %v2072
        %v2104 = vadd.f32 %v2103, %v2073
        %v2105 = vadd.f32 %v2104, %v2074
        %v2106 = vadd.f32 %v2105, %v2075
        %v2107 = vadd.f32 %v2106, %v2076
        %v2108 = vadd.f32 %v2107, %v2077
        %v2109 = vadd.f32 %v2108, %v2078
        %v2110 = vadd.f32 %v2109, %v2079
        %v2111 = vadd.f32 %v2110, %v2080
        %v2112 = vadd.f32 %v2111, %v2081
        %v2113 = vadd.f32 %v2112, %v2082
        %v2114 = vadd.f32 %v2113, %v2083
        %v2115 = vadd.f32 %v2114, %v2084
        %v2116 = vadd.f32 %v2115, %v2085
        %v2117 = vadd.f32 %v2116, %v2086
        %v2118 = vadd.f32 %v2117, %v2087
        %v2119 = vadd.f32 %v2118, %v2088
        %v2120 = vadd.f32 %v2119, %v2089
        %v2121 = vadd.f32 %v2120, %v2090
        %v2122 = vadd.f32 %v2121, %v2091
        %v2123 = vadd.f32 %v2122, %v2092
        %v2124 = vadd.f32 %v2123, %v2093
        %v2125 = vadd.f32 %v2124, %v2094
        %v2126 = vrot.slane %v2125, 4
        %v2127 = vadd.f32 %v2125, %v2126
        %v2128 = vrot.slane %v2127, 2
        %v2129 = vadd.f32 %v2127, %v2128
        %v2130 = vrot.slane %v2129, 1
        %v2131 = vadd.f32 %v2129, %v2130
        %v2132 = vadd.f32 %v2131, 0.0
        %v2133 = vmul.f32 %v2062, 0.00390625
        %v2134 = vmul.f32 %v2132, 0.00390625
        %v2135 = vmul.f32 %v2133, %v2133
        %v2136 = vsub.f32 %v2134, %v2135
        %v2137 = vmax.f32 %v2136, 0.0
        %v2138 = vadd.f32 %v2137, 1e-05
        %v2139 = vrsqrt.pop %v2138
        %v2140 = vld [vmem:[#allocation3] sm:$0xff]
        %v2141 = vld [vmem:[#allocation3 + $0x8] sm:$0xff]
        %v2142 = vld [vmem:[#allocation3 + $0x10] sm:$0xff]
        %v2143 = vld [vmem:[#allocation3 + $0x18] sm:$0xff]
        %v2144 = vld [vmem:[#allocation3 + $0x20] sm:$0xff]
        %v2145 = vld [vmem:[#allocation3 + $0x28] sm:$0xff]
        %v2146 = vld [vmem:[#allocation3 + $0x30] sm:$0xff]
        %v2147 = vld [vmem:[#allocation3 + $0x38] sm:$0xff]
        %v2148 = vld [vmem:[#allocation3 + $0x40] sm:$0xff]
        %v2149 = vld [vmem:[#allocation3 + $0x48] sm:$0xff]
        %v2150 = vld [vmem:[#allocation3 + $0x50] sm:$0xff]
        %v2151 = vld [vmem:[#allocation3 + $0x58] sm:$0xff]
        %v2152 = vld [vmem:[#allocation3 + $0x60] sm:$0xff]
        %v2153 = vld [vmem:[#allocation3 + $0x68] sm:$0xff]
        %v2154 = vld [vmem:[#allocation3 + $0x70] sm:$0xff]
        %v2155 = vld [vmem:[#allocation3 + $0x78] sm:$0xff]
        %v2156 = vld [vmem:[#allocation3 + $0x80] sm:$0xff]
        %v2157 = vld [vmem:[#allocation3 + $0x88] sm:$0xff]
        %v2158 = vld [vmem:[#allocation3 + $0x90] sm:$0xff]
        %v2159 = vld [vmem:[#allocation3 + $0x98] sm:$0xff]
        %v2160 = vld [vmem:[#allocation3 + $0xa0] sm:$0xff]
        %v2161 = vld [vmem:[#allocation3 + $0xa8] sm:$0xff]
        %v2162 = vld [vmem:[#allocation3 + $0xb0] sm:$0xff]
        %v2163 = vld [vmem:[#allocation3 + $0xb8] sm:$0xff]
        %v2164 = vld [vmem:[#allocation3 + $0xc0] sm:$0xff]
        %v2165 = vld [vmem:[#allocation3 + $0xc8] sm:$0xff]
        %v2166 = vld [vmem:[#allocation3 + $0xd0] sm:$0xff]
        %v2167 = vld [vmem:[#allocation3 + $0xd8] sm:$0xff]
        %v2168 = vld [vmem:[#allocation3 + $0xe0] sm:$0xff]
        %v2169 = vld [vmem:[#allocation3 + $0xe8] sm:$0xff]
        %v2170 = vld [vmem:[#allocation3 + $0xf0] sm:$0xff]
        %v2171 = vld [vmem:[#allocation3 + $0xf8] sm:$0xff]
        %v2172 = vsub.f32 %v2140, %v2133
        %v2173 = vsub.f32 %v2141, %v2133
        %v2174 = vsub.f32 %v2142, %v2133
        %v2175 = vsub.f32 %v2143, %v2133
        %v2176 = vsub.f32 %v2144, %v2133
        %v2177 = vsub.f32 %v2145, %v2133
        %v2178 = vsub.f32 %v2146, %v2133
        %v2179 = vsub.f32 %v2147, %v2133
        %v2180 = vsub.f32 %v2148, %v2133
        %v2181 = vsub.f32 %v2149, %v2133
        %v2182 = vsub.f32 %v2150, %v2133
        %v2183 = vsub.f32 %v2151, %v2133
        %v2184 = vsub.f32 %v2152, %v2133
        %v2185 = vsub.f32 %v2153, %v2133
        %v2186 = vsub.f32 %v2154, %v2133
        %v2187 = vsub.f32 %v2155, %v2133
        %v2188 = vsub.f32 %v2156, %v2133
        %v2189 = vsub.f32 %v2157, %v2133
        %v2190 = vsub.f32 %v2158, %v2133
        %v2191 = vsub.f32 %v2159, %v2133
        %v2192 = vsub.f32 %v2160, %v2133
        %v2193 = vsub.f32 %v2161, %v2133
        %v2194 = vsub.f32 %v2162, %v2133
        %v2195 = vsub.f32 %v2163, %v2133
        %v2196 = vsub.f32 %v2164, %v2133
        %v2197 = vsub.f32 %v2165, %v2133
        %v2198 = vsub.f32 %v2166, %v2133
        %v2199 = vsub.f32 %v2167, %v2133
        %v2200 = vsub.f32 %v2168, %v2133
        %v2201 = vsub.f32 %v2169, %v2133
        %v2202 = vsub.f32 %v2170, %v2133
        %v2203 = vsub.f32 %v2171, %v2133
        %v2204 = vmul.f32 %v2172, %v2139
        %v2205 = vmul.f32 %v2173, %v2139
        %v2206 = vmul.f32 %v2174, %v2139
        %v2207 = vmul.f32 %v2175, %v2139
        %v2208 = vmul.f32 %v2176, %v2139
        %v2209 = vmul.f32 %v2177, %v2139
        %v2210 = vmul.f32 %v2178, %v2139
        %v2211 = vmul.f32 %v2179, %v2139
        %v2212 = vmul.f32 %v2180, %v2139
        %v2213 = vmul.f32 %v2181, %v2139
        %v2214 = vmul.f32 %v2182, %v2139
        %v2215 = vmul.f32 %v2183, %v2139
        %v2216 = vmul.f32 %v2184, %v2139
        %v2217 = vmul.f32 %v2185, %v2139
        %v2218 = vmul.f32 %v2186, %v2139
        %v2219 = vmul.f32 %v2187, %v2139
        %v2220 = vmul.f32 %v2188, %v2139
        %v2221 = vmul.f32 %v2189, %v2139
        %v2222 = vmul.f32 %v2190, %v2139
        %v2223 = vmul.f32 %v2191, %v2139
        %v2224 = vmul.f32 %v2192, %v2139
        %v2225 = vmul.f32 %v2193, %v2139
        %v2226 = vmul.f32 %v2194, %v2139
        %v2227 = vmul.f32 %v2195, %v2139
        %v2228 = vmul.f32 %v2196, %v2139
        %v2229 = vmul.f32 %v2197, %v2139
        %v2230 = vmul.f32 %v2198, %v2139
        %v2231 = vmul.f32 %v2199, %v2139
        %v2232 = vmul.f32 %v2200, %v2139
        %v2233 = vmul.f32 %v2201, %v2139
        %v2234 = vmul.f32 %v2202, %v2139
        %v2235 = vmul.f32 %v2203, %v2139
        %v2236 = vmax.f32 %v2204, 0.0
        %v2237 = vmax.f32 %v2205, 0.0
        %v2238 = vmax.f32 %v2206, 0.0
        %v2239 = vmax.f32 %v2207, 0.0
        %v2240 = vmax.f32 %v2208, 0.0
        %v2241 = vmax.f32 %v2209, 0.0
        %v2242 = vmax.f32 %v2210, 0.0
        %v2243 = vmax.f32 %v2211, 0.0
        %v2244 = vmax.f32 %v2212, 0.0
        %v2245 = vmax.f32 %v2213, 0.0
        %v2246 = vmax.f32 %v2214, 0.0
        %v2247 = vmax.f32 %v2215, 0.0
        %v2248 = vmax.f32 %v2216, 0.0
        %v2249 = vmax.f32 %v2217, 0.0
        %v2250 = vmax.f32 %v2218, 0.0
        %v2251 = vmax.f32 %v2219, 0.0
        %v2252 = vmax.f32 %v2220, 0.0
        %v2253 = vmax.f32 %v2221, 0.0
        %v2254 = vmax.f32 %v2222, 0.0
        %v2255 = vmax.f32 %v2223, 0.0
        %v2256 = vmax.f32 %v2224, 0.0
        %v2257 = vmax.f32 %v2225, 0.0
        %v2258 = vmax.f32 %v2226, 0.0
        %v2259 = vmax.f32 %v2227, 0.0
        %v2260 = vmax.f32 %v2228, 0.0
        %v2261 = vmax.f32 %v2229, 0.0
        %v2262 = vmax.f32 %v2230, 0.0
        %v2263 = vmax.f32 %v2231, 0.0
        %v2264 = vmax.f32 %v2232, 0.0
        %v2265 = vmax.f32 %v2233, 0.0
        %v2266 = vmax.f32 %v2234, 0.0
        %v2267 = vmax.f32 %v2235, 0.0
        %2268 = vst [vmem:[%s250 + $0x1] sm:$0xff] %v2236
        %2269 = vst [vmem:[%s250 + $0x9] sm:$0xff] %v2237
        %2270 = vst [vmem:[%s250 + $0x19] sm:$0xff] %v2238
        %2271 = vst [vmem:[%s250 + $0x21] sm:$0xff] %v2239
        %2272 = vst [vmem:[%s250 + $0x31] sm:$0xff] %v2240
        %2273 = vst [vmem:[%s250 + $0x39] sm:$0xff] %v2241
        %2274 = vst [vmem:[%s250 + $0x49] sm:$0xff] %v2242
        %2275 = vst [vmem:[%s250 + $0x51] sm:$0xff] %v2243
        %2276 = vst [vmem:[%s250 + $0x61] sm:$0xff] %v2244
        %2277 = vst [vmem:[%s250 + $0x69] sm:$0xff] %v2245
        %2278 = vst [vmem:[%s250 + $0x79] sm:$0xff] %v2246
        %2279 = vst [vmem:[%s250 + $0x81] sm:$0xff] %v2247
        %2280 = vst [vmem:[%s250 + $0x91] sm:$0xff] %v2248
        %2281 = vst [vmem:[%s250 + $0x99] sm:$0xff] %v2249
        %2282 = vst [vmem:[%s250 + $0xa9] sm:$0xff] %v2250
        %2283 = vst [vmem:[%s250 + $0xb1] sm:$0xff] %v2251
        %2284 = vst [vmem:[%s250 + $0xc1] sm:$0xff] %v2252
        %2285 = vst [vmem:[%s250 + $0xc9] sm:$0xff] %v2253
        %2286 = vst [vmem:[%s250 + $0xd9] sm:$0xff] %v2254
        %2287 = vst [vmem:[%s250 + $0xe1] sm:$0xff] %v2255
        %2288 = vst [vmem:[%s250 + $0xf1] sm:$0xff] %v2256
        %2289 = vst [vmem:[%s250 + $0xf9] sm:$0xff] %v2257
        %2290 = vst [vmem:[%s250 + $0x109] sm:$0xff] %v2258
        %2291 = vst [vmem:[%s250 + $0x111] sm:$0xff] %v2259
        %2292 = vst [vmem:[%s250 + $0x121] sm:$0xff] %v2260
        %2293 = vst [vmem:[%s250 + $0x129] sm:$0xff] %v2261
        %2294 = vst [vmem:[%s250 + $0x139] sm:$0xff] %v2262
        %2295 = vst [vmem:[%s250 + $0x141] sm:$0xff] %v2263
        %2296 = vst [vmem:[%s250 + $0x151] sm:$0xff] %v2264
        %2297 = vst [vmem:[%s250 + $0x159] sm:$0xff] %v2265
        %2298 = vst [vmem:[%s250 + $0x169] sm:$0xff] %v2266
        %2299 = vst [vmem:[%s250 + $0x171] sm:$0xff] %v2267
        %v2300 = vld [vmem:[%s250 + $0x2] sm:$0x1]
        %v2301 = vld [vmem:[%s250 + $0x1a] sm:$0x1]
        %v2302 = vld [vmem:[%s250 + $0x32] sm:$0x1]
        %v2303 = vld [vmem:[%s250 + $0x4a] sm:$0x1]
        %v2304 = vld [vmem:[%s250 + $0x62] sm:$0x1]
        %v2305 = vld [vmem:[%s250 + $0x7a] sm:$0x1]
        %v2306 = vld [vmem:[%s250 + $0x92] sm:$0x1]
        %v2307 = vld [vmem:[%s250 + $0xaa] sm:$0x1]
        %v2308 = vld [vmem:[%s250 + $0xc2] sm:$0x1]
        %v2309 = vld [vmem:[%s250 + $0xda] sm:$0x1]
        %v2310 = vld [vmem:[%s250 + $0xf2] sm:$0x1]
        %v2311 = vld [vmem:[%s250 + $0x10a] sm:$0x1]
        %v2312 = vld [vmem:[%s250 + $0x122] sm:$0x1]
        %v2313 = vld [vmem:[%s250 + $0x13a] sm:$0x1]
        %v2314 = vld [vmem:[%s250 + $0x152] sm:$0x1]
        %v2315 = vld [vmem:[%s250 + $0x16a] sm:$0x1]
        %2316 = vst [vmem:[%s250] sm:$0x1] %v2300
        %2317 = vst [vmem:[%s250 + $0x18] sm:$0x1] %v2301
        %2318 = vst [vmem:[%s250 + $0x30] sm:$0x1] %v2302
        %2319 = vst [vmem:[%s250 + $0x48] sm:$0x1] %v2303
        %2320 = vst [vmem:[%s250 + $0x60] sm:$0x1] %v2304
        %2321 = vst [vmem:[%s250 + $0x78] sm:$0x1] %v2305
        %2322 = vst [vmem:[%s250 + $0x90] sm:$0x1] %v2306
        %2323 = vst [vmem:[%s250 + $0xa8] sm:$0x1] %v2307
        %2324 = vst [vmem:[%s250 + $0xc0] sm:$0x1] %v2308
        %2325 = vst [vmem:[%s250 + $0xd8] sm:$0x1] %v2309
        %2326 = vst [vmem:[%s250 + $0xf0] sm:$0x1] %v2310
        %2327 = vst [vmem:[%s250 + $0x108] sm:$0x1] %v2311
        %2328 = vst [vmem:[%s250 + $0x120] sm:$0x1] %v2312
        %2329 = vst [vmem:[%s250 + $0x138] sm:$0x1] %v2313
        %2330 = vst [vmem:[%s250 + $0x150] sm:$0x1] %v2314
        %2331 = vst [vmem:[%s250 + $0x168] sm:$0x1] %v2315
        %v2332 = vld [vmem:[%s250 + $0xf] sm:$0x1]
        %v2333 = vld [vmem:[%s250 + $0x27] sm:$0x1]
        %v2334 = vld [vmem:[%s250 + $0x3f] sm:$0x1]
        %v2335 = vld [vmem:[%s250 + $0x57] sm:$0x1]
        %v2336 = vld [vmem:[%s250 + $0x6f] sm:$0x1]
        %v2337 = vld [vmem:[%s250 + $0x87] sm:$0x1]
        %v2338 = vld [vmem:[%s250 + $0x9f] sm:$0x1]
        %v2339 = vld [vmem:[%s250 + $0xb7] sm:$0x1]
        %v2340 = vld [vmem:[%s250 + $0xcf] sm:$0x1]
        %v2341 = vld [vmem:[%s250 + $0xe7] sm:$0x1]
        %v2342 = vld [vmem:[%s250 + $0xff] sm:$0x1]
        %v2343 = vld [vmem:[%s250 + $0x117] sm:$0x1]
        %v2344 = vld [vmem:[%s250 + $0x12f] sm:$0x1]
        %v2345 = vld [vmem:[%s250 + $0x147] sm:$0x1]
        %v2346 = vld [vmem:[%s250 + $0x15f] sm:$0x1]
        %v2347 = vld [vmem:[%s250 + $0x177] sm:$0x1]
        %2348 = vst [vmem:[%s250 + $0x11] sm:$0x1] %v2332
        %2349 = vst [vmem:[%s250 + $0x29] sm:$0x1] %v2333
        %2350 = vst [vmem:[%s250 + $0x41] sm:$0x1] %v2334
        %2351 = vst [vmem:[%s250 + $0x59] sm:$0x1] %v2335
        %2352 = vst [vmem:[%s250 + $0x71] sm:$0x1] %v2336
        %2353 = vst [vmem:[%s250 + $0x89] sm:$0x1] %v2337
        %2354 = vst [vmem:[%s250 + $0xa1] sm:$0x1] %v2338
        %2355 = vst [vmem:[%s250 + $0xb9] sm:$0x1] %v2339
        %2356 = vst [vmem:[%s250 + $0xd1] sm:$0x1] %v2340
        %2357 = vst [vmem:[%s250 + $0xe9] sm:$0x1] %v2341
        %2358 = vst [vmem:[%s250 + $0x101] sm:$0x1] %v2342
        %2359 = vst [vmem:[%s250 + $0x119] sm:$0x1] %v2343
        %2360 = vst [vmem:[%s250 + $0x131] sm:$0x1] %v2344
        %2361 = vst [vmem:[%s250 + $0x149] sm:$0x1] %v2345
        %2362 = vst [vmem:[%s250 + $0x161] sm:$0x1] %v2346
        %2363 = vst [vmem:[%s250 + $0x179] sm:$0x1] %v2347
        %v2364 = vld [vmem:[%s347] sm:$0xff]
        %v2365 = vld [vmem:[%s347 + $0x8] sm:$0xff]
        %v2366 = vld [vmem:[%s347 + $0x10] sm:$0x3]
        %2367 = vst [vmem:[#allocation2] sm:$0xff] %v2364
        %2368 = vst [vmem:[#allocation2 + $0x8] sm:$0xff] %v2365
        %2369 = vst [vmem:[#allocation2 + $0x10] sm:$0x3] %v2366
        %v2370 = vld [vmem:[%s354] sm:$0xff]
        %v2371 = vld [vmem:[%s354 + $0x8] sm:$0xff]
        %v2372 = vld [vmem:[%s354 + $0x10] sm:$0x3]
        %2373 = vst [vmem:[%s358] sm:$0xff] %v2370
        %2374 = vst [vmem:[%s358 + $0x8] sm:$0xff] %v2371
        %2375 = vst [vmem:[%s358 + $0x10] sm:$0x3] %v2372
        %v2376 = vld [vmem:[#allocation2] sm:$0xff]
        %v2377 = vld [vmem:[#allocation2 + $0x8] sm:$0xff]
        %v2378 = vld [vmem:[#allocation2 + $0x10] sm:$0x3]
        %v2379 = vld [vmem:[#allocation2 + $0x18] sm:$0xff]
        %v2380 = vld [vmem:[#allocation2 + $0x20] sm:$0xff]
        %v2381 = vld [vmem:[#allocation2 + $0x28] sm:$0x3]
        %v2382 = vld [vmem:[#allocation2 + $0x30] sm:$0xff]
        %v2383 = vld [vmem:[#allocation2 + $0x38] sm:$0xff]
        %v2384 = vld [vmem:[#allocation2 + $0x40] sm:$0x3]
        %v2385 = vld [vmem:[#allocation2 + $0x48] sm:$0xff]
        %v2386 = vld [vmem:[#allocation2 + $0x50] sm:$0xff]
        %v2387 = vld [vmem:[#allocation2 + $0x58] sm:$0x3]
        %v2388 = vld [vmem:[#allocation2 + $0x60] sm:$0xff]
        %v2389 = vld [vmem:[#allocation2 + $0x68] sm:$0xff]
        %v2390 = vld [vmem:[#allocation2 + $0x70] sm:$0x3]
        %v2391 = vld [vmem:[#allocation2 + $0x78] sm:$0xff]
        %v2392 = vld [vmem:[#allocation2 + $0x80] sm:$0xff]
        %v2393 = vld [vmem:[#allocation2 + $0x88] sm:$0x3]
        %v2394 = vld [vmem:[#allocation2 + $0x90] sm:$0xff]
        %v2395 = vld [vmem:[#allocation2 + $0x98] sm:$0xff]
        %v2396 = vld [vmem:[#allocation2 + $0xa0] sm:$0x3]
        %v2397 = vld [vmem:[#allocation2 + $0xa8] sm:$0xff]
        %v2398 = vld [vmem:[#allocation2 + $0xb0] sm:$0xff]
        %v2399 = vld [vmem:[#allocation2 + $0xb8] sm:$0x3]
        %v2400 = vld [vmem:[#allocation2 + $0xc0] sm:$0xff]
        %v2401 = vld [vmem:[#allocation2 + $0xc8] sm:$0xff]
        %v2402 = vld [vmem:[#allocation2 + $0xd0] sm:$0x3]
        %v2403 = vld [vmem:[#allocation2 + $0xd8] sm:$0xff]
        %v2404 = vld [vmem:[#allocation2 + $0xe0] sm:$0xff]
        %v2405 = vld [vmem:[#allocation2 + $0xe8] sm:$0x3]
        %v2406 = vld [vmem:[#allocation2 + $0xf0] sm:$0xff]
        %v2407 = vld [vmem:[#allocation2 + $0xf8] sm:$0xff]
        %v2408 = vld [vmem:[#allocation2 + $0x100] sm:$0x3]
        %v2409 = vld [vmem:[#allocation2 + $0x108] sm:$0xff]
        %v2410 = vld [vmem:[#allocation2 + $0x110] sm:$0xff]
        %v2411 = vld [vmem:[#allocation2 + $0x118] sm:$0x3]
        %v2412 = vld [vmem:[#allocation2 + $0x120] sm:$0xff]
        %v2413 = vld [vmem:[#allocation2 + $0x128] sm:$0xff]
        %v2414 = vld [vmem:[#allocation2 + $0x130] sm:$0x3]
        %v2415 = vld [vmem:[#allocation2 + $0x138] sm:$0xff]
        %v2416 = vld [vmem:[#allocation2 + $0x140] sm:$0xff]
        %v2417 = vld [vmem:[#allocation2 + $0x148] sm:$0x3]
        %v2418 = vld [vmem:[#allocation2 + $0x150] sm:$0xff]
        %v2419 = vld [vmem:[#allocation2 + $0x158] sm:$0xff]
        %v2420 = vld [vmem:[#allocation2 + $0x160] sm:$0x3]
        %v2421 = vld [vmem:[#allocation2 + $0x168] sm:$0xff]
        %v2422 = vld [vmem:[#allocation2 + $0x170] sm:$0xff]
        %v2423 = vld [vmem:[#allocation2 + $0x178] sm:$0x3]
        %v2424 = vld [vmem:[#allocation2 + $0x180] sm:$0xff]
        %v2425 = vld [vmem:[#allocation2 + $0x188] sm:$0xff]
        %v2426 = vld [vmem:[#allocation2 + $0x190] sm:$0x3]
        %v2427 = vld [vmem:[#allocation2 + $0x198] sm:$0xff]
        %v2428 = vld [vmem:[#allocation2 + $0x1a0] sm:$0xff]
        %v2429 = vld [vmem:[#allocation2 + $0x1a8] sm:$0x3]
        %v2484 = vrot.slane %v2376, 1
        %v2485 = vrot.slane %v2377, 1
        %v2486 = vsel %vm470, %v2484, %v2485
        %v2487 = vrot.slane %v2378, 1
        %v2488 = vsel %vm470, %v2485, %v2487
        %v2489 = vrot.slane %v2379, 1
        %v2490 = vrot.slane %v2380, 1
        %v2491 = vsel %vm470, %v2489, %v2490
        %v2492 = vrot.slane %v2381, 1
        %v2493 = vsel %vm470, %v2490, %v2492
        %v2494 = vrot.slane %v2382, 1
        %v2495 = vrot.slane %v2383, 1
        %v2496 = vsel %vm470, %v2494, %v2495
        %v2497 = vrot.slane %v2384, 1
        %v2498 = vsel %vm470, %v2495, %v2497
        %v2499 = vrot.slane %v2385, 1
        %v2500 = vrot.slane %v2386, 1
        %v2501 = vsel %vm470, %v2499, %v2500
        %v2502 = vrot.slane %v2387, 1
        %v2503 = vsel %vm470, %v2500, %v2502
        %v2504 = vrot.slane %v2388, 1
        %v2505 = vrot.slane %v2389, 1
        %v2506 = vsel %vm470, %v2504, %v2505
        %v2507 = vrot.slane %v2390, 1
        %v2508 = vsel %vm470, %v2505, %v2507
        %v2509 = vrot.slane %v2391, 1
        %v2510 = vrot.slane %v2392, 1
        %v2511 = vsel %vm470, %v2509, %v2510
        %v2512 = vrot.slane %v2393, 1
        %v2513 = vsel %vm470, %v2510, %v2512
        %v2514 = vrot.slane %v2394, 1
        %v2515 = vrot.slane %v2395, 1
        %v2516 = vsel %vm470, %v2514, %v2515
        %v2517 = vrot.slane %v2396, 1
        %v2518 = vsel %vm470, %v2515, %v2517
        %v2519 = vrot.slane %v2397, 1
        %v2520 = vrot.slane %v2398, 1
        %v2521 = vsel %vm470, %v2519, %v2520
        %v2522 = vrot.slane %v2399, 1
        %v2523 = vsel %vm470, %v2520, %v2522
        %v2524 = vrot.slane %v2400, 1
        %v2525 = vrot.slane %v2401, 1
        %v2526 = vsel %vm470, %v2524, %v2525
        %v2527 = vrot.slane %v2402, 1
        %v2528 = vsel %vm470, %v2525, %v2527
        %v2529 = vrot.slane %v2403, 1
        %v2530 = vrot.slane %v2404, 1
        %v2531 = vsel %vm470, %v2529, %v2530
        %v2532 = vrot.slane %v2405, 1
        %v2533 = vsel %vm470, %v2530, %v2532
        %v2534 = vrot.slane %v2406, 1
        %v2535 = vrot.slane %v2407, 1
        %v2536 = vsel %vm470, %v2534, %v2535
        %v2537 = vrot.slane %v2408, 1
        %v2538 = vsel %vm470, %v2535, %v2537
        %v2539 = vrot.slane %v2409, 1
        %v2540 = vrot.slane %v2410, 1
        %v2541 = vsel %vm470, %v2539, %v2540
        %v2542 = vrot.slane %v2411, 1
        %v2543 = vsel %vm470, %v2540, %v2542
        %v2544 = vrot.slane %v2412, 1
        %v2545 = vrot.slane %v2413, 1
        %v2546 = vsel %vm470, %v2544, %v2545
        %v2547 = vrot.slane %v2414, 1
        %v2548 = vsel %vm470, %v2545, %v2547
        %v2549 = vrot.slane %v2415, 1
        %v2550 = vrot.slane %v2416, 1
        %v2551 = vsel %vm470, %v2549, %v2550
        %v2552 = vrot.slane %v2417, 1
        %v2553 = vsel %vm470, %v2550, %v2552
        %v2554 = vrot.slane %v2418, 1
        %v2555 = vrot.slane %v2419, 1
        %v2556 = vsel %vm470, %v2554, %v2555
        %v2557 = vrot.slane %v2420, 1
        %v2558 = vsel %vm470, %v2555, %v2557
        %v2559 = vrot.slane %v2421, 1
        %v2560 = vrot.slane %v2422, 1
        %v2561 = vsel %vm470, %v2559, %v2560
        %v2562 = vrot.slane %v2423, 1
        %v2563 = vsel %vm470, %v2560, %v2562
        %v2564 = vrot.slane %v2424, 1
        %v2565 = vrot.slane %v2425, 1
        %v2566 = vsel %vm470, %v2564, %v2565
        %v2567 = vrot.slane %v2426, 1
        %v2568 = vsel %vm470, %v2565, %v2567
        %v2569 = vrot.slane %v2427, 1
        %v2570 = vrot.slane %v2428, 1
        %v2571 = vsel %vm470, %v2569, %v2570
        %v2572 = vrot.slane %v2429, 1
        %v2573 = vsel %vm470, %v2570, %v2572
        %v2610 = vrot.slane %v2376, 2
        %v2611 = vrot.slane %v2377, 2
        %v2612 = vsel %vm597, %v2610, %v2611
        %v2613 = vrot.slane %v2378, 2
        %v2614 = vsel %vm597, %v2611, %v2613
        %v2615 = vrot.slane %v2379, 2
        %v2616 = vrot.slane %v2380, 2
        %v2617 = vsel %vm597, %v2615, %v2616
        %v2618 = vrot.slane %v2381, 2
        %v2619 = vsel %vm597, %v2616, %v2618
        %v2620 = vrot.slane %v2382, 2
        %v2621 = vrot.slane %v2383, 2
        %v2622 = vsel %vm597, %v2620, %v2621
        %v2623 = vrot.slane %v2384, 2
        %v2624 = vsel %vm597, %v2621, %v2623
        %v2625 = vrot.slane %v2385, 2
        %v2626 = vrot.slane %v2386, 2
        %v2627 = vsel %vm597, %v2625, %v2626
        %v2628 = vrot.slane %v2387, 2
        %v2629 = vsel %vm597, %v2626, %v2628
        %v2630 = vrot.slane %v2388, 2
        %v2631 = vrot.slane %v2389, 2
        %v2632 = vsel %vm597, %v2630, %v2631
        %v2633 = vrot.slane %v2390, 2
        %v2634 = vsel %vm597, %v2631, %v2633
        %v2635 = vrot.slane %v2391, 2
        %v2636 = vrot.slane %v2392, 2
        %v2637 = vsel %vm597, %v2635, %v2636
        %v2638 = vrot.slane %v2393, 2
        %v2639 = vsel %vm597, %v2636, %v2638
        %v2640 = vrot.slane %v2394, 2
        %v2641 = vrot.slane %v2395, 2
        %v2642 = vsel %vm597, %v2640, %v2641
        %v2643 = vrot.slane %v2396, 2
        %v2644 = vsel %vm597, %v2641, %v2643
        %v2645 = vrot.slane %v2397, 2
        %v2646 = vrot.slane %v2398, 2
        %v2647 = vsel %vm597, %v2645, %v2646
        %v2648 = vrot.slane %v2399, 2
        %v2649 = vsel %vm597, %v2646, %v2648
        %v2650 = vrot.slane %v2400, 2
        %v2651 = vrot.slane %v2401, 2
        %v2652 = vsel %vm597, %v2650, %v2651
        %v2653 = vrot.slane %v2402, 2
        %v2654 = vsel %vm597, %v2651, %v2653
        %v2655 = vrot.slane %v2403, 2
        %v2656 = vrot.slane %v2404, 2
        %v2657 = vsel %vm597, %v2655, %v2656
        %v2658 = vrot.slane %v2405, 2
        %v2659 = vsel %vm597, %v2656, %v2658
        %v2660 = vrot.slane %v2406, 2
        %v2661 = vrot.slane %v2407, 2
        %v2662 = vsel %vm597, %v2660, %v2661
        %v2663 = vrot.slane %v2408, 2
        %v2664 = vsel %vm597, %v2661, %v2663
        %v2665 = vrot.slane %v2409, 2
        %v2666 = vrot.slane %v2410, 2
        %v2667 = vsel %vm597, %v2665, %v2666
        %v2668 = vrot.slane %v2411, 2
        %v2669 = vsel %vm597, %v2666, %v2668
        %v2670 = vrot.slane %v2412, 2
        %v2671 = vrot.slane %v2413, 2
        %v2672 = vsel %vm597, %v2670, %v2671
        %v2673 = vrot.slane %v2414, 2
        %v2674 = vsel %vm597, %v2671, %v2673
        %v2675 = vrot.slane %v2415, 2
        %v2676 = vrot.slane %v2416, 2
        %v2677 = vsel %vm597, %v2675, %v2676
        %v2678 = vrot.slane %v2417, 2
        %v2679 = vsel %vm597, %v2676, %v2678
        %v2680 = vrot.slane %v2418, 2
        %v2681 = vrot.slane %v2419, 2
        %v2682 = vsel %vm597, %v2680, %v2681
        %v2683 = vrot.slane %v2420, 2
        %v2684 = vsel %vm597, %v2681, %v2683
        %v2685 = vrot.slane %v2421, 2
        %v2686 = vrot.slane %v2422, 2
        %v2687 = vsel %vm597, %v2685, %v2686
        %v2688 = vrot.slane %v2423, 2
        %v2689 = vsel %vm597, %v2686, %v2688
        %v2690 = vrot.slane %v2424, 2
        %v2691 = vrot.slane %v2425, 2
        %v2692 = vsel %vm597, %v2690, %v2691
        %v2693 = vrot.slane %v2426, 2
        %v2694 = vsel %vm597, %v2691, %v2693
        %v2695 = vrot.slane %v2427, 2
        %v2696 = vrot.slane %v2428, 2
        %v2697 = vsel %vm597, %v2695, %v2696
        %v2698 = vrot.slane %v2429, 2
        %v2699 = vsel %vm597, %v2696, %v2698
        %v2736 = vld [vmem:[#allocation9] sm:$0xff]
        %v2737 = vld [vmem:[#allocation9 + $0x8] sm:$0xff]
        %v2738 = vld [vmem:[#allocation9 + $0x10] sm:$0xff]
        %v2739 = vld [vmem:[#allocation9 + $0x18] sm:$0xff]
        %v2740 = vld [vmem:[#allocation9 + $0x20] sm:$0xff]
        %v2741 = vld [vmem:[#allocation9 + $0x28] sm:$0xff]
        %v2742 = vld [vmem:[#allocation9 + $0x30] sm:$0xff]
        %v2743 = vld [vmem:[#allocation9 + $0x38] sm:$0xff]
        %v2744 = vld [vmem:[#allocation9 + $0x40] sm:$0xff]
        %v2745 = vld [vmem:[#allocation9 + $0x48] sm:$0xff]
        %v2746 = vld [vmem:[#allocation9 + $0x50] sm:$0xff]
        %v2747 = vld [vmem:[#allocation9 + $0x58] sm:$0xff]
        %v2748 = vld [vmem:[#allocation9 + $0x60] sm:$0xff]
        %v2749 = vld [vmem:[#allocation9 + $0x68] sm:$0xff]
        %v2750 = vld [vmem:[#allocation9 + $0x70] sm:$0xff]
        %v2751 = vld [vmem:[#allocation9 + $0x78] sm:$0xff]
        %v2752 = vld [vmem:[#allocation9 + $0x80] sm:$0xff]
        %v2753 = vld [vmem:[#allocation9 + $0x88] sm:$0xff]
        %v2754 = vld [vmem:[#allocation9 + $0x90] sm:$0xff]
        %v2755 = vld [vmem:[#allocation9 + $0x98] sm:$0xff]
        %v2756 = vld [vmem:[#allocation9 + $0xa0] sm:$0xff]
        %v2757 = vld [vmem:[#allocation9 + $0xa8] sm:$0xff]
        %v2758 = vld [vmem:[#allocation9 + $0xb0] sm:$0xff]
        %v2759 = vld [vmem:[#allocation9 + $0xb8] sm:$0xff]
        %v2760 = vld [vmem:[#allocation9 + $0xc0] sm:$0xff]
        %v2761 = vld [vmem:[#allocation9 + $0xc8] sm:$0xff]
        %v2762 = vld [vmem:[#allocation9 + $0xd0] sm:$0xff]
        %v2763 = vld [vmem:[#allocation9 + $0xd8] sm:$0xff]
        %v2764 = vld [vmem:[#allocation9 + $0xe0] sm:$0xff]
        %v2765 = vld [vmem:[#allocation9 + $0xe8] sm:$0xff]
        %v2766 = vld [vmem:[#allocation9 + $0xf0] sm:$0xff]
        %v2767 = vld [vmem:[#allocation9 + $0xf8] sm:$0xff]
        %v2768 = vld [vmem:[#allocation9 + $0x100] sm:$0xff]
        %v2769 = vld [vmem:[#allocation9 + $0x108] sm:$0xff]
        %v2770 = vld [vmem:[#allocation9 + $0x110] sm:$0xff]
        %v2771 = vld [vmem:[#allocation9 + $0x118] sm:$0xff]
        %v2772 = vld [vmem:[#allocation9 + $0x120] sm:$0xff]
        %v2773 = vld [vmem:[#allocation9 + $0x128] sm:$0xff]
        %v2774 = vld [vmem:[#allocation9 + $0x130] sm:$0xff]
        %v2775 = vld [vmem:[#allocation9 + $0x138] sm:$0xff]
        %v2776 = vld [vmem:[#allocation9 + $0x140] sm:$0xff]
        %v2777 = vld [vmem:[#allocation9 + $0x148] sm:$0xff]
        %v2778 = vld [vmem:[#allocation9 + $0x150] sm:$0xff]
        %v2779 = vld [vmem:[#allocation9 + $0x158] sm:$0xff]
        %v2780 = vld [vmem:[#allocation9 + $0x160] sm:$0xff]
        %v2781 = vld [vmem:[#allocation9 + $0x168] sm:$0xff]
        %v2782 = vld [vmem:[#allocation9 + $0x170] sm:$0xff]
        %v2783 = vld [vmem:[#allocation9 + $0x178] sm:$0xff]
        %v2784 = vld [vmem:[#allocation9 + $0x180] sm:$0xff]
        %v2785 = vld [vmem:[#allocation9 + $0x188] sm:$0xff]
        %v2786 = vld [vmem:[#allocation9 + $0x190] sm:$0xff]
        %v2787 = vld [vmem:[#allocation9 + $0x198] sm:$0xff]
        %v2788 = vld [vmem:[#allocation9 + $0x1a0] sm:$0xff]
        %v2789 = vld [vmem:[#allocation9 + $0x1a8] sm:$0xff]
        %v2790 = vld [vmem:[#allocation9 + $0x1b0] sm:$0xff]
        %v2791 = vld [vmem:[#allocation9 + $0x1b8] sm:$0xff]
        %v2792 = vld [vmem:[#allocation9 + $0x1c0] sm:$0xff]
        %v2793 = vld [vmem:[#allocation9 + $0x1c8] sm:$0xff]
        %v2794 = vld [vmem:[#allocation9 + $0x1d0] sm:$0xff]
        %v2795 = vld [vmem:[#allocation9 + $0x1d8] sm:$0xff]
        %v2796 = vld [vmem:[#allocation9 + $0x1e0] sm:$0xff]
        %v2797 = vld [vmem:[#allocation9 + $0x1e8] sm:$0xff]
        %v2798 = vld [vmem:[#allocation9 + $0x1f0] sm:$0xff]
        %v2799 = vld [vmem:[#allocation9 + $0x1f8] sm:$0xff]
        %v2800 = vld [vmem:[#allocation9 + $0x200] sm:$0xff]
        %v2801 = vld [vmem:[#allocation9 + $0x208] sm:$0xff]
        %v2802 = vld [vmem:[#allocation9 + $0x210] sm:$0xff]
        %v2803 = vld [vmem:[#allocation9 + $0x218] sm:$0xff]
        %v2804 = vld [vmem:[#allocation9 + $0x220] sm:$0xff]
        %v2805 = vld [vmem:[#allocation9 + $0x228] sm:$0xff]
        %v2806 = vld [vmem:[#allocation9 + $0x230] sm:$0xff]
        %v2807 = vld [vmem:[#allocation9 + $0x238] sm:$0xff]
        %v2808 = vld [vmem:[#allocation9 + $0x240] sm:$0xff]
        %v2809 = vld [vmem:[#allocation9 + $0x248] sm:$0xff]
        %v2810 = vld [vmem:[#allocation9 + $0x250] sm:$0xff]
        %v2811 = vld [vmem:[#allocation9 + $0x258] sm:$0xff]
        %v2812 = vld [vmem:[#allocation9 + $0x260] sm:$0xff]
        %v2813 = vld [vmem:[#allocation9 + $0x268] sm:$0xff]
        %v2814 = vld [vmem:[#allocation9 + $0x270] sm:$0xff]
        %v2815 = vld [vmem:[#allocation9 + $0x278] sm:$0xff]
        %v2816 = vld [vmem:[#allocation9 + $0x280] sm:$0xff]
        %v2817 = vld [vmem:[#allocation9 + $0x288] sm:$0xff]
        %v2818 = vld [vmem:[#allocation9 + $0x290] sm:$0xff]
        %v2819 = vld [vmem:[#allocation9 + $0x298] sm:$0xff]
        %v2820 = vld [vmem:[#allocation9 + $0x2a0] sm:$0xff]
        %v2821 = vld [vmem:[#allocation9 + $0x2a8] sm:$0xff]
        %v2822 = vld [vmem:[#allocation9 + $0x2b0] sm:$0xff]
        %v2823 = vld [vmem:[#allocation9 + $0x2b8] sm:$0xff]
        %v2824 = vld [vmem:[#allocation9 + $0x2c0] sm:$0xff]
        %v2825 = vld [vmem:[#allocation9 + $0x2c8] sm:$0xff]
        %v2826 = vld [vmem:[#allocation9 + $0x2d0] sm:$0xff]
        %v2827 = vld [vmem:[#allocation9 + $0x2d8] sm:$0xff]
        %v2828 = vld [vmem:[#allocation9 + $0x2e0] sm:$0xff]
        %v2829 = vld [vmem:[#allocation9 + $0x2e8] sm:$0xff]
        %v2830 = vld [vmem:[#allocation9 + $0x2f0] sm:$0xff]
        %v2831 = vld [vmem:[#allocation9 + $0x2f8] sm:$0xff]
        %v2832 = vld [vmem:[#allocation9 + $0x300] sm:$0xff]
        %v2833 = vld [vmem:[#allocation9 + $0x308] sm:$0xff]
        %v2834 = vld [vmem:[#allocation9 + $0x310] sm:$0xff]
        %v2835 = vld [vmem:[#allocation9 + $0x318] sm:$0xff]
        %v2836 = vld [vmem:[#allocation9 + $0x320] sm:$0xff]
        %v2837 = vld [vmem:[#allocation9 + $0x328] sm:$0xff]
        %v2838 = vld [vmem:[#allocation9 + $0x330] sm:$0xff]
        %v2839 = vld [vmem:[#allocation9 + $0x338] sm:$0xff]
        %v2840 = vld [vmem:[#allocation9 + $0x340] sm:$0xff]
        %v2841 = vld [vmem:[#allocation9 + $0x348] sm:$0xff]
        %v2842 = vld [vmem:[#allocation9 + $0x350] sm:$0xff]
        %v2843 = vld [vmem:[#allocation9 + $0x358] sm:$0xff]
        %v2844 = vld [vmem:[#allocation9 + $0x360] sm:$0xff]
        %v2845 = vld [vmem:[#allocation9 + $0x368] sm:$0xff]
        %v2846 = vld [vmem:[#allocation9 + $0x370] sm:$0xff]
        %v2847 = vld [vmem:[#allocation9 + $0x378] sm:$0xff]
        %v2848 = vld [vmem:[#allocation9 + $0x380] sm:$0xff]
        %v2849 = vld [vmem:[#allocation9 + $0x388] sm:$0xff]
        %v2850 = vld [vmem:[#allocation9 + $0x390] sm:$0xff]
        %v2851 = vld [vmem:[#allocation9 + $0x398] sm:$0xff]
        %v2852 = vld [vmem:[#allocation9 + $0x3a0] sm:$0xff]
        %v2853 = vld [vmem:[#allocation9 + $0x3a8] sm:$0xff]
        %v2854 = vld [vmem:[#allocation9 + $0x3b0] sm:$0xff]
        %v2855 = vld [vmem:[#allocation9 + $0x3b8] sm:$0xff]
        %v2856 = vld [vmem:[#allocation9 + $0x3c0] sm:$0xff]
        %v2857 = vld [vmem:[#allocation9 + $0x3c8] sm:$0xff]
        %v2858 = vld [vmem:[#allocation9 + $0x3d0] sm:$0xff]
        %v2859 = vld [vmem:[#allocation9 + $0x3d8] sm:$0xff]
        %v2860 = vld [vmem:[#allocation9 + $0x3e0] sm:$0xff]
        %v2861 = vld [vmem:[#allocation9 + $0x3e8] sm:$0xff]
        %v2862 = vld [vmem:[#allocation9 + $0x3f0] sm:$0xff]
        %v2863 = vld [vmem:[#allocation9 + $0x3f8] sm:$0xff]
        %v2864 = vld [vmem:[#allocation9 + $0x400] sm:$0xff]
        %v2865 = vld [vmem:[#allocation9 + $0x408] sm:$0xff]
        %v2866 = vld [vmem:[#allocation9 + $0x410] sm:$0xff]
        %v2867 = vld [vmem:[#allocation9 + $0x418] sm:$0xff]
        %v2868 = vld [vmem:[#allocation9 + $0x420] sm:$0xff]
        %v2869 = vld [vmem:[#allocation9 + $0x428] sm:$0xff]
        %v2870 = vld [vmem:[#allocation9 + $0x430] sm:$0xff]
        %v2871 = vld [vmem:[#allocation9 + $0x438] sm:$0xff]
        %v2872 = vld [vmem:[#allocation9 + $0x440] sm:$0xff]
        %v2873 = vld [vmem:[#allocation9 + $0x448] sm:$0xff]
        %v2874 = vld [vmem:[#allocation9 + $0x450] sm:$0xff]
        %v2875 = vld [vmem:[#allocation9 + $0x458] sm:$0xff]
        %v2876 = vld [vmem:[#allocation9 + $0x460] sm:$0xff]
        %v2877 = vld [vmem:[#allocation9 + $0x468] sm:$0xff]
        %v2878 = vld [vmem:[#allocation9 + $0x470] sm:$0xff]
        %v2879 = vld [vmem:[#allocation9 + $0x478] sm:$0xff]
        %2880 = vmatprep.subr.mxu0 0.0
        %2881 = vmatpush1.msra.mxu0 %v2736
        %2882 = vmatprep.subr.mxu0 0.0
        %2883 = vmatpush1.msra.mxu0 %v2737
        %2884 = vmatprep.subr.mxu0 0.0
        %2885 = vmatpush1.msra.mxu0 %v2738
        %2886 = vmatprep.subr.mxu0 0.0
        %2887 = vmatpush1.msra.mxu0 %v2739
        %2888 = vmatprep.subr.mxu0 0.0
        %2889 = vmatpush1.msra.mxu0 %v2740
        %2890 = vmatprep.subr.mxu0 0.0
        %2891 = vmatpush1.msra.mxu0 %v2741
        %2892 = vmatprep.subr.mxu0 0.0
        %2893 = vmatpush1.msra.mxu0 %v2742
        %2894 = vmatprep.subr.mxu0 0.0
        %2895 = vmatpush1.msra.mxu0 %v2743
        %2896 = vmatprep.subr.mxu0 0.0
        %2897 = vmatpush1.msra.mxu0 %v2744
        %2898 = vmatprep.subr.mxu0 0.0
        %2899 = vmatpush1.msra.mxu0 %v2745
        %2900 = vmatprep.subr.mxu0 0.0
        %2901 = vmatpush1.msra.mxu0 %v2746
        %2902 = vmatprep.subr.mxu0 0.0
        %2903 = vmatpush1.msra.mxu0 %v2747
        %2904 = vmatprep.subr.mxu0 0.0
        %2905 = vmatpush1.msra.mxu0 %v2748
        %2906 = vmatprep.subr.mxu0 0.0
        %2907 = vmatpush1.msra.mxu0 %v2749
        %2908 = vmatprep.subr.mxu0 0.0
        %2909 = vmatpush1.msra.mxu0 %v2750
        %2910 = vmatprep.subr.mxu0 0.0
        %2911 = vmatpush1.msra.mxu0 %v2751
        %2912 = vmatprep.subr.mxu0 0.0
        %2913 = vmatpush1.msra.mxu0 %v2752
        %2914 = vmatprep.subr.mxu0 0.0
        %2915 = vmatpush1.msra.mxu0 %v2753
        %2916 = vmatprep.subr.mxu0 0.0
        %2917 = vmatpush1.msra.mxu0 %v2754
        %2918 = vmatprep.subr.mxu0 0.0
        %2919 = vmatpush1.msra.mxu0 %v2755
        %2920 = vmatprep.subr.mxu0 0.0
        %2921 = vmatpush1.msra.mxu0 %v2756
        %2922 = vmatprep.subr.mxu0 0.0
        %2923 = vmatpush1.msra.mxu0 %v2757
        %2924 = vmatprep.subr.mxu0 0.0
        %2925 = vmatpush1.msra.mxu0 %v2758
        %2926 = vmatprep.subr.mxu0 0.0
        %2927 = vmatpush1.msra.mxu0 %v2759
        %2928 = vmatprep.subr.mxu0 0.0
        %2929 = vmatpush1.msra.mxu0 %v2760
        %2930 = vmatprep.subr.mxu0 0.0
        %2931 = vmatpush1.msra.mxu0 %v2761
        %2932 = vmatprep.subr.mxu0 0.0
        %2933 = vmatpush1.msra.mxu0 %v2762
        %2934 = vmatprep.subr.mxu0 0.0
        %2935 = vmatpush1.msra.mxu0 %v2763
        %2936 = vmatprep.subr.mxu0 0.0
        %2937 = vmatpush1.msra.mxu0 %v2764
        %2938 = vmatprep.subr.mxu0 0.0
        %2939 = vmatpush1.msra.mxu0 %v2765
        %2940 = vmatprep.subr.mxu0 0.0
        %2941 = vmatpush1.msra.mxu0 %v2766
        %2942 = vmatprep.subr.mxu0 0.0
        %2943 = vmatpush1.msra.mxu0 %v2767
        %2944 = vmatprep.mubr.f32.mxu0 %v2486
        %2945 = vmatmul.mubr.f32.gmra.mrb[0].mxu0 %v2376
        %v2946 = vpop.f32.mrb[0].mxu0
        %v2947 = vadd.f32 0.0, %v2946
        %v2948 = vpop.f32.mrb[0].mxu0
        %2949 = vmatprep.mubr.f32.mxu0 %v2488
        %2950 = vmatmul.mubr.f32.gmra.mrb[0].mxu0 %v2377
        %v2951 = vpop.f32.mrb[0].mxu0
        %v2952 = vadd.f32 0.0, %v2951
        %v2953 = vpop.f32.mrb[0].mxu0
        %2954 = vmatprep.mubr.f32.mxu0 %v2491
        %2955 = vmatmul.mubr.f32.gmra.mrb[0].mxu0 %v2379
        %v2956 = vpop.f32.mrb[0].mxu0
        %v2957 = vadd.f32 0.0, %v2956
        %v2958 = vpop.f32.mrb[0].mxu0
        %2959 = vmatprep.mubr.f32.mxu0 %v2493
        %2960 = vmatmul.mubr.f32.gmra.mrb[0].mxu0 %v2380
        %v2961 = vpop.f32.mrb[0].mxu0
        %v2962 = vadd.f32 0.0, %v2961
        %v2963 = vpop.f32.mrb[0].mxu0
        %2964 = vmatprep.mubr.f32.mxu0 %v2496
        %2965 = vmatmul.mubr.f32.gmra.mrb[0].mxu0 %v2382
        %v2966 = vpop.f32.mrb[0].mxu0
        %v2967 = vadd.f32 0.0, %v2966
        %v2968 = vpop.f32.mrb[0].mxu0
        %2969 = vmatprep.mubr.f32.mxu0 %v2498
        %2970 = vmatmul.mubr.f32.gmra.mrb[0].mxu0 %v2383
        %v2971 = vpop.f32.mrb[0].mxu0
        %v2972 = vadd.f32 0.0, %v2971
        %v2973 = vpop.f32.mrb[0].mxu0
        %2974 = vmatprep.mubr.f32.mxu0 %v2501
        %2975 = vmatmul.mubr.f32.gmra.mrb[0].mxu0 %v2385
        %v2976 = vpop.f32.mrb[0].mxu0
        %v2977 = vadd.f32 0.0, %v2976
        %v2978 = vpop.f32.mrb[0].mxu0
        %2979 = vmatprep.mubr.f32.mxu0 %v2503
        %2980 = vmatmul.mubr.f32.gmra.mrb[0].mxu0 %v2386
        %v2981 = vpop.f32.mrb[0].mxu0
        %v2982 = vadd.f32 0.0, %v2981
        %v2983 = vpop.f32.mrb[0].mxu0
        %2984 = vmatprep.mubr.f32.mxu0 %v2506
        %2985 = vmatmul.mubr.f32.gmra.mrb[0].mxu0 %v2388
        %v2986 = vpop.f32.mrb[0].mxu0
        %v2987 = vadd.f32 0.0, %v2986
        %v2988 = vpop.f32.mrb[0].mxu0
        %2989 = vmatprep.mubr.f32.mxu0 %v2508
        %2990 = vmatmul.mubr.f32.gmra.mrb[0].mxu0 %v2389
        %v2991 = vpop.f32.mrb[0].mxu0
        %v2992 = vadd.f32 0.0, %v2991
        %v2993 = vpop.f32.mrb[0].mxu0
        %2994 = vmatprep.mubr.f32.mxu0 %v2511
        %2995 = vmatmul.mubr.f32.gmra.mrb[0].mxu0 %v2391
        %v2996 = vpop.f32.mrb[0].mxu0
        %v2997 = vadd.f32 0.0, %v2996
        %v2998 = vpop.f32.mrb[0].mxu0
        %2999 = vmatprep.mubr.f32.mxu0 %v2513
        %3000 = vmatmul.mubr.f32.gmra.mrb[0].mxu0 %v2392
        %v3001 = vpop.f32.mrb[0].mxu0
        %v3002 = vadd.f32 0.0, %v3001
        %v3003 = vpop.f32.mrb[0].mxu0
        %3004 = vmatprep.mubr.f32.mxu0 %v2516
        %3005 = vmatmul.mubr.f32.gmra.mrb[0].mxu0 %v2394
        %v3006 = vpop.f32.mrb[0].mxu0
        %v3007 = vadd.f32 0.0, %v3006
        %v3008 = vpop.f32.mrb[0].mxu0
        %3009 = vmatprep.mubr.f32.mxu0 %v2518
        %3010 = vmatmul.mubr.f32.gmra.mrb[0].mxu0 %v2395
        %v3011 = vpop.f32.mrb[0].mxu0
        %v3012 = vadd.f32 0.0, %v3011
        %v3013 = vpop.f32.mrb[0].mxu0
        %3014 = vmatprep.mubr.f32.mxu0 %v2521
        %3015 = vmatmul.mubr.f32.gmra.mrb[0].mxu0 %v2397
        %v3016 = vpop.f32.mrb[0].mxu0
        %v3017 = vadd.f32 0.0, %v3016
        %v3018 = vpop.f32.mrb[0].mxu0
        %3019 = vmatprep.mubr.f32.mxu0 %v2523
        %3020 = vmatmul.mubr.f32.gmra.mrb[0].mxu0 %v2398
        %v3021 = vpop.f32.mrb[0].mxu0
        %v3022 = vadd.f32 0.0, %v3021
        %v3023 = vpop.f32.mrb[0].mxu0
        %3024 = vmatprep.mubr.f32.mxu0 %v2526
        %3025 = vmatmul.mubr.f32.gmra.mrb[0].mxu0 %v2400
        %v3026 = vpop.f32.mrb[0].mxu0
        %v3027 = vadd.f32 0.0, %v3026
        %v3028 = vpop.f32.mrb[0].mxu0
        %3029 = vmatprep.mubr.f32.mxu0 %v2528
        %3030 = vmatmul.mubr.f32.gmra.mrb[0].mxu0 %v2401
        %v3031 = vpop.f32.mrb[0].mxu0
        %v3032 = vadd.f32 0.0, %v3031
        %v3033 = vpop.f32.mrb[0].mxu0
        %3034 = vmatprep.mubr.f32.mxu0 %v2531
        %3035 = vmatmul.mubr.f32.gmra.mrb[0].mxu0 %v2403
        %v3036 = vpop.f32.mrb[0].mxu0
        %v3037 = vadd.f32 0.0, %v3036
        %v3038 = vpop.f32.mrb[0].mxu0
        %3039 = vmatprep.mubr.f32.mxu0 %v2533
        %3040 = vmatmul.mubr.f32.gmra.mrb[0].mxu0 %v2404
        %v3041 = vpop.f32.mrb[0].mxu0
        %v3042 = vadd.f32 0.0, %v3041
        %v3043 = vpop.f32.mrb[0].mxu0
        %3044 = vmatprep.mubr.f32.mxu0 %v2536
        %3045 = vmatmul.mubr.f32.gmra.mrb[0].mxu0 %v2406
        %v3046 = vpop.f32.mrb[0].mxu0
        %v3047 = vadd.f32 0.0, %v3046
        %v3048 = vpop.f32.mrb[0].mxu0
        %3049 = vmatprep.mubr.f32.mxu0 %v2538
        %3050 = vmatmul.mubr.f32.gmra.mrb[0].mxu0 %v2407
        %v3051 = vpop.f32.mrb[0].mxu0
        %v3052 = vadd.f32 0.0, %v3051
        %v3053 = vpop.f32.mrb[0].mxu0
        %3054 = vmatprep.mubr.f32.mxu0 %v2541
        %3055 = vmatmul.mubr.f32.gmra.mrb[0].mxu0 %v2409
        %v3056 = vpop.f32.mrb[0].mxu0
        %v3057 = vadd.f32 0.0, %v3056
        %v3058 = vpop.f32.mrb[0].mxu0
        %3059 = vmatprep.mubr.f32.mxu0 %v2543
        %3060 = vmatmul.mubr.f32.gmra.mrb[0].mxu0 %v2410
        %v3061 = vpop.f32.mrb[0].mxu0
        %v3062 = vadd.f32 0.0, %v3061
        %v3063 = vpop.f32.mrb[0].mxu0
        %3064 = vmatprep.mubr.f32.mxu0 %v2546
        %3065 = vmatmul.mubr.f32.gmra.mrb[0].mxu0 %v2412
        %v3066 = vpop.f32.mrb[0].mxu0
        %v3067 = vadd.f32 0.0, %v3066
        %v3068 = vpop.f32.mrb[0].mxu0
        %3069 = vmatprep.mubr.f32.mxu0 %v2548
        %3070 = vmatmul.mubr.f32.gmra.mrb[0].mxu0 %v2413
        %v3071 = vpop.f32.mrb[0].mxu0
        %v3072 = vadd.f32 0.0, %v3071
        %v3073 = vpop.f32.mrb[0].mxu0
        %3074 = vmatprep.mubr.f32.mxu0 %v2551
        %3075 = vmatmul.mubr.f32.gmra.mrb[0].mxu0 %v2415
        %v3076 = vpop.f32.mrb[0].mxu0
        %v3077 = vadd.f32 0.0, %v3076
        %v3078 = vpop.f32.mrb[0].mxu0
        %3079 = vmatprep.mubr.f32.mxu0 %v2553
        %3080 = vmatmul.mubr.f32.gmra.mrb[0].mxu0 %v2416
        %v3081 = vpop.f32.mrb[0].mxu0
        %v3082 = vadd.f32 0.0, %v3081
        %v3083 = vpop.f32.mrb[0].mxu0
        %3084 = vmatprep.mubr.f32.mxu0 %v2556
        %3085 = vmatmul.mubr.f32.gmra.mrb[0].mxu0 %v2418
        %v3086 = vpop.f32.mrb[0].mxu0
        %v3087 = vadd.f32 0.0, %v3086
        %v3088 = vpop.f32.mrb[0].mxu0
        %3089 = vmatprep.mubr.f32.mxu0 %v2558
        %3090 = vmatmul.mubr.f32.gmra.mrb[0].mxu0 %v2419
        %v3091 = vpop.f32.mrb[0].mxu0
        %v3092 = vadd.f32 0.0, %v3091
        %v3093 = vpop.f32.mrb[0].mxu0
        %3094 = vmatprep.mubr.f32.mxu0 %v2561
        %3095 = vmatmul.mubr.f32.gmra.mrb[0].mxu0 %v2421
        %v3096 = vpop.f32.mrb[0].mxu0
        %v3097 = vadd.f32 0.0, %v3096
        %v3098 = vpop.f32.mrb[0].mxu0
        %3099 = vmatprep.mubr.f32.mxu0 %v2563
        %3100 = vmatmul.mubr.f32.gmra.mrb[0].mxu0 %v2422
        %v3101 = vpop.f32.mrb[0].mxu0
        %v3102 = vadd.f32 0.0, %v3101
        %v3103 = vpop.f32.mrb[0].mxu0
        %3104 = vdwg.mxu0
        %3105 = vmatprep.subr.mxu0 0.0
        %3106 = vmatpush1.msra.mxu0 %v2768
        %3107 = vmatprep.subr.mxu0 0.0
        %3108 = vmatpush1.msra.mxu0 %v2769
        %3109 = vmatprep.subr.mxu0 0.0
        %3110 = vmatpush1.msra.mxu0 %v2770
        %3111 = vmatprep.subr.mxu0 0.0
        %3112 = vmatpush1.msra.mxu0 %v2771
        %3113 = vmatprep.subr.mxu0 0.0
        %3114 = vmatpush1.msra.mxu0 %v2772
        %3115 = vmatprep.subr.mxu0 0.0
        %3116 = vmatpush1.msra.mxu0 %v2773
        %3117 = vmatprep.subr.mxu0 0.0
        %3118 = vmatpush1.msra.mxu0 %v2774
        %3119 = vmatprep.subr.mxu0 0.0
        %3120 = vmatpush1.msra.mxu0 %v2775
        %3121 = vmatprep.subr.mxu0 0.0
        %3122 = vmatpush1.msra.mxu0 %v2776
        %3123 = vmatprep.subr.mxu0 0.0
        %3124 = vmatpush1.msra.mxu0 %v2777
        %3125 = vmatprep.subr.mxu0 0.0
        %3126 = vmatpush1.msra.mxu0 %v2778
        %3127 = vmatprep.subr.mxu0 0.0
        %3128 = vmatpush1.msra.mxu0 %v2779
        %3129 = vmatprep.subr.mxu0 0.0
        %3130 = vmatpush1.msra.mxu0 %v2780
        %3131 = vmatprep.subr.mxu0 0.0
        %3132 = vmatpush1.msra.mxu0 %v2781
        %3133 = vmatprep.subr.mxu0 0.0
        %3134 = vmatpush1.msra.mxu0 %v2782
        %3135 = vmatprep.subr.mxu0 0.0
        %3136 = vmatpush1.msra.mxu0 %v2783
        %3137 = vmatprep.subr.mxu0 0.0
        %3138 = vmatpush1.msra.mxu0 %v2784
        %3139 = vmatprep.subr.mxu0 0.0
        %3140 = vmatpush1.msra.mxu0 %v2785
        %3141 = vmatprep.subr.mxu0 0.0
        %3142 = vmatpush1.msra.mxu0 %v2786
        %3143 = vmatprep.subr.mxu0 0.0
        %3144 = vmatpush1.msra.mxu0 %v2787
        %3145 = vmatprep.subr.mxu0 0.0
        %3146 = vmatpush1.msra.mxu0 %v2788
        %3147 = vmatprep.subr.mxu0 0.0
        %3148 = vmatpush1.msra.mxu0 %v2789
        %3149 = vmatprep.subr.mxu0 0.0
        %3150 = vmatpush1.msra.mxu0 %v2790
        %3151 = vmatprep.subr.mxu0 0.0
        %3152 = vmatpush1.msra.mxu0 %v2791
        %3153 = vmatprep.subr.mxu0 0.0
        %3154 = vmatpush1.msra.mxu0 %v2792
        %3155 = vmatprep.subr.mxu0 0.0
        %3156 = vmatpush1.msra.mxu0 %v2793
        %3157 = vmatprep.subr.mxu0 0.0
        %3158 = vmatpush1.msra.mxu0 %v2794
        %3159 = vmatprep.subr.mxu0 0.0
        %3160 = vmatpush1.msra.mxu0 %v2795
        %3161 = vmatprep.subr.mxu0 0.0
        %3162 = vmatpush1.msra.mxu0 %v2796
        %3163 = vmatprep.subr.mxu0 0.0
        %3164 = vmatpush1.msra.mxu0 %v2797
        %3165 = vmatprep.subr.mxu0 0.0
        %3166 = vmatpush1.msra.mxu0 %v2798
        %3167 = vmatprep.subr.mxu0 0.0
        %3168 = vmatpush1.msra.mxu0 %v2799
        %3169 = vmatprep.mubr.f32.mxu0 %v2379
        %3170 = vmatmul.mubr.f32.gmra.mrb[0].mxu0 %v2612
        %v3171 = vpop.f32.mrb[0].mxu0
        %v3172 = vadd.f32 %v2947, %v3171
        %v3173 = vpop.f32.mrb[0].mxu0
        %3174 = vmatprep.mubr.f32.mxu0 %v2380
        %3175 = vmatmul.mubr.f32.gmra.mrb[0].mxu0 %v2614
        %v3176 = vpop.f32.mrb[0].mxu0
        %v3177 = vadd.f32 %v2952, %v3176
        %v3178 = vpop.f32.mrb[0].mxu0
        %3179 = vmatprep.mubr.f32.mxu0 %v2382
        %3180 = vmatmul.mubr.f32.gmra.mrb[0].mxu0 %v2617
        %v3181 = vpop.f32.mrb[0].mxu0
        %v3182 = vadd.f32 %v2957, %v3181
        %v3183 = vpop.f32.mrb[0].mxu0
        %3184 = vmatprep.mubr.f32.mxu0 %v2383
        %3185 = vmatmul.mubr.f32.gmra.mrb[0].mxu0 %v2619
        %v3186 = vpop.f32.mrb[0].mxu0
        %v3187 = vadd.f32 %v2962, %v3186
        %v3188 = vpop.f32.mrb[0].mxu0
        %3189 = vmatprep.mubr.f32.mxu0 %v2385
        %3190 = vmatmul.mubr.f32.gmra.mrb[0].mxu0 %v2622
        %v3191 = vpop.f32.mrb[0].mxu0
        %v3192 = vadd.f32 %v2967, %v3191
        %v3193 = vpop.f32.mrb[0].mxu0
        %3194 = vmatprep.mubr.f32.mxu0 %v2386
        %3195 = vmatmul.mubr.f32.gmra.mrb[0].mxu0 %v2624
        %v3196 = vpop.f32.mrb[0].mxu0
        %v3197 = vadd.f32 %v2972, %v3196
        %v3198 = vpop.f32.mrb[0].mxu0
        %3199 = vmatprep.mubr.f32.mxu0 %v2388
        %3200 = vmatmul.mubr.f32.gmra.mrb[0].mxu0 %v2627
        %v3201 = vpop.f32.mrb[0].mxu0
        %v3202 = vadd.f32 %v2977, %v3201
        %v3203 = vpop.f32.mrb[0].mxu0
        %3204 = vmatprep.mubr.f32.mxu0 %v2389
        %3205 = vmatmul.mubr.f32.gmra.mrb[0].mxu0 %v2629
        %v3206 = vpop.f32.mrb[0].mxu0
        %v3207 = vadd.f32 %v2982, %v3206
        %v3208 = vpop.f32.mrb[0].mxu0
        %3209 = vmatprep.mubr.f32.mxu0 %v2391
        %3210 = vmatmul.mubr.f32.gmra.mrb[0].mxu0 %v2632
        %v3211 = vpop.f32.mrb[0].mxu0
        %v3212 = vadd.f32 %v2987, %v3211
        %v3213 = vpop.f32.mrb[0].mxu0
        %3214 = vmatprep.mubr.f32.mxu0 %v2392
        %3215 = vmatmul.mubr.f32.gmra.mrb[0].mxu0 %v2634
        %v3216 = vpop.f32.mrb[0].mxu0
        %v3217 = vadd.f32 %v2992, %v3216
        %v3218 = vpop.f32.mrb[0].mxu0
        %3219 = vmatprep.mubr.f32.mxu0 %v2394
        %3220 = vmatmul.mubr.f32.gmra.mrb[0].mxu0 %v2637
        %v3221 = vpop.f32.mrb[0].mxu0
        %v3222 = vadd.f32 %v2997, %v3221
        %v3223 = vpop.f32.mrb[0].mxu0
        %3224 = vmatprep.mubr.f32.mxu0 %v2395
        %3225 = vmatmul.mubr.f32.gmra.mrb[0].mxu0 %v2639
        %v3226 = vpop.f32.mrb[0].mxu0
        %v3227 = vadd.f32 %v3002, %v3226
        %v3228 = vpop.f32.mrb[0].mxu0
        %3229 = vmatprep.mubr.f32.mxu0 %v2397
        %3230 = vmatmul.mubr.f32.gmra.mrb[0].mxu0 %v2642
        %v3231 = vpop.f32.mrb[0].mxu0
        %v3232 = vadd.f32 %v3007, %v3231
        %v3233 = vpop.f32.mrb[0].mxu0
        %3234 = vmatprep.mubr.f32.mxu0 %v2398
        %3235 = vmatmul.mubr.f32.gmra.mrb[0].mxu0 %v2644
        %v3236 = vpop.f32.mrb[0].mxu0
        %v3237 = vadd.f32 %v3012, %v3236
        %v3238 = vpop.f32.mrb[0].mxu0
        %3239 = vmatprep.mubr.f32.mxu0 %v2400
        %3240 = vmatmul.mubr.f32.gmra.mrb[0].mxu0 %v2647
        %v3241 = vpop.f32.mrb[0].mxu0
        %v3242 = vadd.f32 %v3017, %v3241
        %v3243 = vpop.f32.mrb[0].mxu0
        %3244 = vmatprep.mubr.f32.mxu0 %v2401
        %3245 = vmatmul.mubr.f32.gmra.mrb[0].mxu0 %v2649
        %v3246 = vpop.f32.mrb[0].mxu0
        %v3247 = vadd.f32 %v3022, %v3246
        %v3248 = vpop.f32.mrb[0].mxu0
        %3249 = vmatprep.mubr.f32.mxu0 %v2403
        %3250 = vmatmul.mubr.f32.gmra.mrb[0].mxu0 %v2652
        %v3251 = vpop.f32.mrb[0].mxu0
        %v3252 = vadd.f32 %v3027, %v3251
        %v3253 = vpop.f32.mrb[0].mxu0
        %3254 = vmatprep.mubr.f32.mxu0 %v2404
        %3255 = vmatmul.mubr.f32.gmra.mrb[0].mxu0 %v2654
        %v3256 = vpop.f32.mrb[0].mxu0
        %v3257 = vadd.f32 %v3032, %v3256
        %v3258 = vpop.f32.mrb[0].mxu0
        %3259 = vmatprep.mubr.f32.mxu0 %v2406
        %3260 = vmatmul.mubr.f32.gmra.mrb[0].mxu0 %v2657
        %v3261 = vpop.f32.mrb[0].mxu0
        %v3262 = vadd.f32 %v3037, %v3261
        %v3263 = vpop.f32.mrb[0].mxu0
        %3264 = vmatprep.mubr.f32.mxu0 %v2407
        %3265 = vmatmul.mubr.f32.gmra.mrb[0].mxu0 %v2659
        %v3266 = vpop.f32.mrb[0].mxu0
        %v3267 = vadd.f32 %v3042, %v3266
        %v3268 = vpop.f32.mrb[0].mxu0
        %3269 = vmatprep.mubr.f32.mxu0 %v2409
        %3270 = vmatmul.mubr.f32.gmra.mrb[0].mxu0 %v2662
        %v3271 = vpop.f32.mrb[0].mxu0
        %v3272 = vadd.f32 %v3047, %v3271
        %v3273 = vpop.f32.mrb[0].mxu0
        %3274 = vmatprep.mubr.f32.mxu0 %v2410
        %3275 = vmatmul.mubr.f32.gmra.mrb[0].mxu0 %v2664
        %v3276 = vpop.f32.mrb[0].mxu0
        %v3277 = vadd.f32 %v3052, %v3276
        %v3278 = vpop.f32.mrb[0].mxu0
        %3279 = vmatprep.mubr.f32.mxu0 %v2412
        %3280 = vmatmul.mubr.f32.gmra.mrb[0].mxu0 %v2667
        %v3281 = vpop.f32.mrb[0].mxu0
        %v3282 = vadd.f32 %v3057, %v3281
        %v3283 = vpop.f32.mrb[0].mxu0
        %3284 = vmatprep.mubr.f32.mxu0 %v2413
        %3285 = vmatmul.mubr.f32.gmra.mrb[0].mxu0 %v2669
        %v3286 = vpop.f32.mrb[0].mxu0
        %v3287 = vadd.f32 %v3062, %v3286
        %v3288 = vpop.f32.mrb[0].mxu0
        %3289 = vmatprep.mubr.f32.mxu0 %v2415
        %3290 = vmatmul.mubr.f32.gmra.mrb[0].mxu0 %v2672
        %v3291 = vpop.f32.mrb[0].mxu0
        %v3292 = vadd.f32 %v3067, %v3291
        %v3293 = vpop.f32.mrb[0].mxu0
        %3294 = vmatprep.mubr.f32.mxu0 %v2416
        %3295 = vmatmul.mubr.f32.gmra.mrb[0].mxu0 %v2674
        %v3296 = vpop.f32.mrb[0].mxu0
        %v3297 = vadd.f32 %v3072, %v3296
        %v3298 = vpop.f32.mrb[0].mxu0
        %3299 = vmatprep.mubr.f32.mxu0 %v2418
        %3300 = vmatmul.mubr.f32.gmra.mrb[0].mxu0 %v2677
        %v3301 = vpop.f32.mrb[0].mxu0
        %v3302 = vadd.f32 %v3077, %v3301
        %v3303 = vpop.f32.mrb[0].mxu0
        %3304 = vmatprep.mubr.f32.mxu0 %v2419
        %3305 = vmatmul.mubr.f32.gmra.mrb[0].mxu0 %v2679
        %v3306 = vpop.f32.mrb[0].mxu0
        %v3307 = vadd.f32 %v3082, %v3306
        %v3308 = vpop.f32.mrb[0].mxu0
        %3309 = vmatprep.mubr.f32.mxu0 %v2421
        %3310 = vmatmul.mubr.f32.gmra.mrb[0].mxu0 %v2682
        %v3311 = vpop.f32.mrb[0].mxu0
        %v3312 = vadd.f32 %v3087, %v3311
        %v3313 = vpop.f32.mrb[0].mxu0
        %3314 = vmatprep.mubr.f32.mxu0 %v2422
        %3315 = vmatmul.mubr.f32.gmra.mrb[0].mxu0 %v2684
        %v3316 = vpop.f32.mrb[0].mxu0
        %v3317 = vadd.f32 %v3092, %v3316
        %v3318 = vpop.f32.mrb[0].mxu0
        %3319 = vmatprep.mubr.f32.mxu0 %v2424
        %3320 = vmatmul.mubr.f32.gmra.mrb[0].mxu0 %v2687
        %v3321 = vpop.f32.mrb[0].mxu0
        %v3322 = vadd.f32 %v3097, %v3321
        %v3323 = vpop.f32.mrb[0].mxu0
        %3324 = vmatprep.mubr.f32.mxu0 %v2425
        %3325 = vmatmul.mubr.f32.gmra.mrb[0].mxu0 %v2689
        %v3326 = vpop.f32.mrb[0].mxu0
        %v3327 = vadd.f32 %v3102, %v3326
        %v3328 = vpop.f32.mrb[0].mxu0
        %3329 = vdwg.mxu0
        %3330 = vmatprep.subr.mxu0 0.0
        %3331 = vmatpush1.msra.mxu0 %v2800
        %3332 = vmatprep.subr.mxu0 0.0
        %3333 = vmatpush1.msra.mxu0 %v2801
        %3334 = vmatprep.subr.mxu0 0.0
        %3335 = vmatpush1.msra.mxu0 %v2802
        %3336 = vmatprep.subr.mxu0 0.0
        %3337 = vmatpush1.msra.mxu0 %v2803
        %3338 = vmatprep.subr.mxu0 0.0
        %3339 = vmatpush1.msra.mxu0 %v2804
        %3340 = vmatprep.subr.mxu0 0.0
        %3341 = vmatpush1.msra.mxu0 %v2805
        %3342 = vmatprep.subr.mxu0 0.0
        %3343 = vmatpush1.msra.mxu0 %v2806
        %3344 = vmatprep.subr.mxu0 0.0
        %3345 = vmatpush1.msra.mxu0 %v2807
        %3346 = vmatprep.subr.mxu0 0.0
        %3347 = vmatpush1.msra.mxu0 %v2808
        %3348 = vmatprep.subr.mxu0 0.0
        %3349 = vmatpush1.msra.mxu0 %v2809
        %3350 = vmatprep.subr.mxu0 0.0
        %3351 = vmatpush1.msra.mxu0 %v2810
        %3352 = vmatprep.subr.mxu0 0.0
        %3353 = vmatpush1.msra.mxu0 %v2811
        %3354 = vmatprep.subr.mxu0 0.0
        %3355 = vmatpush1.msra.mxu0 %v2812
        %3356 = vmatprep.subr.mxu0 0.0
        %3357 = vmatpush1.msra.mxu0 %v2813
        %3358 = vmatprep.subr.mxu0 0.0
        %3359 = vmatpush1.msra.mxu0 %v2814
        %3360 = vmatprep.subr.mxu0 0.0
        %3361 = vmatpush1.msra.mxu0 %v2815
        %3362 = vmatprep.subr.mxu0 0.0
        %3363 = vmatpush1.msra.mxu0 %v2816
        %3364 = vmatprep.subr.mxu0 0.0
        %3365 = vmatpush1.msra.mxu0 %v2817
        %3366 = vmatprep.subr.mxu0 0.0
        %3367 = vmatpush1.msra.mxu0 %v2818
        %3368 = vmatprep.subr.mxu0 0.0
        %3369 = vmatpush1.msra.mxu0 %v2819
        %3370 = vmatprep.subr.mxu0 0.0
        %3371 = vmatpush1.msra.mxu0 %v2820
        %3372 = vmatprep.subr.mxu0 0.0
        %3373 = vmatpush1.msra.mxu0 %v2821
        %3374 = vmatprep.subr.mxu0 0.0
        %3375 = vmatpush1.msra.mxu0 %v2822
        %3376 = vmatprep.subr.mxu0 0.0
        %3377 = vmatpush1.msra.mxu0 %v2823
        %3378 = vmatprep.subr.mxu0 0.0
        %3379 = vmatpush1.msra.mxu0 %v2824
        %3380 = vmatprep.subr.mxu0 0.0
        %3381 = vmatpush1.msra.mxu0 %v2825
        %3382 = vmatprep.subr.mxu0 0.0
        %3383 = vmatpush1.msra.mxu0 %v2826
        %3384 = vmatprep.subr.mxu0 0.0
        %3385 = vmatpush1.msra.mxu0 %v2827
        %3386 = vmatprep.subr.mxu0 0.0
        %3387 = vmatpush1.msra.mxu0 %v2828
        %3388 = vmatprep.subr.mxu0 0.0
        %3389 = vmatpush1.msra.mxu0 %v2829
        %3390 = vmatprep.subr.mxu0 0.0
        %3391 = vmatpush1.msra.mxu0 %v2830
        %3392 = vmatprep.subr.mxu0 0.0
        %3393 = vmatpush1.msra.mxu0 %v2831
        %3394 = vmatprep.mubr.f32.mxu0 %v2617
        %3395 = vmatmul.mubr.f32.gmra.mrb[0].mxu0 %v2491
        %v3396 = vpop.f32.mrb[0].mxu0
        %v3397 = vadd.f32 %v3172, %v3396
        %v3398 = vpop.f32.mrb[0].mxu0
        %3399 = vmatprep.mubr.f32.mxu0 %v2619
        %3400 = vmatmul.mubr.f32.gmra.mrb[0].mxu0 %v2493
        %v3401 = vpop.f32.mrb[0].mxu0
        %v3402 = vadd.f32 %v3177, %v3401
        %v3403 = vpop.f32.mrb[0].mxu0
        %3404 = vmatprep.mubr.f32.mxu0 %v2622
        %3405 = vmatmul.mubr.f32.gmra.mrb[0].mxu0 %v2496
        %v3406 = vpop.f32.mrb[0].mxu0
        %v3407 = vadd.f32 %v3182, %v3406
        %v3408 = vpop.f32.mrb[0].mxu0
        %3409 = vmatprep.mubr.f32.mxu0 %v2624
        %3410 = vmatmul.mubr.f32.gmra.mrb[0].mxu0 %v2498
        %v3411 = vpop.f32.mrb[0].mxu0
        %v3412 = vadd.f32 %v3187, %v3411
        %v3413 = vpop.f32.mrb[0].mxu0
        %3414 = vmatprep.mubr.f32.mxu0 %v2627
        %3415 = vmatmul.mubr.f32.gmra.mrb[0].mxu0 %v2501
        %v3416 = vpop.f32.mrb[0].mxu0
        %v3417 = vadd.f32 %v3192, %v3416
        %v3418 = vpop.f32.mrb[0].mxu0
        %3419 = vmatprep.mubr.f32.mxu0 %v2629
        %3420 = vmatmul.mubr.f32.gmra.mrb[0].mxu0 %v2503
        %v3421 = vpop.f32.mrb[0].mxu0
        %v3422 = vadd.f32 %v3197, %v3421
        %v3423 = vpop.f32.mrb[0].mxu0
        %3424 = vmatprep.mubr.f32.mxu0 %v2632
        %3425 = vmatmul.mubr.f32.gmra.mrb[0].mxu0 %v2506
        %v3426 = vpop.f32.mrb[0].mxu0
        %v3427 = vadd.f32 %v3202, %v3426
        %v3428 = vpop.f32.mrb[0].mxu0
        %3429 = vmatprep.mubr.f32.mxu0 %v2634
        %3430 = vmatmul.mubr.f32.gmra.mrb[0].mxu0 %v2508
        %v3431 = vpop.f32.mrb[0].mxu0
        %v3432 = vadd.f32 %v3207, %v3431
        %v3433 = vpop.f32.mrb[0].mxu0
        %3434 = vmatprep.mubr.f32.mxu0 %v2637
        %3435 = vmatmul.mubr.f32.gmra.mrb[0].mxu0 %v2511
        %v3436 = vpop.f32.mrb[0].mxu0
        %v3437 = vadd.f32 %v3212, %v3436
        %v3438 = vpop.f32.mrb[0].mxu0
        %3439 = vmatprep.mubr.f32.mxu0 %v2639
        %3440 = vmatmul.mubr.f32.gmra.mrb[0].mxu0 %v2513
        %v3441 = vpop.f32.mrb[0].mxu0
        %v3442 = vadd.f32 %v3217, %v3441
        %v3443 = vpop.f32.mrb[0].mxu0
        %3444 = vmatprep.mubr.f32.mxu0 %v2642
        %3445 = vmatmul.mubr.f32.gmra.mrb[0].mxu0 %v2516
        %v3446 = vpop.f32.mrb[0].mxu0
        %v3447 = vadd.f32 %v3222, %v3446
        %v3448 = vpop.f32.mrb[0].mxu0
        %3449 = vmatprep.mubr.f32.mxu0 %v2644
        %3450 = vmatmul.mubr.f32.gmra.mrb[0].mxu0 %v2518
        %v3451 = vpop.f32.mrb[0].mxu0
        %v3452 = vadd.f32 %v3227, %v3451
        %v3453 = vpop.f32.mrb[0].mxu0
        %3454 = vmatprep.mubr.f32.mxu0 %v2647
        %3455 = vmatmul.mubr.f32.gmra.mrb[0].mxu0 %v2521
        %v3456 = vpop.f32.mrb[0].mxu0
        %v3457 = vadd.f32 %v3232, %v3456
        %v3458 = vpop.f32.mrb[0].mxu0
        %3459 = vmatprep.mubr.f32.mxu0 %v2649
        %3460 = vmatmul.mubr.f32.gmra.mrb[0].mxu0 %v2523
        %v3461 = vpop.f32.mrb[0].mxu0
        %v3462 = vadd.f32 %v3237, %v3461
        %v3463 = vpop.f32.mrb[0].mxu0
        %3464 = vmatprep.mubr.f32.mxu0 %v2652
        %3465 = vmatmul.mubr.f32.gmra.mrb[0].mxu0 %v2526
        %v3466 = vpop.f32.mrb[0].mxu0
        %v3467 = vadd.f32 %v3242, %v3466
        %v3468 = vpop.f32.mrb[0].mxu0
        %3469 = vmatprep.mubr.f32.mxu0 %v2654
        %3470 = vmatmul.mubr.f32.gmra.mrb[0].mxu0 %v2528
        %v3471 = vpop.f32.mrb[0].mxu0
        %v3472 = vadd.f32 %v3247, %v3471
        %v3473 = vpop.f32.mrb[0].mxu0
        %3474 = vmatprep.mubr.f32.mxu0 %v2657
        %3475 = vmatmul.mubr.f32.gmra.mrb[0].mxu0 %v2531
        %v3476 = vpop.f32.mrb[0].mxu0
        %v3477 = vadd.f32 %v3252, %v3476
        %v3478 = vpop.f32.mrb[0].mxu0
        %3479 = vmatprep.mubr.f32.mxu0 %v2659
        %3480 = vmatmul.mubr.f32.gmra.mrb[0].mxu0 %v2533
        %v3481 = vpop.f32.mrb[0].mxu0
        %v3482 = vadd.f32 %v3257, %v3481
        %v3483 = vpop.f32.mrb[0].mxu0
        %3484 = vmatprep.mubr.f32.mxu0 %v2662
        %3485 = vmatmul.mubr.f32.gmra.mrb[0].mxu0 %v2536
        %v3486 = vpop.f32.mrb[0].mxu0
        %v3487 = vadd.f32 %v3262, %v3486
        %v3488 = vpop.f32.mrb[0].mxu0
        %3489 = vmatprep.mubr.f32.mxu0 %v2664
        %3490 = vmatmul.mubr.f32.gmra.mrb[0].mxu0 %v2538
        %v3491 = vpop.f32.mrb[0].mxu0
        %v3492 = vadd.f32 %v3267, %v3491
        %v3493 = vpop.f32.mrb[0].mxu0
        %3494 = vmatprep.mubr.f32.mxu0 %v2667
        %3495 = vmatmul.mubr.f32.gmra.mrb[0].mxu0 %v2541
        %v3496 = vpop.f32.mrb[0].mxu0
        %v3497 = vadd.f32 %v3272, %v3496
        %v3498 = vpop.f32.mrb[0].mxu0
        %3499 = vmatprep.mubr.f32.mxu0 %v2669
        %3500 = vmatmul.mubr.f32.gmra.mrb[0].mxu0 %v2543
        %v3501 = vpop.f32.mrb[0].mxu0
        %v3502 = vadd.f32 %v3277, %v3501
        %v3503 = vpop.f32.mrb[0].mxu0
        %3504 = vmatprep.mubr.f32.mxu0 %v2672
        %3505 = vmatmul.mubr.f32.gmra.mrb[0].mxu0 %v2546
        %v3506 = vpop.f32.mrb[0].mxu0
        %v3507 = vadd.f32 %v3282, %v3506
        %v3508 = vpop.f32.mrb[0].mxu0
        %3509 = vmatprep.mubr.f32.mxu0 %v2674
        %3510 = vmatmul.mubr.f32.gmra.mrb[0].mxu0 %v2548
        %v3511 = vpop.f32.mrb[0].mxu0
        %v3512 = vadd.f32 %v3287, %v3511
        %v3513 = vpop.f32.mrb[0].mxu0
        %3514 = vmatprep.mubr.f32.mxu0 %v2677
        %3515 = vmatmul.mubr.f32.gmra.mrb[0].mxu0 %v2551
        %v3516 = vpop.f32.mrb[0].mxu0
        %v3517 = vadd.f32 %v3292, %v3516
        %v3518 = vpop.f32.mrb[0].mxu0
        %3519 = vmatprep.mubr.f32.mxu0 %v2679
        %3520 = vmatmul.mubr.f32.gmra.mrb[0].mxu0 %v2553
        %v3521 = vpop.f32.mrb[0].mxu0
        %v3522 = vadd.f32 %v3297, %v3521
        %v3523 = vpop.f32.mrb[0].mxu0
        %3524 = vmatprep.mubr.f32.mxu0 %v2682
        %3525 = vmatmul.mubr.f32.gmra.mrb[0].mxu0 %v2556
        %v3526 = vpop.f32.mrb[0].mxu0
        %v3527 = vadd.f32 %v3302, %v3526
        %v3528 = vpop.f32.mrb[0].mxu0
        %3529 = vmatprep.mubr.f32.mxu0 %v2684
        %3530 = vmatmul.mubr.f32.gmra.mrb[0].mxu0 %v2558
        %v3531 = vpop.f32.mrb[0].mxu0
        %v3532 = vadd.f32 %v3307, %v3531
        %v3533 = vpop.f32.mrb[0].mxu0
        %3534 = vmatprep.mubr.f32.mxu0 %v2687
        %3535 = vmatmul.mubr.f32.gmra.mrb[0].mxu0 %v2561
        %v3536 = vpop.f32.mrb[0].mxu0
        %v3537 = vadd.f32 %v3312, %v3536
        %v3538 = vpop.f32.mrb[0].mxu0
        %3539 = vmatprep.mubr.f32.mxu0 %v2689
        %3540 = vmatmul.mubr.f32.gmra.mrb[0].mxu0 %v2563
        %v3541 = vpop.f32.mrb[0].mxu0
        %v3542 = vadd.f32 %v3317, %v3541
        %v3543 = vpop.f32.mrb[0].mxu0
        %3544 = vmatprep.mubr.f32.mxu0 %v2692
        %3545 = vmatmul.mubr.f32.gmra.mrb[0].mxu0 %v2566
        %v3546 = vpop.f32.mrb[0].mxu0
        %v3547 = vadd.f32 %v3322, %v3546
        %v3548 = vpop.f32.mrb[0].mxu0
        %3549 = vmatprep.mubr.f32.mxu0 %v2694
        %3550 = vmatmul.mubr.f32.gmra.mrb[0].mxu0 %v2568
        %v3551 = vpop.f32.mrb[0].mxu0
        %v3552 = vadd.f32 %v3327, %v3551
        %v3553 = vpop.f32.mrb[0].mxu0
        %3554 = vdwg.mxu0
        %3555 = vmatprep.subr.mxu0 0.0
        %3556 = vmatpush1.msra.mxu0 %v2832
        %3557 = vmatprep.subr.mxu0 0.0
        %3558 = vmatpush1.msra.mxu0 %v2833
        %3559 = vmatprep.subr.mxu0 0.0
        %3560 = vmatpush1.msra.mxu0 %v2834
        %3561 = vmatprep.subr.mxu0 0.0
        %3562 = vmatpush1.msra.mxu0 %v2835
        %3563 = vmatprep.subr.mxu0 0.0
        %3564 = vmatpush1.msra.mxu0 %v2836
        %3565 = vmatprep.subr.mxu0 0.0
        %3566 = vmatpush1.msra.mxu0 %v2837
        %3567 = vmatprep.subr.mxu0 0.0
        %3568 = vmatpush1.msra.mxu0 %v2838
        %3569 = vmatprep.subr.mxu0 0.0
        %3570 = vmatpush1.msra.mxu0 %v2839
        %3571 = vmatprep.subr.mxu0 0.0
        %3572 = vmatpush1.msra.mxu0 %v2840
        %3573 = vmatprep.subr.mxu0 0.0
        %3574 = vmatpush1.msra.mxu0 %v2841
        %3575 = vmatprep.subr.mxu0 0.0
        %3576 = vmatpush1.msra.mxu0 %v2842
        %3577 = vmatprep.subr.mxu0 0.0
        %3578 = vmatpush1.msra.mxu0 %v2843
        %3579 = vmatprep.subr.mxu0 0.0
        %3580 = vmatpush1.msra.mxu0 %v2844
        %3581 = vmatprep.subr.mxu0 0.0
        %3582 = vmatpush1.msra.mxu0 %v2845
        %3583 = vmatprep.subr.mxu0 0.0
        %3584 = vmatpush1.msra.mxu0 %v2846
        %3585 = vmatprep.subr.mxu0 0.0
        %3586 = vmatpush1.msra.mxu0 %v2847
        %3587 = vmatprep.subr.mxu0 0.0
        %3588 = vmatpush1.msra.mxu0 %v2848
        %3589 = vmatprep.subr.mxu0 0.0
        %3590 = vmatpush1.msra.mxu0 %v2849
        %3591 = vmatprep.subr.mxu0 0.0
        %3592 = vmatpush1.msra.mxu0 %v2850
        %3593 = vmatprep.subr.mxu0 0.0
        %3594 = vmatpush1.msra.mxu0 %v2851
        %3595 = vmatprep.subr.mxu0 0.0
        %3596 = vmatpush1.msra.mxu0 %v2852
        %3597 = vmatprep.subr.mxu0 0.0
        %3598 = vmatpush1.msra.mxu0 %v2853
        %3599 = vmatprep.subr.mxu0 0.0
        %3600 = vmatpush1.msra.mxu0 %v2854
        %3601 = vmatprep.subr.mxu0 0.0
        %3602 = vmatpush1.msra.mxu0 %v2855
        %3603 = vmatprep.subr.mxu0 0.0
        %3604 = vmatpush1.msra.mxu0 %v2856
        %3605 = vmatprep.subr.mxu0 0.0
        %3606 = vmatpush1.msra.mxu0 %v2857
        %3607 = vmatprep.subr.mxu0 0.0
        %3608 = vmatpush1.msra.mxu0 %v2858
        %3609 = vmatprep.subr.mxu0 0.0
        %3610 = vmatpush1.msra.mxu0 %v2859
        %3611 = vmatprep.subr.mxu0 0.0
        %3612 = vmatpush1.msra.mxu0 %v2860
        %3613 = vmatprep.subr.mxu0 0.0
        %3614 = vmatpush1.msra.mxu0 %v2861
        %3615 = vmatprep.subr.mxu0 0.0
        %3616 = vmatpush1.msra.mxu0 %v2862
        %3617 = vmatprep.subr.mxu0 0.0
        %3618 = vmatpush1.msra.mxu0 %v2863
        %3619 = vmatprep.mubr.f32.mxu0 %v2496
        %3620 = vmatmul.mubr.f32.gmra.mrb[0].mxu0 %v2382
        %v3621 = vpop.f32.mrb[0].mxu0
        %v3622 = vadd.f32 %v3397, %v3621
        %v3623 = vpop.f32.mrb[0].mxu0
        %3624 = vmatprep.mubr.f32.mxu0 %v2498
        %3625 = vmatmul.mubr.f32.gmra.mrb[0].mxu0 %v2383
        %v3626 = vpop.f32.mrb[0].mxu0
        %v3627 = vadd.f32 %v3402, %v3626
        %v3628 = vpop.f32.mrb[0].mxu0
        %3629 = vmatprep.mubr.f32.mxu0 %v2501
        %3630 = vmatmul.mubr.f32.gmra.mrb[0].mxu0 %v2385
        %v3631 = vpop.f32.mrb[0].mxu0
        %v3632 = vadd.f32 %v3407, %v3631
        %v3633 = vpop.f32.mrb[0].mxu0
        %3634 = vmatprep.mubr.f32.mxu0 %v2503
        %3635 = vmatmul.mubr.f32.gmra.mrb[0].mxu0 %v2386
        %v3636 = vpop.f32.mrb[0].mxu0
        %v3637 = vadd.f32 %v3412, %v3636
        %v3638 = vpop.f32.mrb[0].mxu0
        %3639 = vmatprep.mubr.f32.mxu0 %v2506
        %3640 = vmatmul.mubr.f32.gmra.mrb[0].mxu0 %v2388
        %v3641 = vpop.f32.mrb[0].mxu0
        %v3642 = vadd.f32 %v3417, %v3641
        %v3643 = vpop.f32.mrb[0].mxu0
        %3644 = vmatprep.mubr.f32.mxu0 %v2508
        %3645 = vmatmul.mubr.f32.gmra.mrb[0].mxu0 %v2389
        %v3646 = vpop.f32.mrb[0].mxu0
        %v3647 = vadd.f32 %v3422, %v3646
        %v3648 = vpop.f32.mrb[0].mxu0
        %3649 = vmatprep.mubr.f32.mxu0 %v2511
        %3650 = vmatmul.mubr.f32.gmra.mrb[0].mxu0 %v2391
        %v3651 = vpop.f32.mrb[0].mxu0
        %v3652 = vadd.f32 %v3427, %v3651
        %v3653 = vpop.f32.mrb[0].mxu0
        %3654 = vmatprep.mubr.f32.mxu0 %v2513
        %3655 = vmatmul.mubr.f32.gmra.mrb[0].mxu0 %v2392
        %v3656 = vpop.f32.mrb[0].mxu0
        %v3657 = vadd.f32 %v3432, %v3656
        %v3658 = vpop.f32.mrb[0].mxu0
        %3659 = vmatprep.mubr.f32.mxu0 %v2516
        %3660 = vmatmul.mubr.f32.gmra.mrb[0].mxu0 %v2394
        %v3661 = vpop.f32.mrb[0].mxu0
        %v3662 = vadd.f32 %v3437, %v3661
        %v3663 = vpop.f32.mrb[0].mxu0
        %3664 = vmatprep.mubr.f32.mxu0 %v2518
        %3665 = vmatmul.mubr.f32.gmra.mrb[0].mxu0 %v2395
        %v3666 = vpop.f32.mrb[0].mxu0
        %v3667 = vadd.f32 %v3442, %v3666
        %v3668 = vpop.f32.mrb[0].mxu0
        %3669 = vmatprep.mubr.f32.mxu0 %v2521
        %3670 = vmatmul.mubr.f32.gmra.mrb[0].mxu0 %v2397
        %v3671 = vpop.f32.mrb[0].mxu0
        %v3672 = vadd.f32 %v3447, %v3671
        %v3673 = vpop.f32.mrb[0].mxu0
        %3674 = vmatprep.mubr.f32.mxu0 %v2523
        %3675 = vmatmul.mubr.f32.gmra.mrb[0].mxu0 %v2398
        %v3676 = vpop.f32.mrb[0].mxu0
        %v3677 = vadd.f32 %v3452, %v3676
        %v3678 = vpop.f32.mrb[0].mxu0
        %3679 = vmatprep.mubr.f32.mxu0 %v2526
        %3680 = vmatmul.mubr.f32.gmra.mrb[0].mxu0 %v2400
        %v3681 = vpop.f32.mrb[0].mxu0
        %v3682 = vadd.f32 %v3457, %v3681
        %v3683 = vpop.f32.mrb[0].mxu0
        %3684 = vmatprep.mubr.f32.mxu0 %v2528
        %3685 = vmatmul.mubr.f32.gmra.mrb[0].mxu0 %v2401
        %v3686 = vpop.f32.mrb[0].mxu0
        %v3687 = vadd.f32 %v3462, %v3686
        %v3688 = vpop.f32.mrb[0].mxu0
        %3689 = vmatprep.mubr.f32.mxu0 %v2531
        %3690 = vmatmul.mubr.f32.gmra.mrb[0].mxu0 %v2403
        %v3691 = vpop.f32.mrb[0].mxu0
        %v3692 = vadd.f32 %v3467, %v3691
        %v3693 = vpop.f32.mrb[0].mxu0
        %3694 = vmatprep.mubr.f32.mxu0 %v2533
        %3695 = vmatmul.mubr.f32.gmra.mrb[0].mxu0 %v2404
        %v3696 = vpop.f32.mrb[0].mxu0
        %v3697 = vadd.f32 %v3472, %v3696
        %v3698 = vpop.f32.mrb[0].mxu0
        %3699 = vmatprep.mubr.f32.mxu0 %v2536
        %3700 = vmatmul.mubr.f32.gmra.mrb[0].mxu0 %v2406
        %v3701 = vpop.f32.mrb[0].mxu0
        %v3702 = vadd.f32 %v3477, %v3701
        %v3703 = vpop.f32.mrb[0].mxu0
        %3704 = vmatprep.mubr.f32.mxu0 %v2538
        %3705 = vmatmul.mubr.f32.gmra.mrb[0].mxu0 %v2407
        %v3706 = vpop.f32.mrb[0].mxu0
        %v3707 = vadd.f32 %v3482, %v3706
        %v3708 = vpop.f32.mrb[0].mxu0
        %3709 = vmatprep.mubr.f32.mxu0 %v2541
        %3710 = vmatmul.mubr.f32.gmra.mrb[0].mxu0 %v2409
        %v3711 = vpop.f32.mrb[0].mxu0
        %v3712 = vadd.f32 %v3487, %v3711
        %v3713 = vpop.f32.mrb[0].mxu0
        %3714 = vmatprep.mubr.f32.mxu0 %v2543
        %3715 = vmatmul.mubr.f32.gmra.mrb[0].mxu0 %v2410
        %v3716 = vpop.f32.mrb[0].mxu0
        %v3717 = vadd.f32 %v3492, %v3716
        %v3718 = vpop.f32.mrb[0].mxu0
        %3719 = vmatprep.mubr.f32.mxu0 %v2546
        %3720 = vmatmul.mubr.f32.gmra.mrb[0].mxu0 %v2412
        %v3721 = vpop.f32.mrb[0].mxu0
        %v3722 = vadd.f32 %v3497, %v3721
        %v3723 = vpop.f32.mrb[0].mxu0
        %3724 = vmatprep.mubr.f32.mxu0 %v2548
        %3725 = vmatmul.mubr.f32.gmra.mrb[0].mxu0 %v2413
        %v3726 = vpop.f32.mrb[0].mxu0
        %v3727 = vadd.f32 %v3502, %v3726
        %v3728 = vpop.f32.mrb[0].mxu0
        %3729 = vmatprep.mubr.f32.mxu0 %v2551
        %3730 = vmatmul.mubr.f32.gmra.mrb[0].mxu0 %v2415
        %v3731 = vpop.f32.mrb[0].mxu0
        %v3732 = vadd.f32 %v3507, %v3731
        %v3733 = vpop.f32.mrb[0].mxu0
        %3734 = vmatprep.mubr.f32.mxu0 %v2553
        %3735 = vmatmul.mubr.f32.gmra.mrb[0].mxu0 %v2416
        %v3736 = vpop.f32.mrb[0].mxu0
        %v3737 = vadd.f32 %v3512, %v3736
        %v3738 = vpop.f32.mrb[0].mxu0
        %3739 = vmatprep.mubr.f32.mxu0 %v2556
        %3740 = vmatmul.mubr.f32.gmra.mrb[0].mxu0 %v2418
        %v3741 = vpop.f32.mrb[0].mxu0
        %v3742 = vadd.f32 %v3517, %v3741
        %v3743 = vpop.f32.mrb[0].mxu0
        %3744 = vmatprep.mubr.f32.mxu0 %v2558
        %3745 = vmatmul.mubr.f32.gmra.mrb[0].mxu0 %v2419
        %v3746 = vpop.f32.mrb[0].mxu0
        %v3747 = vadd.f32 %v3522, %v3746
        %v3748 = vpop.f32.mrb[0].mxu0
        %3749 = vmatprep.mubr.f32.mxu0 %v2561
        %3750 = vmatmul.mubr.f32.gmra.mrb[0].mxu0 %v2421
        %v3751 = vpop.f32.mrb[0].mxu0
        %v3752 = vadd.f32 %v3527, %v3751
        %v3753 = vpop.f32.mrb[0].mxu0
        %3754 = vmatprep.mubr.f32.mxu0 %v2563
        %3755 = vmatmul.mubr.f32.gmra.mrb[0].mxu0 %v2422
        %v3756 = vpop.f32.mrb[0].mxu0
        %v3757 = vadd.f32 %v3532, %v3756
        %v3758 = vpop.f32.mrb[0].mxu0
        %3759 = vmatprep.mubr.f32.mxu0 %v2566
        %3760 = vmatmul.mubr.f32.gmra.mrb[0].mxu0 %v2424
        %v3761 = vpop.f32.mrb[0].mxu0
        %v3762 = vadd.f32 %v3537, %v3761
        %v3763 = vpop.f32.mrb[0].mxu0
        %3764 = vmatprep.mubr.f32.mxu0 %v2568
        %3765 = vmatmul.mubr.f32.gmra.mrb[0].mxu0 %v2425
        %v3766 = vpop.f32.mrb[0].mxu0
        %v3767 = vadd.f32 %v3542, %v3766
        %v3768 = vpop.f32.mrb[0].mxu0
        %3769 = vmatprep.mubr.f32.mxu0 %v2571
        %3770 = vmatmul.mubr.f32.gmra.mrb[0].mxu0 %v2427
        %v3771 = vpop.f32.mrb[0].mxu0
        %v3772 = vadd.f32 %v3547, %v3771
        %v3773 = vpop.f32.mrb[0].mxu0
        %3774 = vmatprep.mubr.f32.mxu0 %v2573
        %3775 = vmatmul.mubr.f32.gmra.mrb[0].mxu0 %v2428
        %v3776 = vpop.f32.mrb[0].mxu0
        %v3777 = vadd.f32 %v3552, %v3776
        %v3778 = vpop.f32.mrb[0].mxu0
        %3779 = vdwg.mxu0
        %3780 = vmatprep.subr.mxu0 0.0
        %3781 = vmatpush1.msra.mxu0 %v2864
        %3782 = vmatprep.subr.mxu0 0.0
        %3783 = vmatpush1.msra.mxu0 %v2865
        %3784 = vmatprep.subr.mxu0 0.0
        %3785 = vmatpush1.msra.mxu0 %v2866
        %3786 = vmatprep.subr.mxu0 0.0
        %3787 = vmatpush1.msra.mxu0 %v2867
        %3788 = vmatprep.subr.mxu0 0.0
        %3789 = vmatpush1.msra.mxu0 %v2868
        %3790 = vmatprep.subr.mxu0 0.0
        %3791 = vmatpush1.msra.mxu0 %v2869
        %3792 = vmatprep.subr.mxu0 0.0
        %3793 = vmatpush1.msra.mxu0 %v2870
        %3794 = vmatprep.subr.mxu0 0.0
        %3795 = vmatpush1.msra.mxu0 %v2871
        %3796 = vmatprep.subr.mxu0 0.0
        %3797 = vmatpush1.msra.mxu0 %v2872
        %3798 = vmatprep.subr.mxu0 0.0
        %3799 = vmatpush1.msra.mxu0 %v2873
        %3800 = vmatprep.subr.mxu0 0.0
        %3801 = vmatpush1.msra.mxu0 %v2874
        %3802 = vmatprep.subr.mxu0 0.0
        %3803 = vmatpush1.msra.mxu0 %v2875
        %3804 = vmatprep.subr.mxu0 0.0
        %3805 = vmatpush1.msra.mxu0 %v2876
        %3806 = vmatprep.subr.mxu0 0.0
        %3807 = vmatpush1.msra.mxu0 %v2877
        %3808 = vmatprep.subr.mxu0 0.0
        %3809 = vmatpush1.msra.mxu0 %v2878
        %3810 = vmatprep.subr.mxu0 0.0
        %3811 = vmatpush1.msra.mxu0 %v2879
        %3812 = vmatprep.subr.mxu0 0.0
        %3813 = vmatpush1.msra.mxu0 0.0
        %3814 = vmatprep.subr.mxu0 0.0
        %3815 = vmatpush1.msra.mxu0 0.0
        %3816 = vmatprep.subr.mxu0 0.0
        %3817 = vmatpush1.msra.mxu0 0.0
        %3818 = vmatprep.subr.mxu0 0.0
        %3819 = vmatpush1.msra.mxu0 0.0
        %3820 = vmatprep.subr.mxu0 0.0
        %3821 = vmatpush1.msra.mxu0 0.0
        %3822 = vmatprep.subr.mxu0 0.0
        %3823 = vmatpush1.msra.mxu0 0.0
        %3824 = vmatprep.subr.mxu0 0.0
        %3825 = vmatpush1.msra.mxu0 0.0
        %3826 = vmatprep.subr.mxu0 0.0
        %3827 = vmatpush1.msra.mxu0 0.0
        %3828 = vmatprep.subr.mxu0 0.0
        %3829 = vmatpush1.msra.mxu0 0.0
        %3830 = vmatprep.subr.mxu0 0.0
        %3831 = vmatpush1.msra.mxu0 0.0
        %3832 = vmatprep.subr.mxu0 0.0
        %3833 = vmatpush1.msra.mxu0 0.0
        %3834 = vmatprep.subr.mxu0 0.0
        %3835 = vmatpush1.msra.mxu0 0.0
        %3836 = vmatprep.subr.mxu0 0.0
        %3837 = vmatpush1.msra.mxu0 0.0
        %3838 = vmatprep.subr.mxu0 0.0
        %3839 = vmatpush1.msra.mxu0 0.0
        %3840 = vmatprep.subr.mxu0 0.0
        %3841 = vmatpush1.msra.mxu0 0.0
        %3842 = vmatprep.subr.mxu0 0.0
        %3843 = vmatpush1.msra.mxu0 0.0
        %3844 = vmatprep.mubr.f32.mxu0 0.0
        %3845 = vmatmul.mubr.f32.gmra.mrb[0].mxu0 %v2622
        %v3846 = vpop.f32.mrb[0].mxu0
        %v3847 = vadd.f32 %v3622, %v3846
        %v3848 = vpop.f32.mrb[0].mxu0
        %3849 = vmatprep.mubr.f32.mxu0 0.0
        %3850 = vmatmul.mubr.f32.gmra.mrb[0].mxu0 %v2624
        %v3851 = vpop.f32.mrb[0].mxu0
        %v3852 = vadd.f32 %v3627, %v3851
        %v3853 = vpop.f32.mrb[0].mxu0
        %3854 = vmatprep.mubr.f32.mxu0 0.0
        %3855 = vmatmul.mubr.f32.gmra.mrb[0].mxu0 %v2627
        %v3856 = vpop.f32.mrb[0].mxu0
        %v3857 = vadd.f32 %v3632, %v3856
        %v3858 = vpop.f32.mrb[0].mxu0
        %3859 = vmatprep.mubr.f32.mxu0 0.0
        %3860 = vmatmul.mubr.f32.gmra.mrb[0].mxu0 %v2629
        %v3861 = vpop.f32.mrb[0].mxu0
        %v3862 = vadd.f32 %v3637, %v3861
        %v3863 = vpop.f32.mrb[0].mxu0
        %3864 = vmatprep.mubr.f32.mxu0 0.0
        %3865 = vmatmul.mubr.f32.gmra.mrb[0].mxu0 %v2632
        %v3866 = vpop.f32.mrb[0].mxu0
        %v3867 = vadd.f32 %v3642, %v3866
        %v3868 = vpop.f32.mrb[0].mxu0
        %3869 = vmatprep.mubr.f32.mxu0 0.0
        %3870 = vmatmul.mubr.f32.gmra.mrb[0].mxu0 %v2634
        %v3871 = vpop.f32.mrb[0].mxu0
        %v3872 = vadd.f32 %v3647, %v3871
        %v3873 = vpop.f32.mrb[0].mxu0
        %3874 = vmatprep.mubr.f32.mxu0 0.0
        %3875 = vmatmul.mubr.f32.gmra.mrb[0].mxu0 %v2637
        %v3876 = vpop.f32.mrb[0].mxu0
        %v3877 = vadd.f32 %v3652, %v3876
        %v3878 = vpop.f32.mrb[0].mxu0
        %3879 = vmatprep.mubr.f32.mxu0 0.0
        %3880 = vmatmul.mubr.f32.gmra.mrb[0].mxu0 %v2639
        %v3881 = vpop.f32.mrb[0].mxu0
        %v3882 = vadd.f32 %v3657, %v3881
        %v3883 = vpop.f32.mrb[0].mxu0
        %3884 = vmatprep.mubr.f32.mxu0 0.0
        %3885 = vmatmul.mubr.f32.gmra.mrb[0].mxu0 %v2642
        %v3886 = vpop.f32.mrb[0].mxu0
        %v3887 = vadd.f32 %v3662, %v3886
        %v3888 = vpop.f32.mrb[0].mxu0
        %3889 = vmatprep.mubr.f32.mxu0 0.0
        %3890 = vmatmul.mubr.f32.gmra.mrb[0].mxu0 %v2644
        %v3891 = vpop.f32.mrb[0].mxu0
        %v3892 = vadd.f32 %v3667, %v3891
        %v3893 = vpop.f32.mrb[0].mxu0
        %3894 = vmatprep.mubr.f32.mxu0 0.0
        %3895 = vmatmul.mubr.f32.gmra.mrb[0].mxu0 %v2647
        %v3896 = vpop.f32.mrb[0].mxu0
        %v3897 = vadd.f32 %v3672, %v3896
        %v3898 = vpop.f32.mrb[0].mxu0
        %3899 = vmatprep.mubr.f32.mxu0 0.0
        %3900 = vmatmul.mubr.f32.gmra.mrb[0].mxu0 %v2649
        %v3901 = vpop.f32.mrb[0].mxu0
        %v3902 = vadd.f32 %v3677, %v3901
        %v3903 = vpop.f32.mrb[0].mxu0
        %3904 = vmatprep.mubr.f32.mxu0 0.0
        %3905 = vmatmul.mubr.f32.gmra.mrb[0].mxu0 %v2652
        %v3906 = vpop.f32.mrb[0].mxu0
        %v3907 = vadd.f32 %v3682, %v3906
        %v3908 = vpop.f32.mrb[0].mxu0
        %3909 = vmatprep.mubr.f32.mxu0 0.0
        %3910 = vmatmul.mubr.f32.gmra.mrb[0].mxu0 %v2654
        %v3911 = vpop.f32.mrb[0].mxu0
        %v3912 = vadd.f32 %v3687, %v3911
        %v3913 = vpop.f32.mrb[0].mxu0
        %3914 = vmatprep.mubr.f32.mxu0 0.0
        %3915 = vmatmul.mubr.f32.gmra.mrb[0].mxu0 %v2657
        %v3916 = vpop.f32.mrb[0].mxu0
        %v3917 = vadd.f32 %v3692, %v3916
        %v3918 = vpop.f32.mrb[0].mxu0
        %3919 = vmatprep.mubr.f32.mxu0 0.0
        %3920 = vmatmul.mubr.f32.gmra.mrb[0].mxu0 %v2659
        %v3921 = vpop.f32.mrb[0].mxu0
        %v3922 = vadd.f32 %v3697, %v3921
        %v3923 = vpop.f32.mrb[0].mxu0
        %3924 = vmatprep.mubr.f32.mxu0 0.0
        %3925 = vmatmul.mubr.f32.gmra.mrb[0].mxu0 %v2662
        %v3926 = vpop.f32.mrb[0].mxu0
        %v3927 = vadd.f32 %v3702, %v3926
        %v3928 = vpop.f32.mrb[0].mxu0
        %3929 = vmatprep.mubr.f32.mxu0 0.0
        %3930 = vmatmul.mubr.f32.gmra.mrb[0].mxu0 %v2664
        %v3931 = vpop.f32.mrb[0].mxu0
        %v3932 = vadd.f32 %v3707, %v3931
        %v3933 = vpop.f32.mrb[0].mxu0
        %3934 = vmatprep.mubr.f32.mxu0 0.0
        %3935 = vmatmul.mubr.f32.gmra.mrb[0].mxu0 %v2667
        %v3936 = vpop.f32.mrb[0].mxu0
        %v3937 = vadd.f32 %v3712, %v3936
        %v3938 = vpop.f32.mrb[0].mxu0
        %3939 = vmatprep.mubr.f32.mxu0 0.0
        %3940 = vmatmul.mubr.f32.gmra.mrb[0].mxu0 %v2669
        %v3941 = vpop.f32.mrb[0].mxu0
        %v3942 = vadd.f32 %v3717, %v3941
        %v3943 = vpop.f32.mrb[0].mxu0
        %3944 = vmatprep.mubr.f32.mxu0 0.0
        %3945 = vmatmul.mubr.f32.gmra.mrb[0].mxu0 %v2672
        %v3946 = vpop.f32.mrb[0].mxu0
        %v3947 = vadd.f32 %v3722, %v3946
        %v3948 = vpop.f32.mrb[0].mxu0
        %3949 = vmatprep.mubr.f32.mxu0 0.0
        %3950 = vmatmul.mubr.f32.gmra.mrb[0].mxu0 %v2674
        %v3951 = vpop.f32.mrb[0].mxu0
        %v3952 = vadd.f32 %v3727, %v3951
        %v3953 = vpop.f32.mrb[0].mxu0
        %3954 = vmatprep.mubr.f32.mxu0 0.0
        %3955 = vmatmul.mubr.f32.gmra.mrb[0].mxu0 %v2677
        %v3956 = vpop.f32.mrb[0].mxu0
        %v3957 = vadd.f32 %v3732, %v3956
        %v3958 = vpop.f32.mrb[0].mxu0
        %3959 = vmatprep.mubr.f32.mxu0 0.0
        %3960 = vmatmul.mubr.f32.gmra.mrb[0].mxu0 %v2679
        %v3961 = vpop.f32.mrb[0].mxu0
        %v3962 = vadd.f32 %v3737, %v3961
        %v3963 = vpop.f32.mrb[0].mxu0
        %3964 = vmatprep.mubr.f32.mxu0 0.0
        %3965 = vmatmul.mubr.f32.gmra.mrb[0].mxu0 %v2682
        %v3966 = vpop.f32.mrb[0].mxu0
        %v3967 = vadd.f32 %v3742, %v3966
        %v3968 = vpop.f32.mrb[0].mxu0
        %3969 = vmatprep.mubr.f32.mxu0 0.0
        %3970 = vmatmul.mubr.f32.gmra.mrb[0].mxu0 %v2684
        %v3971 = vpop.f32.mrb[0].mxu0
        %v3972 = vadd.f32 %v3747, %v3971
        %v3973 = vpop.f32.mrb[0].mxu0
        %3974 = vmatprep.mubr.f32.mxu0 0.0
        %3975 = vmatmul.mubr.f32.gmra.mrb[0].mxu0 %v2687
        %v3976 = vpop.f32.mrb[0].mxu0
        %v3977 = vadd.f32 %v3752, %v3976
        %v3978 = vpop.f32.mrb[0].mxu0
        %3979 = vmatprep.mubr.f32.mxu0 0.0
        %3980 = vmatmul.mubr.f32.gmra.mrb[0].mxu0 %v2689
        %v3981 = vpop.f32.mrb[0].mxu0
        %v3982 = vadd.f32 %v3757, %v3981
        %v3983 = vpop.f32.mrb[0].mxu0
        %3984 = vmatprep.mubr.f32.mxu0 0.0
        %3985 = vmatmul.mubr.f32.gmra.mrb[0].mxu0 %v2692
        %v3986 = vpop.f32.mrb[0].mxu0
        %v3987 = vadd.f32 %v3762, %v3986
        %v3988 = vpop.f32.mrb[0].mxu0
        %3989 = vmatprep.mubr.f32.mxu0 0.0
        %3990 = vmatmul.mubr.f32.gmra.mrb[0].mxu0 %v2694
        %v3991 = vpop.f32.mrb[0].mxu0
        %v3992 = vadd.f32 %v3767, %v3991
        %v3993 = vpop.f32.mrb[0].mxu0
        %3994 = vmatprep.mubr.f32.mxu0 0.0
        %3995 = vmatmul.mubr.f32.gmra.mrb[0].mxu0 %v2697
        %v3996 = vpop.f32.mrb[0].mxu0
        %v3997 = vadd.f32 %v3772, %v3996
        %v3998 = vpop.f32.mrb[0].mxu0
        %3999 = vmatprep.mubr.f32.mxu0 0.0
        %4000 = vmatmul.mubr.f32.gmra.mrb[0].mxu0 %v2699
        %v4001 = vpop.f32.mrb[0].mxu0
        %v4002 = vadd.f32 %v3777, %v4001
        %v4003 = vpop.f32.mrb[0].mxu0
        %4004 = vdwg.mxu0
        %4005 = vst [vmem:[#allocation3] sm:$0xff] %v3847
        %4006 = vst [vmem:[#allocation3 + $0x8] sm:$0xff] %v3852
        %4007 = vst [vmem:[#allocation3 + $0x10] sm:$0xff] %v3857
        %4008 = vst [vmem:[#allocation3 + $0x18] sm:$0xff] %v3862
        %4009 = vst [vmem:[#allocation3 + $0x20] sm:$0xff] %v3867
        %4010 = vst [vmem:[#allocation3 + $0x28] sm:$0xff] %v3872
        %4011 = vst [vmem:[#allocation3 + $0x30] sm:$0xff] %v3877
        %4012 = vst [vmem:[#allocation3 + $0x38] sm:$0xff] %v3882
        %4013 = vst [vmem:[#allocation3 + $0x40] sm:$0xff] %v3887
        %4014 = vst [vmem:[#allocation3 + $0x48] sm:$0xff] %v3892
        %4015 = vst [vmem:[#allocation3 + $0x50] sm:$0xff] %v3897
        %4016 = vst [vmem:[#allocation3 + $0x58] sm:$0xff] %v3902
        %4017 = vst [vmem:[#allocation3 + $0x60] sm:$0xff] %v3907
        %4018 = vst [vmem:[#allocation3 + $0x68] sm:$0xff] %v3912
        %4019 = vst [vmem:[#allocation3 + $0x70] sm:$0xff] %v3917
        %4020 = vst [vmem:[#allocation3 + $0x78] sm:$0xff] %v3922
        %4021 = vst [vmem:[#allocation3 + $0x80] sm:$0xff] %v3927
        %4022 = vst [vmem:[#allocation3 + $0x88] sm:$0xff] %v3932
        %4023 = vst [vmem:[#allocation3 + $0x90] sm:$0xff] %v3937
        %4024 = vst [vmem:[#allocation3 + $0x98] sm:$0xff] %v3942
        %4025 = vst [vmem:[#allocation3 + $0xa0] sm:$0xff] %v3947
        %4026 = vst [vmem:[#allocation3 + $0xa8] sm:$0xff] %v3952
        %4027 = vst [vmem:[#allocation3 + $0xb0] sm:$0xff] %v3957
        %4028 = vst [vmem:[#allocation3 + $0xb8] sm:$0xff] %v3962
        %4029 = vst [vmem:[#allocation3 + $0xc0] sm:$0xff] %v3967
        %4030 = vst [vmem:[#allocation3 + $0xc8] sm:$0xff] %v3972
        %4031 = vst [vmem:[#allocation3 + $0xd0] sm:$0xff] %v3977
        %4032 = vst [vmem:[#allocation3 + $0xd8] sm:$0xff] %v3982
        %4033 = vst [vmem:[#allocation3 + $0xe0] sm:$0xff] %v3987
        %4034 = vst [vmem:[#allocation3 + $0xe8] sm:$0xff] %v3992
        %4035 = vst [vmem:[#allocation3 + $0xf0] sm:$0xff] %v3997
        %4036 = vst [vmem:[#allocation3 + $0xf8] sm:$0xff] %v4002
        %v4037 = vadd.f32 %v3847, %v3852
        %v4038 = vadd.f32 %v4037, %v3857
        %v4039 = vadd.f32 %v4038, %v3862
        %v4040 = vadd.f32 %v4039, %v3867
        %v4041 = vadd.f32 %v4040, %v3872
        %v4042 = vadd.f32 %v4041, %v3877
        %v4043 = vadd.f32 %v4042, %v3882
        %v4044 = vadd.f32 %v4043, %v3887
        %v4045 = vadd.f32 %v4044, %v3892
        %v4046 = vadd.f32 %v4045, %v3897
        %v4047 = vadd.f32 %v4046, %v3902
        %v4048 = vadd.f32 %v4047, %v3907
        %v4049 = vadd.f32 %v4048, %v3912
        %v4050 = vadd.f32 %v4049, %v3917
        %v4051 = vadd.f32 %v4050, %v3922
        %v4052 = vadd.f32 %v4051, %v3927
        %v4053 = vadd.f32 %v4052, %v3932
        %v4054 = vadd.f32 %v4053, %v3937
        %v4055 = vadd.f32 %v4054, %v3942
        %v4056 = vadd.f32 %v4055, %v3947
        %v4057 = vadd.f32 %v4056, %v3952
        %v4058 = vadd.f32 %v4057, %v3957
        %v4059 = vadd.f32 %v4058, %v3962
        %v4060 = vadd.f32 %v4059, %v3967
        %v4061 = vadd.f32 %v4060, %v3972
        %v4062 = vadd.f32 %v4061, %v3977
        %v4063 = vadd.f32 %v4062, %v3982
        %v4064 = vadd.f32 %v4063, %v3987
        %v4065 = vadd.f32 %v4064, %v3992
        %v4066 = vadd.f32 %v4065, %v3997
        %v4067 = vadd.f32 %v4066, %v4002
        %v4068 = vrot.slane %v4067, 4
        %v4069 = vadd.f32 %v4067, %v4068
        %v4070 = vrot.slane %v4069, 2
        %v4071 = vadd.f32 %v4069, %v4070
        %v4072 = vrot.slane %v4071, 1
        %v4073 = vadd.f32 %v4071, %v4072
        %v4074 = vadd.f32 %v4073, 0.0
        %v4075 = vmul.f32 %v3847, %v3847
        %v4076 = vmul.f32 %v3852, %v3852
        %v4077 = vmul.f32 %v3857, %v3857
        %v4078 = vmul.f32 %v3862, %v3862
        %v4079 = vmul.f32 %v3867, %v3867
        %v4080 = vmul.f32 %v3872, %v3872
        %v4081 = vmul.f32 %v3877, %v3877
        %v4082 = vmul.f32 %v3882, %v3882
        %v4083 = vmul.f32 %v3887, %v3887
        %v4084 = vmul.f32 %v3892, %v3892
        %v4085 = vmul.f32 %v3897, %v3897
        %v4086 = vmul.f32 %v3902, %v3902
        %v4087 = vmul.f32 %v3907, %v3907
        %v4088 = vmul.f32 %v3912, %v3912
        %v4089 = vmul.f32 %v3917, %v3917
        %v4090 = vmul.f32 %v3922, %v3922
        %v4091 = vmul.f32 %v3927, %v3927
        %v4092 = vmul.f32 %v3932, %v3932
        %v4093 = vmul.f32 %v3937, %v3937
        %v4094 = vmul.f32 %v3942, %v3942
        %v4095 = vmul.f32 %v3947, %v3947
        %v4096 = vmul.f32 %v3952, %v3952
        %v4097 = vmul.f32 %v3957, %v3957
        %v4098 = vmul.f32 %v3962, %v3962
        %v4099 = vmul.f32 %v3967, %v3967
        %v4100 = vmul.f32 %v3972, %v3972
        %v4101 = vmul.f32 %v3977, %v3977
        %v4102 = vmul.f32 %v3982, %v3982
        %v4103 = vmul.f32 %v3987, %v3987
        %v4104 = vmul.f32 %v3992, %v3992
        %v4105 = vmul.f32 %v3997, %v3997
        %v4106 = vmul.f32 %v4002, %v4002
        %v4107 = vadd.f32 %v4075, %v4076
        %v4108 = vadd.f32 %v4107, %v4077
        %v4109 = vadd.f32 %v4108, %v4078
        %v4110 = vadd.f32 %v4109, %v4079
        %v4111 = vadd.f32 %v4110, %v4080
        %v4112 = vadd.f32 %v4111, %v4081
        %v4113 = vadd.f32 %v4112, %v4082
        %v4114 = vadd.f32 %v4113, %v4083
        %v4115 = vadd.f32 %v4114, %v4084
        %v4116 = vadd.f32 %v4115, %v4085
        %v4117 = vadd.f32 %v4116, %v4086
        %v4118 = vadd.f32 %v4117, %v4087
        %v4119 = vadd.f32 %v4118, %v4088
        %v4120 = vadd.f32 %v4119, %v4089
        %v4121 = vadd.f32 %v4120, %v4090
        %v4122 = vadd.f32 %v4121, %v4091
        %v4123 = vadd.f32 %v4122, %v4092
        %v4124 = vadd.f32 %v4123, %v4093
        %v4125 = vadd.f32 %v4124, %v4094
        %v4126 = vadd.f32 %v4125, %v4095
        %v4127 = vadd.f32 %v4126, %v4096
        %v4128 = vadd.f32 %v4127, %v4097
        %v4129 = vadd.f32 %v4128, %v4098
        %v4130 = vadd.f32 %v4129, %v4099
        %v4131 = vadd.f32 %v4130, %v4100
        %v4132 = vadd.f32 %v4131, %v4101
        %v4133 = vadd.f32 %v4132, %v4102
        %v4134 = vadd.f32 %v4133, %v4103
        %v4135 = vadd.f32 %v4134, %v4104
        %v4136 = vadd.f32 %v4135, %v4105
        %v4137 = vadd.f32 %v4136, %v4106
        %v4138 = vrot.slane %v4137, 4
        %v4139 = vadd.f32 %v4137, %v4138
        %v4140 = vrot.slane %v4139, 2
        %v4141 = vadd.f32 %v4139, %v4140
        %v4142 = vrot.slane %v4141, 1
        %v4143 = vadd.f32 %v4141, %v4142
        %v4144 = vadd.f32 %v4143, 0.0
        %v4145 = vmul.f32 %v4074, 0.00390625
        %v4146 = vmul.f32 %v4144, 0.00390625
        %v4147 = vmul.f32 %v4145, %v4145
        %v4148 = vsub.f32 %v4146, %v4147
        %v4149 = vmax.f32 %v4148, 0.0
        %v4150 = vadd.f32 %v4149, 1e-05
        %v4151 = vrsqrt.pop %v4150
        %v4152 = vld [vmem:[#allocation3] sm:$0xff]
        %v4153 = vld [vmem:[#allocation3 + $0x8] sm:$0xff]
        %v4154 = vld [vmem:[#allocation3 + $0x10] sm:$0xff]
        %v4155 = vld [vmem:[#allocation3 + $0x18] sm:$0xff]
        %v4156 = vld [vmem:[#allocation3 + $0x20] sm:$0xff]
        %v4157 = vld [vmem:[#allocation3 + $0x28] sm:$0xff]
        %v4158 = vld [vmem:[#allocation3 + $0x30] sm:$0xff]
        %v4159 = vld [vmem:[#allocation3 + $0x38] sm:$0xff]
        %v4160 = vld [vmem:[#allocation3 + $0x40] sm:$0xff]
        %v4161 = vld [vmem:[#allocation3 + $0x48] sm:$0xff]
        %v4162 = vld [vmem:[#allocation3 + $0x50] sm:$0xff]
        %v4163 = vld [vmem:[#allocation3 + $0x58] sm:$0xff]
        %v4164 = vld [vmem:[#allocation3 + $0x60] sm:$0xff]
        %v4165 = vld [vmem:[#allocation3 + $0x68] sm:$0xff]
        %v4166 = vld [vmem:[#allocation3 + $0x70] sm:$0xff]
        %v4167 = vld [vmem:[#allocation3 + $0x78] sm:$0xff]
        %v4168 = vld [vmem:[#allocation3 + $0x80] sm:$0xff]
        %v4169 = vld [vmem:[#allocation3 + $0x88] sm:$0xff]
        %v4170 = vld [vmem:[#allocation3 + $0x90] sm:$0xff]
        %v4171 = vld [vmem:[#allocation3 + $0x98] sm:$0xff]
        %v4172 = vld [vmem:[#allocation3 + $0xa0] sm:$0xff]
        %v4173 = vld [vmem:[#allocation3 + $0xa8] sm:$0xff]
        %v4174 = vld [vmem:[#allocation3 + $0xb0] sm:$0xff]
        %v4175 = vld [vmem:[#allocation3 + $0xb8] sm:$0xff]
        %v4176 = vld [vmem:[#allocation3 + $0xc0] sm:$0xff]
        %v4177 = vld [vmem:[#allocation3 + $0xc8] sm:$0xff]
        %v4178 = vld [vmem:[#allocation3 + $0xd0] sm:$0xff]
        %v4179 = vld [vmem:[#allocation3 + $0xd8] sm:$0xff]
        %v4180 = vld [vmem:[#allocation3 + $0xe0] sm:$0xff]
        %v4181 = vld [vmem:[#allocation3 + $0xe8] sm:$0xff]
        %v4182 = vld [vmem:[#allocation3 + $0xf0] sm:$0xff]
        %v4183 = vld [vmem:[#allocation3 + $0xf8] sm:$0xff]
        %v4184 = vsub.f32 %v4152, %v4145
        %v4185 = vsub.f32 %v4153, %v4145
        %v4186 = vsub.f32 %v4154, %v4145
        %v4187 = vsub.f32 %v4155, %v4145
        %v4188 = vsub.f32 %v4156, %v4145
        %v4189 = vsub.f32 %v4157, %v4145
        %v4190 = vsub.f32 %v4158, %v4145
        %v4191 = vsub.f32 %v4159, %v4145
        %v4192 = vsub.f32 %v4160, %v4145
        %v4193 = vsub.f32 %v4161, %v4145
        %v4194 = vsub.f32 %v4162, %v4145
        %v4195 = vsub.f32 %v4163, %v4145
        %v4196 = vsub.f32 %v4164, %v4145
        %v4197 = vsub.f32 %v4165, %v4145
        %v4198 = vsub.f32 %v4166, %v4145
        %v4199 = vsub.f32 %v4167, %v4145
        %v4200 = vsub.f32 %v4168, %v4145
        %v4201 = vsub.f32 %v4169, %v4145
        %v4202 = vsub.f32 %v4170, %v4145
        %v4203 = vsub.f32 %v4171, %v4145
        %v4204 = vsub.f32 %v4172, %v4145
        %v4205 = vsub.f32 %v4173, %v4145
        %v4206 = vsub.f32 %v4174, %v4145
        %v4207 = vsub.f32 %v4175, %v4145
        %v4208 = vsub.f32 %v4176, %v4145
        %v4209 = vsub.f32 %v4177, %v4145
        %v4210 = vsub.f32 %v4178, %v4145
        %v4211 = vsub.f32 %v4179, %v4145
        %v4212 = vsub.f32 %v4180, %v4145
        %v4213 = vsub.f32 %v4181, %v4145
        %v4214 = vsub.f32 %v4182, %v4145
        %v4215 = vsub.f32 %v4183, %v4145
        %v4216 = vmul.f32 %v4184, %v4151
        %v4217 = vmul.f32 %v4185, %v4151
        %v4218 = vmul.f32 %v4186, %v4151
        %v4219 = vmul.f32 %v4187, %v4151
        %v4220 = vmul.f32 %v4188, %v4151
        %v4221 = vmul.f32 %v4189, %v4151
        %v4222 = vmul.f32 %v4190, %v4151
        %v4223 = vmul.f32 %v4191, %v4151
        %v4224 = vmul.f32 %v4192, %v4151
        %v4225 = vmul.f32 %v4193, %v4151
        %v4226 = vmul.f32 %v4194, %v4151
        %v4227 = vmul.f32 %v4195, %v4151
        %v4228 = vmul.f32 %v4196, %v4151
        %v4229 = vmul.f32 %v4197, %v4151
        %v4230 = vmul.f32 %v4198, %v4151
        %v4231 = vmul.f32 %v4199, %v4151
        %v4232 = vmul.f32 %v4200, %v4151
        %v4233 = vmul.f32 %v4201, %v4151
        %v4234 = vmul.f32 %v4202, %v4151
        %v4235 = vmul.f32 %v4203, %v4151
        %v4236 = vmul.f32 %v4204, %v4151
        %v4237 = vmul.f32 %v4205, %v4151
        %v4238 = vmul.f32 %v4206, %v4151
        %v4239 = vmul.f32 %v4207, %v4151
        %v4240 = vmul.f32 %v4208, %v4151
        %v4241 = vmul.f32 %v4209, %v4151
        %v4242 = vmul.f32 %v4210, %v4151
        %v4243 = vmul.f32 %v4211, %v4151
        %v4244 = vmul.f32 %v4212, %v4151
        %v4245 = vmul.f32 %v4213, %v4151
        %v4246 = vmul.f32 %v4214, %v4151
        %v4247 = vmul.f32 %v4215, %v4151
        %v4248 = vld [vmem:[%s187] sm:$0xff]
        %v4249 = vld [vmem:[%s187 + $0x8] sm:$0xff]
        %v4250 = vld [vmem:[%s187 + $0x10] sm:$0xff]
        %v4251 = vld [vmem:[%s187 + $0x18] sm:$0xff]
        %v4252 = vld [vmem:[%s187 + $0x20] sm:$0xff]
        %v4253 = vld [vmem:[%s187 + $0x28] sm:$0xff]
        %v4254 = vld [vmem:[%s187 + $0x30] sm:$0xff]
        %v4255 = vld [vmem:[%s187 + $0x38] sm:$0xff]
        %v4256 = vld [vmem:[%s187 + $0x40] sm:$0xff]
        %v4257 = vld [vmem:[%s187 + $0x48] sm:$0xff]
        %v4258 = vld [vmem:[%s187 + $0x50] sm:$0xff]
        %v4259 = vld [vmem:[%s187 + $0x58] sm:$0xff]
        %v4260 = vld [vmem:[%s187 + $0x60] sm:$0xff]
        %v4261 = vld [vmem:[%s187 + $0x68] sm:$0xff]
        %v4262 = vld [vmem:[%s187 + $0x70] sm:$0xff]
        %v4263 = vld [vmem:[%s187 + $0x78] sm:$0xff]
        %v4264 = vld [vmem:[%s187 + $0x80] sm:$0xff]
        %v4265 = vld [vmem:[%s187 + $0x88] sm:$0xff]
        %v4266 = vld [vmem:[%s187 + $0x90] sm:$0xff]
        %v4267 = vld [vmem:[%s187 + $0x98] sm:$0xff]
        %v4268 = vld [vmem:[%s187 + $0xa0] sm:$0xff]
        %v4269 = vld [vmem:[%s187 + $0xa8] sm:$0xff]
        %v4270 = vld [vmem:[%s187 + $0xb0] sm:$0xff]
        %v4271 = vld [vmem:[%s187 + $0xb8] sm:$0xff]
        %v4272 = vld [vmem:[%s187 + $0xc0] sm:$0xff]
        %v4273 = vld [vmem:[%s187 + $0xc8] sm:$0xff]
        %v4274 = vld [vmem:[%s187 + $0xd0] sm:$0xff]
        %v4275 = vld [vmem:[%s187 + $0xd8] sm:$0xff]
        %v4276 = vld [vmem:[%s187 + $0xe0] sm:$0xff]
        %v4277 = vld [vmem:[%s187 + $0xe8] sm:$0xff]
        %v4278 = vld [vmem:[%s187 + $0xf0] sm:$0xff]
        %v4279 = vld [vmem:[%s187 + $0xf8] sm:$0xff]
        %v4280 = vadd.f32 %v4216, %v4248
        %v4281 = vadd.f32 %v4217, %v4249
        %v4282 = vadd.f32 %v4218, %v4250
        %v4283 = vadd.f32 %v4219, %v4251
        %v4284 = vadd.f32 %v4220, %v4252
        %v4285 = vadd.f32 %v4221, %v4253
        %v4286 = vadd.f32 %v4222, %v4254
        %v4287 = vadd.f32 %v4223, %v4255
        %v4288 = vadd.f32 %v4224, %v4256
        %v4289 = vadd.f32 %v4225, %v4257
        %v4290 = vadd.f32 %v4226, %v4258
        %v4291 = vadd.f32 %v4227, %v4259
        %v4292 = vadd.f32 %v4228, %v4260
        %v4293 = vadd.f32 %v4229, %v4261
        %v4294 = vadd.f32 %v4230, %v4262
        %v4295 = vadd.f32 %v4231, %v4263
        %v4296 = vadd.f32 %v4232, %v4264
        %v4297 = vadd.f32 %v4233, %v4265
        %v4298 = vadd.f32 %v4234, %v4266
        %v4299 = vadd.f32 %v4235, %v4267
        %v4300 = vadd.f32 %v4236, %v4268
        %v4301 = vadd.f32 %v4237, %v4269
        %v4302 = vadd.f32 %v4238, %v4270
        %v4303 = vadd.f32 %v4239, %v4271
        %v4304 = vadd.f32 %v4240, %v4272
        %v4305 = vadd.f32 %v4241, %v4273
        %v4306 = vadd.f32 %v4242, %v4274
        %v4307 = vadd.f32 %v4243, %v4275
        %v4308 = vadd.f32 %v4244, %v4276
        %v4309 = vadd.f32 %v4245, %v4277
        %v4310 = vadd.f32 %v4246, %v4278
        %v4311 = vadd.f32 %v4247, %v4279
        %4312 = vst [vmem:[%s217] sm:$0xff] %v4280
        %4313 = vst [vmem:[%s217 + $0x8] sm:$0xff] %v4281
        %4314 = vst [vmem:[%s217 + $0x10] sm:$0xff] %v4282
        %4315 = vst [vmem:[%s217 + $0x18] sm:$0xff] %v4283
        %4316 = vst [vmem:[%s217 + $0x20] sm:$0xff] %v4284
        %4317 = vst [vmem:[%s217 + $0x28] sm:$0xff] %v4285
        %4318 = vst [vmem:[%s217 + $0x30] sm:$0xff] %v4286
        %4319 = vst [vmem:[%s217 + $0x38] sm:$0xff] %v4287
        %4320 = vst [vmem:[%s217 + $0x40] sm:$0xff] %v4288
        %4321 = vst [vmem:[%s217 + $0x48] sm:$0xff] %v4289
        %4322 = vst [vmem:[%s217 + $0x50] sm:$0xff] %v4290
        %4323 = vst [vmem:[%s217 + $0x58] sm:$0xff] %v4291
        %4324 = vst [vmem:[%s217 + $0x60] sm:$0xff] %v4292
        %4325 = vst [vmem:[%s217 + $0x68] sm:$0xff] %v4293
        %4326 = vst [vmem:[%s217 + $0x70] sm:$0xff] %v4294
        %4327 = vst [vmem:[%s217 + $0x78] sm:$0xff] %v4295
        %4328 = vst [vmem:[%s217 + $0x80] sm:$0xff] %v4296
        %4329 = vst [vmem:[%s217 + $0x88] sm:$0xff] %v4297
        %4330 = vst [vmem:[%s217 + $0x90] sm:$0xff] %v4298
        %4331 = vst [vmem:[%s217 + $0x98] sm:$0xff] %v4299
        %4332 = vst [vmem:[%s217 + $0xa0] sm:$0xff] %v4300
        %4333 = vst [vmem:[%s217 + $0xa8] sm:$0xff] %v4301
        %4334 = vst [vmem:[%s217 + $0xb0] sm:$0xff] %v4302
        %4335 = vst [vmem:[%s217 + $0xb8] sm:$0xff] %v4303
        %4336 = vst [vmem:[%s217 + $0xc0] sm:$0xff] %v4304
        %4337 = vst [vmem:[%s217 + $0xc8] sm:$0xff] %v4305
        %4338 = vst [vmem:[%s217 + $0xd0] sm:$0xff] %v4306
        %4339 = vst [vmem:[%s217 + $0xd8] sm:$0xff] %v4307
        %4340 = vst [vmem:[%s217 + $0xe0] sm:$0xff] %v4308
        %4341 = vst [vmem:[%s217 + $0xe8] sm:$0xff] %v4309
        %4342 = vst [vmem:[%s217 + $0xf0] sm:$0xff] %v4310
        %4343 = vst [vmem:[%s217 + $0xf8] sm:$0xff] %v4311
        %s4344 = sand.u32 %s97, 1
        %s4345 = scalar_lea.sflag [#allocation6], %s4344
        %s4346 = sand.u32 %s97, 1
        %s4347 = smul.addr %s4346, 256
        %s4348 = scalar_lea.vmem [#allocation10], %s4347
        // Predicated region
        $region45: #{tpu_custom_call.1} parent=31 // pred_check
          %p4349 = pneg %p107
        $region46: #{tpu_custom_call.1} parent=31 // pred_check_branch
          %4351 = sbr.rel (%p4349) target = $region48
        $region47: #{tpu_custom_call.1} parent=31 // pred_region
          %s4353 = ssub.s32 4096, 4096
          %4354 = vsyncadd %s4345, %s4353
          %s4355 = smul.addr %s21, 32
          %s4356 = smul.addr %s4355, 128
          %s4357 = scalar_lea.hbm %s3, %s4356
          %s4358 = sshll.u32 %s4348, 4
          %s4359 = int_to_ptr.vmem [resolvable:$true] %s4358
          %4364 = dma.vmem_to_hbm [thread:$0]  %s4359, 4096, %s4357, %s4345, 128, 128, 8
        $region48: #{tpu_custom_call.1} parent=31 // pred_fallthru
          _
      $region32: #{tpu_custom_call.1} parent=5 // pred_fallthru
        _
      %p4365 = scmp.le.s32.totalorder 2, %s16
      // Predicated region
      $region49: #{tpu_custom_call.1} parent=5 // pred_check
        %p4366 = pneg %p4365
      $region50: #{tpu_custom_call.1} parent=5 // pred_check_branch
        %4368 = sbr.rel (%p4366) target = $region52
      $region51: #{tpu_custom_call.1} parent=5 // pred_region
        %s4369 = ssub.s32 %s16, 2
        // Predicated region
        $region53: #{tpu_custom_call.1} parent=51 // pred_check
          %p4370 = pneg %p113
        $region54: #{tpu_custom_call.1} parent=51 // pred_check_branch
          %4372 = sbr.rel (%p4370) target = $region56
        $region55: #{tpu_custom_call.1} parent=51 // pred_region
          %s4373 = sand.u32 %s98, 1
          %s4374 = scalar_lea.sflag [#allocation6], %s4373
          %s4375 = sand.u32 %s98, 1
          %s4376 = smul.addr %s4375, 256
          %s4377 = scalar_lea.vmem [#allocation10], %s4376
          %4378 = dma.done %s4374, 4096
        $region56: #{tpu_custom_call.1} parent=51 // pred_fallthru
          _
      $region52: #{tpu_custom_call.1} parent=5 // pred_fallthru
        _
    $region6: #{tpu_custom_call.1} parent=1 // loop_footer
      %s20 = sadd.s32 1, %s16
    $region7: #{tpu_custom_call.1} parent=1 // loop_footer_branch
      %15 = sbr.rel target = $region3
    $region8: #{tpu_custom_call.1} parent=1 // loop_exit
      _
    %4379 = vsyncpa [#allocation5], 1
    %s4380 = scalar_lea.sflag [#allocation5], 1
    %4381 = vsyncpa %s4380, 1
    %4382 = vsyncpa [#allocation8], 1
    %4383 = vsyncpa [#allocation6], 1
    %s4384 = scalar_lea.sflag [#allocation6], 1
    %4385 = vsyncpa %s4384, 1

</llo_original>
